<compile_context>
chip_gen: v7x
topology: tpu7x:2x2x1
jax: 0.10.0
libtpu: 0.0.40
codegen_flags: <defaults>
</compile_context>

<pallas_src>
import functools

import jax
import jax.numpy as jnp
from jax import lax
from jax.experimental import pallas as pl
from jax.experimental.pallas import tpu as pltpu

# ----------------------------- model hyper-params -----------------------------
HIDDEN = 32
VOCAB = 128          # len_tokenizer (embedding already "resized")
NUM_HEADS = 4
INTERMEDIATE = 64
MAX_POS = 64
N_OP = 4
N_DOMAIN = 5
PAD_IDX = 0


# ====================== fused BERT-layer Pallas kernel ========================
def _bert_layer_kernel(x_ref, maskb_ref,
                       wqkv_ref, bqkv_ref,
                       wo_ref, bo_ref, ag_ref, ab_ref,
                       wi_ref, bi_ref, wo2_ref, bo2_ref,
                       fg_ref, fb_ref, wp_ref, bp_ref,
                       seq_ref, pooled_ref):
    """One batch row: embeddings-LN'd input -> MHSA -> FFN -> pooler."""
    S = x_ref.shape[1]
    H = x_ref.shape[2]
    nh = NUM_HEADS
    dh = H // nh

    x = x_ref[0]                          # (S, H)
    maskb = maskb_ref[0]                  # (1, S) additive -10000 bias on padded keys

    def ln(v, g, b):
        m = jnp.mean(v, axis=-1, keepdims=True)
        var = jnp.mean((v - m) ** 2, axis=-1, keepdims=True)
        return (v - m) * lax.rsqrt(var + 1e-12) * g + b

    # fused QKV projection: one (S,H) @ (H,3H) MXU matmul
    qkv = jnp.dot(x, wqkv_ref[...], preferred_element_type=jnp.float32) + bqkv_ref[...]
    q = qkv[:, 0:H]
    k = qkv[:, H:2 * H]
    v = qkv[:, 2 * H:3 * H]

    inv_sqrt_dh = 1.0 / (float(dh) ** 0.5)
    heads = []
    for hh in range(nh):
        qh = q[:, hh * dh:(hh + 1) * dh]
        kh = k[:, hh * dh:(hh + 1) * dh]
        vh = v[:, hh * dh:(hh + 1) * dh]
        sc = lax.dot_general(qh, kh, (((1,), (1,)), ((), ())),
                             preferred_element_type=jnp.float32) * inv_sqrt_dh  # (S, S)
        sc = sc + maskb
        sc = sc - jnp.max(sc, axis=-1, keepdims=True)
        e = jnp.exp(sc)
        # softmax denominator on the EUP (separate bundle slot)
        p = e * pl.reciprocal(jnp.sum(e, axis=-1, keepdims=True), approx=True)
        heads.append(jnp.dot(p, vh, preferred_element_type=jnp.float32))        # (S, dh)
    ctx = jnp.concatenate(heads, axis=-1)                                        # (S, H)

    attn_out = ln(jnp.dot(ctx, wo_ref[...], preferred_element_type=jnp.float32)
                  + bo_ref[...] + x, ag_ref[...], ab_ref[...])

    inter = jnp.dot(attn_out, wi_ref[...], preferred_element_type=jnp.float32) + bi_ref[...]
    # TODO(synk): HF BERT uses exact erf-GeLU; tanh-approx GeLU used here for Mosaic lowering.
    inter = jax.nn.gelu(inter, approximate=True)
    ffn = jnp.dot(inter, wo2_ref[...], preferred_element_type=jnp.float32) + bo2_ref[...]
    seq = ln(ffn + attn_out, fg_ref[...], fb_ref[...])

    seq_ref[...] = seq.reshape(1, S, H)
    cls = seq[0:1, :]
    pooled = jnp.tanh(jnp.dot(cls, wp_ref[...], preferred_element_type=jnp.float32)
                      + bp_ref[...])
    pooled_ref[...] = pooled.reshape(1, 1, H)


def bert_layer_pallas(p, x, mask_bias):
    B, S, H = x.shape

    def rep(shape):
        zeros = (0,) * len(shape)
        return pl.BlockSpec(shape, lambda b: zeros)

    weight_args = (p["wqkv"], p["bqkv"],
                   p["wo"], p["bo"], p["attn_ln_g"], p["attn_ln_b"],
                   p["wi"], p["bi"], p["wo2"], p["bo2"],
                   p["ffn_ln_g"], p["ffn_ln_b"], p["wp"], p["bp"])

    seq, pooled = pl.pallas_call(
        _bert_layer_kernel,
        grid=(B,),
        in_specs=[pl.BlockSpec((1, S, H), lambda b: (b, 0, 0)),
                  pl.BlockSpec((1, 1, S), lambda b: (b, 0, 0))]
                 + [rep(w.shape) for w in weight_args],
        out_specs=(pl.BlockSpec((1, S, H), lambda b: (b, 0, 0)),
                   pl.BlockSpec((1, 1, H), lambda b: (b, 0, 0))),
        out_shape=(jax.ShapeDtypeStruct((B, S, H), jnp.float32),
                   jax.ShapeDtypeStruct((B, 1, H), jnp.float32)),
        compiler_params=pltpu.CompilerParams(dimension_semantics=("parallel",)),
    )(x, mask_bias, *weight_args)
    return seq, pooled.reshape(B, H)


# ======================= fused copy-decoder Pallas kernel =====================
def _decoder_kernel(dec_ref, enc_ref, pooled_ref, pad_ref, oh_ref,
                    emb_ref, embt_ref, wi_ref, wh_ref, bi_ref, bh_ref,
                    wg_ref, bg_ref, out_ref, h_sc, *, max_len):
    """One (batch row, update slot): full max_len greedy decode loop."""
    S = enc_ref.shape[1]
    H = enc_ref.shape[2]
    V = embt_ref.shape[1]
    j = pl.program_id(1)

    # GRU hidden carries across update slots (as in the PyTorch loop);
    # initialize from pooled_output at the first slot of each batch row.
    @pl.when(j == 0)
    def _init():
        h_sc[...] = pooled_ref[0]

    enc = enc_ref[0]                       # (S, H)
    padf = pad_ref[0]                      # (1, S) 1.0 at PAD positions
    oh = oh_ref[0]                         # (S, V) one-hot(x_ids) pointer matrix
    emb = emb_ref[...]                     # (V, H)
    embt = embt_ref[...]                   # (H, V)
    wi = wi_ref[...]                       # (H, 3H) fused [r|z|n] input weights
    wh = wh_ref[...]                       # (H, 3H) fused [r|z|n] hidden weights
    bi = bi_ref[...]                       # (1, 3H)
    bh = bh_ref[...]                       # (1, 3H)
    wg = wg_ref[...]                       # (3H, 1)
    bg = bg_ref[...]                       # (1, 1)

    w = dec_ref[0, 0]                      # (1, H) decoder input for this slot
    h = h_sc[...]                          # (1, H)

    # hoisted out of the step loop (JAX does not CSE broadcast_in_dim)
    iota_v = lax.broadcasted_iota(jnp.int32, (1, V), 1)

    step_ps = []
    for k in range(max_len):
        # ---- GRU cell (PyTorch gate order r, z, n; two fused gate matmuls) ----
        gi = jnp.dot(w, wi, preferred_element_type=jnp.float32) + bi   # (1, 3H)
        gh = jnp.dot(h, wh, preferred_element_type=jnp.float32) + bh   # (1, 3H)
        r = jax.nn.sigmoid(gi[:, 0:H] + gh[:, 0:H])
        z = jax.nn.sigmoid(gi[:, H:2 * H] + gh[:, H:2 * H])
        n = jnp.tanh(gi[:, 2 * H:3 * H] + r * gh[:, 2 * H:3 * H])
        h = (1.0 - z) * n + z * h                                      # (1, H)

        # ---- attention over encoder tokens (masked_fill(pad, -1e9) + softmax) ----
        scores = lax.dot_general(h, enc, (((1,), (1,)), ((), ())),
                                 preferred_element_type=jnp.float32)   # (1, S)
        scores = jnp.where(padf > 0.5, -1.0e9, scores)
        scores = scores - jnp.max(scores, axis=-1, keepdims=True)
        es = jnp.exp(scores)
        attn_hist = es / jnp.sum(es, axis=-1, keepdims=True)           # (1, S)

        # ---- vocab distribution: hidden @ E^T, softmax (exact, feeds argmax) ----
        lv = jnp.dot(h, embt, preferred_element_type=jnp.float32)      # (1, V)
        lv = lv - jnp.max(lv, axis=-1, keepdims=True)
        ev = jnp.exp(lv)
        attn_vocab = ev / jnp.sum(ev, axis=-1, keepdims=True)          # (1, V)

        # ---- context vector + p_gen = sigmoid(W_gen [w; h; ctx] + b) ----
        ctx = jnp.dot(attn_hist, enc, preferred_element_type=jnp.float32)   # (1, H)
        gen_in = jnp.concatenate([w, h, ctx], axis=-1)                      # (1, 3H)
        p_gen = jax.nn.sigmoid(
            jnp.dot(gen_in, wg, preferred_element_type=jnp.float32) + bg)   # (1, 1)

        # ---- pointer: scatter_add(attn_hist over input ids) == attn @ one-hot ----
        p_ctx = jnp.dot(attn_hist, oh, preferred_element_type=jnp.float32)  # (1, V)

        p_final = p_gen * attn_vocab + (1.0 - p_gen) * p_ctx           # (1, V)
        step_ps.append(p_final)

        # ---- greedy feedback (teacher=None): next input = embed(argmax) ----
        if k + 1 < max_len:
            mx = jnp.max(p_final, axis=-1, keepdims=True)
            idx = jnp.min(jnp.where(p_final == mx, iota_v, V),
                          axis=-1, keepdims=True)                      # first max idx
            sel = (iota_v == idx).astype(jnp.float32)                  # (1, V)
            w = jnp.dot(sel, emb, preferred_element_type=jnp.float32)  # (1, H)

    h_sc[...] = h                                                      # carry to next slot
    out = jnp.concatenate(step_ps, axis=0)                             # (max_len, V)
    out_ref[...] = out.reshape(1, 1, max_len, V)


def decoder_forward(params, x_ids, decoder_input, encoder_output, hidden, max_len):
    B, n_update, H = decoder_input.shape
    S = x_ids.shape[1]
    V = params["emb"].shape[0]

    pooled = hidden[0].reshape(B, 1, H)
    padf = (x_ids == PAD_IDX).astype(jnp.float32).reshape(B, 1, S)
    # TODO(synk): at production sizes (V~30k) build/tile the pointer one-hot in-kernel
    #             over V instead of materializing (B, S, V) here.
    onehot = jax.nn.one_hot(x_ids, V, dtype=jnp.float32)               # (B, S, V)
    dec_in = decoder_input.reshape(B, n_update, 1, H)

    def rep(shape):
        zeros = (0,) * len(shape)
        return pl.BlockSpec(shape, lambda b, j: zeros)

    kernel = functools.partial(_decoder_kernel, max_len=max_len)
    gen = pl.pallas_call(
        kernel,
        grid=(B, n_update),
        in_specs=[pl.BlockSpec((1, 1, 1, H), lambda b, j: (b, j, 0, 0)),    # decoder_input
                  pl.BlockSpec((1, S, H), lambda b, j: (b, 0, 0)),          # encoder_output
                  pl.BlockSpec((1, 1, H), lambda b, j: (b, 0, 0)),          # pooled init
                  pl.BlockSpec((1, 1, S), lambda b, j: (b, 0, 0)),          # pad mask
                  pl.BlockSpec((1, S, V), lambda b, j: (b, 0, 0)),          # one-hot(x)
                  rep(params["emb"].shape), rep(params["emb_t"].shape),
                  rep(params["gru_wi"].shape), rep(params["gru_wh"].shape),
                  rep(params["gru_bi"].shape), rep(params["gru_bh"].shape),
                  rep(params["wg"].shape), rep(params["wg_b"].shape)],
        out_specs=pl.BlockSpec((1, 1, max_len, V), lambda b, j: (b, j, 0, 0)),
        out_shape=jax.ShapeDtypeStruct((B, n_update, max_len, V), jnp.float32),
        scratch_shapes=[pltpu.VMEM((1, H), jnp.float32)],                   # GRU hidden
        compiler_params=pltpu.CompilerParams(
            dimension_semantics=("parallel", "arbitrary")),
    )(dec_in, encoder_output, pooled, padf, onehot,
      params["emb"], params["emb_t"], params["gru_wi"], params["gru_wh"],
      params["gru_bi"], params["gru_bh"], params["wg"], params["wg_b"])
    return gen                                                         # (B, n_update, max_len, V)


# =============================== plain-JAX glue ===============================
def layer_norm(x, g, b, eps=1e-12):
    m = jnp.mean(x, axis=-1, keepdims=True)
    v = jnp.mean((x - m) ** 2, axis=-1, keepdims=True)
    return (x - m) / jnp.sqrt(v + eps) * g + b


def bert_forward(p, input_ids, token_type_ids, attention_mask):
    B, S = input_ids.shape
    pos = jnp.arange(S)
    x = p["word_emb"][input_ids] + p["pos_emb"][pos][None, :, :] + p["type_emb"][token_type_ids]
    x = layer_norm(x, p["emb_ln_g"], p["emb_ln_b"])
    mask_bias = ((1.0 - attention_mask.astype(jnp.float32)) * -10000.0).reshape(B, 1, S)
    seq, pooled = bert_layer_pallas(p, x, mask_bias)
    return seq, pooled


def encoder_forward(params, input_ids, token_type_ids, state_positions,
                    attention_mask, op_ids, max_update, update_id):
    seq, pooled = bert_forward(params["bert"], input_ids, token_type_ids, attention_mask)

    # gather state tokens
    idx = jnp.broadcast_to(state_positions[:, :, None],
                           state_positions.shape + (seq.shape[-1],))
    state_out = jnp.take_along_axis(seq, idx, axis=1)                  # (B, J, H)

    state_scores = state_out @ params["action_w"] + params["action_b"]      # (B, J, n_op)
    domain_scores = pooled @ params["domain_w"] + params["domain_b"]        # (B, n_domain)

    if op_ids is None:
        op_ids = jnp.argmax(state_scores.reshape(-1, N_OP), axis=-1).reshape(state_scores.shape[:2])
    # TODO(synk): torch derives max_update from op_ids via .item() (dynamic shape);
    #             here max_update must be a static int >= per-batch update counts.

    upd = (op_ids == update_id)                                        # (B, J)
    rank = jnp.cumsum(upd.astype(jnp.int32), axis=1) - 1
    sel = (upd[:, :, None] & (rank[:, :, None] == jnp.arange(max_update)[None, None, :]))
    decoder_inputs = jnp.einsum("bjm,bjh->bmh", sel.astype(jnp.float32), state_out)

    return domain_scores, state_scores, decoder_inputs, seq, pooled[None]   # hidden: (1, B, H)


def som_dst_forward(params, input_ids, token_type_ids, state_positions,
                    attention_mask, op_ids, *, max_value, max_update, update_id):
    (domain_scores, state_scores, decoder_inputs,
     sequence_output, pooled_output) = encoder_forward(
        params, input_ids, token_type_ids, state_positions, attention_mask,
        op_ids, max_update, update_id)
    gen_scores = decoder_forward(params, input_ids, decoder_inputs,
                                 sequence_output, pooled_output, max_value)
    return domain_scores, state_scores, gen_scores


som_dst_forward_jit = jax.jit(
    som_dst_forward, static_argnames=("max_value", "max_update", "update_id"))


# ============================ deterministic init ==============================
def _xavier(key, shape):
    fan_in, fan_out = shape[0], shape[1]
    std = (2.0 / (fan_in + fan_out)) ** 0.5
    return std * jax.random.normal(key, shape, jnp.float32)


def init_params(key):
    keys = jax.random.split(key, 32)
    it = iter(keys)
    nk = lambda: next(it)
    H = HIDDEN

    word_emb = 0.02 * jax.random.normal(nk(), (VOCAB, H), jnp.float32)

    # QKV projections drawn per-matrix (nn.Linear xavier), stored fused (H, 3H)
    wq, wk, wv = _xavier(nk(), (H, H)), _xavier(nk(), (H, H)), _xavier(nk(), (H, H))

    bert = dict(
        word_emb=word_emb,
        pos_emb=0.02 * jax.random.normal(nk(), (MAX_POS, H), jnp.float32),
        type_emb=0.02 * jax.random.normal(nk(), (2, H), jnp.float32),
        emb_ln_g=jnp.ones((1, H), jnp.float32), emb_ln_b=jnp.zeros((1, H), jnp.float32),
        wqkv=jnp.concatenate([wq, wk, wv], axis=1),              # (H, 3H)
        bqkv=jnp.zeros((1, 3 * H), jnp.float32),
        wo=_xavier(nk(), (H, H)), bo=jnp.zeros((1, H), jnp.float32),
        attn_ln_g=jnp.ones((1, H), jnp.float32), attn_ln_b=jnp.zeros((1, H), jnp.float32),
        wi=_xavier(nk(), (H, INTERMEDIATE)), bi=jnp.zeros((1, INTERMEDIATE), jnp.float32),
        wo2=_xavier(nk(), (INTERMEDIATE, H)), bo2=jnp.zeros((1, H), jnp.float32),
        ffn_ln_g=jnp.ones((1, H), jnp.float32), ffn_ln_b=jnp.zeros((1, H), jnp.float32),
        wp=_xavier(nk(), (H, H)), bp=jnp.zeros((1, H), jnp.float32),
    )

    # GRU weights, fused into (H, 3H) right-multiply form, gate order [r|z|n]
    w_ir, w_iz, w_in = _xavier(nk(), (H, H)), _xavier(nk(), (H, H)), _xavier(nk(), (H, H))
    w_hr, w_hz, w_hn = _xavier(nk(), (H, H)), _xavier(nk(), (H, H)), _xavier(nk(), (H, H))

    params = dict(
        bert=bert,
        # classification heads (nn.Linear, xavier weight / zero bias)
        action_w=_xavier(nk(), (H, N_OP)), action_b=jnp.zeros((1, N_OP), jnp.float32),
        domain_w=_xavier(nk(), (H, N_DOMAIN)), domain_b=jnp.zeros((1, N_DOMAIN), jnp.float32),
        # decoder embedding tied to BERT word embeddings
        emb=word_emb,
        emb_t=word_emb.T,                                   # (H, V) for in-kernel vocab matmul
        gru_wi=jnp.concatenate([w_ir, w_iz, w_in], axis=1),  # (H, 3H)
        gru_wh=jnp.concatenate([w_hr, w_hz, w_hn], axis=1),  # (H, 3H)
        gru_bi=jnp.zeros((1, 3 * H), jnp.float32),
        gru_bh=jnp.zeros((1, 3 * H), jnp.float32),
        # w_gen: Linear(3H, 1) stored transposed for right-multiply, bias zero
        wg=_xavier(nk(), (3 * H, 1)), wg_b=jnp.zeros((1, 1), jnp.float32),
    )
    return params


# ==================================== main ====================================
if __name__ == "__main__":
    key = jax.random.PRNGKey(0)
    params = init_params(key)

    B, S, J = 2, 16, 6
    max_update, max_value, update_id = 2, 3, 1

    k1, _ = jax.random.split(jax.random.PRNGKey(0))
    input_ids = jax.random.randint(k1, (B, S), 1, VOCAB, dtype=jnp.int32)
    input_ids = input_ids.at[:, -3:].set(PAD_IDX)                    # padded tail
    attention_mask = (input_ids != PAD_IDX).astype(jnp.float32)
    token_type_ids = jnp.concatenate(
        [jnp.zeros((B, S // 2), jnp.int32), jnp.ones((B, S // 2), jnp.int32)], axis=1)
    state_positions = jnp.tile(jnp.array([[1, 3, 5, 7, 9, 11]], jnp.int32), (B, 1))
    op_ids = jnp.array([[1, 0, 0, 1, 0, 0],
                        [0, 1, 0, 0, 0, 0]], jnp.int32)              # update_id == 1

    domain_scores, state_scores, gen_scores = som_dst_forward_jit(
        params, input_ids, token_type_ids, state_positions, attention_mask, op_ids,
        max_value=max_value, max_update=max_update, update_id=update_id)

    jax.block_until_ready((domain_scores, state_scores, gen_scores))

    assert domain_scores.shape == (B, N_DOMAIN)
    assert state_scores.shape == (B, J, N_OP)
    assert gen_scores.shape == (B, max_update, max_value, VOCAB)
    print("KERNEL_OK")
</pallas_src>

<mosaic_0001>
module attributes {stable_mosaic.version = 11 : i64} {
  func.func @_bert_layer_kernel(%arg0: i32, %arg1: memref<1x16x32xf32, #tpu.memory_space<vmem>>, %arg2: memref<1x1x16xf32, #tpu.memory_space<vmem>>, %arg3: memref<32x96xf32, #tpu.memory_space<vmem>>, %arg4: memref<1x96xf32, #tpu.memory_space<vmem>>, %arg5: memref<32x32xf32, #tpu.memory_space<vmem>>, %arg6: memref<1x32xf32, #tpu.memory_space<vmem>>, %arg7: memref<1x32xf32, #tpu.memory_space<vmem>>, %arg8: memref<1x32xf32, #tpu.memory_space<vmem>>, %arg9: memref<32x64xf32, #tpu.memory_space<vmem>>, %arg10: memref<1x64xf32, #tpu.memory_space<vmem>>, %arg11: memref<64x32xf32, #tpu.memory_space<vmem>>, %arg12: memref<1x32xf32, #tpu.memory_space<vmem>>, %arg13: memref<1x32xf32, #tpu.memory_space<vmem>>, %arg14: memref<1x32xf32, #tpu.memory_space<vmem>>, %arg15: memref<32x32xf32, #tpu.memory_space<vmem>>, %arg16: memref<1x32xf32, #tpu.memory_space<vmem>>, %arg17: memref<1x16x32xf32, #tpu.memory_space<vmem>>, %arg18: memref<1x1x32xf32, #tpu.memory_space<vmem>>) attributes {dimension_semantics = [#tpu.dimension_semantics<parallel>], iteration_bounds = array<i64: 2>, scalar_prefetch = 0 : i64, scratch_operands = 0 : i64, tpu.core_type = #tpu.core_type<tc>, window_params = [{transform_indices = @transform_0, window_bounds = array<i64: 1, 16, 32>}, {transform_indices = @transform_1, window_bounds = array<i64: 1, 1, 16>}, {pipeline_mode = #tpu.pipeline_mode<synchronous>, transform_indices = @transform_2, window_bounds = array<i64: 32, 96>}, {pipeline_mode = #tpu.pipeline_mode<synchronous>, transform_indices = @transform_3, window_bounds = array<i64: 1, 96>}, {pipeline_mode = #tpu.pipeline_mode<synchronous>, transform_indices = @transform_4, window_bounds = array<i64: 32, 32>}, {pipeline_mode = #tpu.pipeline_mode<synchronous>, transform_indices = @transform_5, window_bounds = array<i64: 1, 32>}, {pipeline_mode = #tpu.pipeline_mode<synchronous>, transform_indices = @transform_6, window_bounds = array<i64: 1, 32>}, {pipeline_mode = #tpu.pipeline_mode<synchronous>, transform_indices = @transform_7, window_bounds = array<i64: 1, 32>}, {pipeline_mode = #tpu.pipeline_mode<synchronous>, transform_indices = @transform_8, window_bounds = array<i64: 32, 64>}, {pipeline_mode = #tpu.pipeline_mode<synchronous>, transform_indices = @transform_9, window_bounds = array<i64: 1, 64>}, {pipeline_mode = #tpu.pipeline_mode<synchronous>, transform_indices = @transform_10, window_bounds = array<i64: 64, 32>}, {pipeline_mode = #tpu.pipeline_mode<synchronous>, transform_indices = @transform_11, window_bounds = array<i64: 1, 32>}, {pipeline_mode = #tpu.pipeline_mode<synchronous>, transform_indices = @transform_12, window_bounds = array<i64: 1, 32>}, {pipeline_mode = #tpu.pipeline_mode<synchronous>, transform_indices = @transform_13, window_bounds = array<i64: 1, 32>}, {pipeline_mode = #tpu.pipeline_mode<synchronous>, transform_indices = @transform_14, window_bounds = array<i64: 32, 32>}, {pipeline_mode = #tpu.pipeline_mode<synchronous>, transform_indices = @transform_15, window_bounds = array<i64: 1, 32>}, {transform_indices = @transform_16, window_bounds = array<i64: 1, 16, 32>}, {transform_indices = @transform_17, window_bounds = array<i64: 1, 1, 32>}]} {
    %c0 = arith.constant 0 : index
    %c0_0 = arith.constant 0 : index
    %c0_1 = arith.constant 0 : index
    %0 = vector.load %arg1[%c0, %c0_0, %c0_1] : memref<1x16x32xf32, #tpu.memory_space<vmem>>, vector<1x16x32xf32>
    %1 = vector.shape_cast %0 : vector<1x16x32xf32> to vector<16x32xf32>
    %c0_2 = arith.constant 0 : index
    %c0_3 = arith.constant 0 : index
    %c0_4 = arith.constant 0 : index
    %2 = vector.load %arg2[%c0_2, %c0_3, %c0_4] : memref<1x1x16xf32, #tpu.memory_space<vmem>>, vector<1x1x16xf32>
    %3 = vector.shape_cast %2 : vector<1x1x16xf32> to vector<1x16xf32>
    %c0_5 = arith.constant 0 : index
    %c0_6 = arith.constant 0 : index
    %4 = vector.load %arg3[%c0_5, %c0_6] : memref<32x96xf32, #tpu.memory_space<vmem>>, vector<32x96xf32>
    %cst = arith.constant dense<0.000000e+00> : vector<16x96xf32>
    %5 = tpu.matmul %1, %4, %cst {dimension_numbers = #tpu.dot_dimension_numbers<[1], [0], [0], [1], [0, 0, 1, 1], [], []>} : vector<16x32xf32>, vector<32x96xf32>, vector<16x96xf32> -> vector<16x96xf32>
    %c0_7 = arith.constant 0 : index
    %c0_8 = arith.constant 0 : index
    %6 = vector.load %arg4[%c0_7, %c0_8] : memref<1x96xf32, #tpu.memory_space<vmem>>, vector<1x96xf32>
    %7 = vector.broadcast %6 : vector<1x96xf32> to vector<16x96xf32>
    %8 = arith.addf %5, %7 : vector<16x96xf32>
    %9 = vector.extract_strided_slice %8 {offsets = [0, 0], sizes = [16, 32], strides = [1, 1]} : vector<16x96xf32> to vector<16x32xf32>
    %10 = vector.extract_strided_slice %8 {offsets = [0, 32], sizes = [16, 32], strides = [1, 1]} : vector<16x96xf32> to vector<16x32xf32>
    %11 = vector.extract_strided_slice %8 {offsets = [0, 64], sizes = [16, 32], strides = [1, 1]} : vector<16x96xf32> to vector<16x32xf32>
    %12 = vector.extract_strided_slice %9 {offsets = [0, 0], sizes = [16, 8], strides = [1, 1]} : vector<16x32xf32> to vector<16x8xf32>
    %13 = vector.extract_strided_slice %10 {offsets = [0, 0], sizes = [16, 8], strides = [1, 1]} : vector<16x32xf32> to vector<16x8xf32>
    %14 = vector.extract_strided_slice %11 {offsets = [0, 0], sizes = [16, 8], strides = [1, 1]} : vector<16x32xf32> to vector<16x8xf32>
    %cst_9 = arith.constant dense<0.000000e+00> : vector<16x16xf32>
    %15 = tpu.matmul %12, %13, %cst_9 {dimension_numbers = #tpu.dot_dimension_numbers<[1], [1], [0], [0], [0, 0, 1, 0], [], []>} : vector<16x8xf32>, vector<16x8xf32>, vector<16x16xf32> -> vector<16x16xf32>
    %cst_10 = arith.constant 0.353553385 : f32
    %16 = vector.broadcast %cst_10 : f32 to vector<16x16xf32>
    %17 = arith.mulf %15, %16 : vector<16x16xf32>
    %18 = vector.broadcast %3 : vector<1x16xf32> to vector<16x16xf32>
    %19 = arith.addf %17, %18 : vector<16x16xf32>
    %cst_11 = arith.constant dense<0xFF800000> : vector<16xf32>
    %20 = vector.multi_reduction <maximumf>, %19, %cst_11 [1] : vector<16x16xf32> to vector<16xf32>
    %21 = vector.shape_cast %20 : vector<16xf32> to vector<16x1xf32>
    %22 = vector.broadcast %21 : vector<16x1xf32> to vector<16x16xf32>
    %23 = arith.subf %19, %22 : vector<16x16xf32>
    %24 = math.exp %23 : vector<16x16xf32>
    %cst_12 = arith.constant dense<0.000000e+00> : vector<16xf32>
    %25 = vector.multi_reduction <add>, %24, %cst_12 [1] : vector<16x16xf32> to vector<16xf32>
    %26 = vector.shape_cast %25 : vector<16xf32> to vector<16x1xf32>
    %27 = tpu.reciprocal %26 {approx = true} : vector<16x1xf32> -> vector<16x1xf32>
    %28 = vector.broadcast %27 : vector<16x1xf32> to vector<16x16xf32>
    %29 = arith.mulf %24, %28 : vector<16x16xf32>
    %cst_13 = arith.constant dense<0.000000e+00> : vector<16x8xf32>
    %30 = tpu.matmul %29, %14, %cst_13 {dimension_numbers = #tpu.dot_dimension_numbers<[1], [0], [0], [1], [0, 0, 1, 1], [], []>} : vector<16x16xf32>, vector<16x8xf32>, vector<16x8xf32> -> vector<16x8xf32>
    %31 = vector.extract_strided_slice %9 {offsets = [0, 8], sizes = [16, 8], strides = [1, 1]} : vector<16x32xf32> to vector<16x8xf32>
    %32 = vector.extract_strided_slice %10 {offsets = [0, 8], sizes = [16, 8], strides = [1, 1]} : vector<16x32xf32> to vector<16x8xf32>
    %33 = vector.extract_strided_slice %11 {offsets = [0, 8], sizes = [16, 8], strides = [1, 1]} : vector<16x32xf32> to vector<16x8xf32>
    %cst_14 = arith.constant dense<0.000000e+00> : vector<16x16xf32>
    %34 = tpu.matmul %31, %32, %cst_14 {dimension_numbers = #tpu.dot_dimension_numbers<[1], [1], [0], [0], [0, 0, 1, 0], [], []>} : vector<16x8xf32>, vector<16x8xf32>, vector<16x16xf32> -> vector<16x16xf32>
    %cst_15 = arith.constant 0.353553385 : f32
    %35 = vector.broadcast %cst_15 : f32 to vector<16x16xf32>
    %36 = arith.mulf %34, %35 : vector<16x16xf32>
    %37 = vector.broadcast %3 : vector<1x16xf32> to vector<16x16xf32>
    %38 = arith.addf %36, %37 : vector<16x16xf32>
    %cst_16 = arith.constant dense<0xFF800000> : vector<16xf32>
    %39 = vector.multi_reduction <maximumf>, %38, %cst_16 [1] : vector<16x16xf32> to vector<16xf32>
    %40 = vector.shape_cast %39 : vector<16xf32> to vector<16x1xf32>
    %41 = vector.broadcast %40 : vector<16x1xf32> to vector<16x16xf32>
    %42 = arith.subf %38, %41 : vector<16x16xf32>
    %43 = math.exp %42 : vector<16x16xf32>
    %cst_17 = arith.constant dense<0.000000e+00> : vector<16xf32>
    %44 = vector.multi_reduction <add>, %43, %cst_17 [1] : vector<16x16xf32> to vector<16xf32>
    %45 = vector.shape_cast %44 : vector<16xf32> to vector<16x1xf32>
    %46 = tpu.reciprocal %45 {approx = true} : vector<16x1xf32> -> vector<16x1xf32>
    %47 = vector.broadcast %46 : vector<16x1xf32> to vector<16x16xf32>
    %48 = arith.mulf %43, %47 : vector<16x16xf32>
    %cst_18 = arith.constant dense<0.000000e+00> : vector<16x8xf32>
    %49 = tpu.matmul %48, %33, %cst_18 {dimension_numbers = #tpu.dot_dimension_numbers<[1], [0], [0], [1], [0, 0, 1, 1], [], []>} : vector<16x16xf32>, vector<16x8xf32>, vector<16x8xf32> -> vector<16x8xf32>
    %50 = vector.extract_strided_slice %9 {offsets = [0, 16], sizes = [16, 8], strides = [1, 1]} : vector<16x32xf32> to vector<16x8xf32>
    %51 = vector.extract_strided_slice %10 {offsets = [0, 16], sizes = [16, 8], strides = [1, 1]} : vector<16x32xf32> to vector<16x8xf32>
    %52 = vector.extract_strided_slice %11 {offsets = [0, 16], sizes = [16, 8], strides = [1, 1]} : vector<16x32xf32> to vector<16x8xf32>
    %cst_19 = arith.constant dense<0.000000e+00> : vector<16x16xf32>
    %53 = tpu.matmul %50, %51, %cst_19 {dimension_numbers = #tpu.dot_dimension_numbers<[1], [1], [0], [0], [0, 0, 1, 0], [], []>} : vector<16x8xf32>, vector<16x8xf32>, vector<16x16xf32> -> vector<16x16xf32>
    %cst_20 = arith.constant 0.353553385 : f32
    %54 = vector.broadcast %cst_20 : f32 to vector<16x16xf32>
    %55 = arith.mulf %53, %54 : vector<16x16xf32>
    %56 = vector.broadcast %3 : vector<1x16xf32> to vector<16x16xf32>
    %57 = arith.addf %55, %56 : vector<16x16xf32>
    %cst_21 = arith.constant dense<0xFF800000> : vector<16xf32>
    %58 = vector.multi_reduction <maximumf>, %57, %cst_21 [1] : vector<16x16xf32> to vector<16xf32>
    %59 = vector.shape_cast %58 : vector<16xf32> to vector<16x1xf32>
    %60 = vector.broadcast %59 : vector<16x1xf32> to vector<16x16xf32>
    %61 = arith.subf %57, %60 : vector<16x16xf32>
    %62 = math.exp %61 : vector<16x16xf32>
    %cst_22 = arith.constant dense<0.000000e+00> : vector<16xf32>
    %63 = vector.multi_reduction <add>, %62, %cst_22 [1] : vector<16x16xf32> to vector<16xf32>
    %64 = vector.shape_cast %63 : vector<16xf32> to vector<16x1xf32>
    %65 = tpu.reciprocal %64 {approx = true} : vector<16x1xf32> -> vector<16x1xf32>
    %66 = vector.broadcast %65 : vector<16x1xf32> to vector<16x16xf32>
    %67 = arith.mulf %62, %66 : vector<16x16xf32>
    %cst_23 = arith.constant dense<0.000000e+00> : vector<16x8xf32>
    %68 = tpu.matmul %67, %52, %cst_23 {dimension_numbers = #tpu.dot_dimension_numbers<[1], [0], [0], [1], [0, 0, 1, 1], [], []>} : vector<16x16xf32>, vector<16x8xf32>, vector<16x8xf32> -> vector<16x8xf32>
    %69 = vector.extract_strided_slice %9 {offsets = [0, 24], sizes = [16, 8], strides = [1, 1]} : vector<16x32xf32> to vector<16x8xf32>
    %70 = vector.extract_strided_slice %10 {offsets = [0, 24], sizes = [16, 8], strides = [1, 1]} : vector<16x32xf32> to vector<16x8xf32>
    %71 = vector.extract_strided_slice %11 {offsets = [0, 24], sizes = [16, 8], strides = [1, 1]} : vector<16x32xf32> to vector<16x8xf32>
    %cst_24 = arith.constant dense<0.000000e+00> : vector<16x16xf32>
    %72 = tpu.matmul %69, %70, %cst_24 {dimension_numbers = #tpu.dot_dimension_numbers<[1], [1], [0], [0], [0, 0, 1, 0], [], []>} : vector<16x8xf32>, vector<16x8xf32>, vector<16x16xf32> -> vector<16x16xf32>
    %cst_25 = arith.constant 0.353553385 : f32
    %73 = vector.broadcast %cst_25 : f32 to vector<16x16xf32>
    %74 = arith.mulf %72, %73 : vector<16x16xf32>
    %75 = vector.broadcast %3 : vector<1x16xf32> to vector<16x16xf32>
    %76 = arith.addf %74, %75 : vector<16x16xf32>
    %cst_26 = arith.constant dense<0xFF800000> : vector<16xf32>
    %77 = vector.multi_reduction <maximumf>, %76, %cst_26 [1] : vector<16x16xf32> to vector<16xf32>
    %78 = vector.shape_cast %77 : vector<16xf32> to vector<16x1xf32>
    %79 = vector.broadcast %78 : vector<16x1xf32> to vector<16x16xf32>
    %80 = arith.subf %76, %79 : vector<16x16xf32>
    %81 = math.exp %80 : vector<16x16xf32>
    %cst_27 = arith.constant dense<0.000000e+00> : vector<16xf32>
    %82 = vector.multi_reduction <add>, %81, %cst_27 [1] : vector<16x16xf32> to vector<16xf32>
    %83 = vector.shape_cast %82 : vector<16xf32> to vector<16x1xf32>
    %84 = tpu.reciprocal %83 {approx = true} : vector<16x1xf32> -> vector<16x1xf32>
    %85 = vector.broadcast %84 : vector<16x1xf32> to vector<16x16xf32>
    %86 = arith.mulf %81, %85 : vector<16x16xf32>
    %cst_28 = arith.constant dense<0.000000e+00> : vector<16x8xf32>
    %87 = tpu.matmul %86, %71, %cst_28 {dimension_numbers = #tpu.dot_dimension_numbers<[1], [0], [0], [1], [0, 0, 1, 1], [], []>} : vector<16x16xf32>, vector<16x8xf32>, vector<16x8xf32> -> vector<16x8xf32>
    %88 = tpu.concatenate %30, %49, %68, %87 in 1 : vector<16x8xf32>, vector<16x8xf32>, vector<16x8xf32>, vector<16x8xf32> -> vector<16x32xf32>
    %c0_29 = arith.constant 0 : index
    %c0_30 = arith.constant 0 : index
    %89 = vector.load %arg5[%c0_29, %c0_30] : memref<32x32xf32, #tpu.memory_space<vmem>>, vector<32x32xf32>
    %cst_31 = arith.constant dense<0.000000e+00> : vector<16x32xf32>
    %90 = tpu.matmul %88, %89, %cst_31 {dimension_numbers = #tpu.dot_dimension_numbers<[1], [0], [0], [1], [0, 0, 1, 1], [], []>} : vector<16x32xf32>, vector<32x32xf32>, vector<16x32xf32> -> vector<16x32xf32>
    %c0_32 = arith.constant 0 : index
    %c0_33 = arith.constant 0 : index
    %91 = vector.load %arg6[%c0_32, %c0_33] : memref<1x32xf32, #tpu.memory_space<vmem>>, vector<1x32xf32>
    %92 = vector.broadcast %91 : vector<1x32xf32> to vector<16x32xf32>
    %93 = arith.addf %90, %92 : vector<16x32xf32>
    %94 = arith.addf %93, %1 : vector<16x32xf32>
    %c0_34 = arith.constant 0 : index
    %c0_35 = arith.constant 0 : index
    %95 = vector.load %arg7[%c0_34, %c0_35] : memref<1x32xf32, #tpu.memory_space<vmem>>, vector<1x32xf32>
    %c0_36 = arith.constant 0 : index
    %c0_37 = arith.constant 0 : index
    %96 = vector.load %arg8[%c0_36, %c0_37] : memref<1x32xf32, #tpu.memory_space<vmem>>, vector<1x32xf32>
    %cst_38 = arith.constant dense<0.000000e+00> : vector<16xf32>
    %97 = vector.multi_reduction <add>, %94, %cst_38 [1] : vector<16x32xf32> to vector<16xf32>
    %98 = vector.shape_cast %97 : vector<16xf32> to vector<16x1xf32>
    %cst_39 = arith.constant 3.200000e+01 : f32
    %99 = vector.broadcast %cst_39 : f32 to vector<16x1xf32>
    %100 = arith.divf %98, %99 : vector<16x1xf32>
    %101 = vector.broadcast %100 : vector<16x1xf32> to vector<16x32xf32>
    %102 = arith.subf %94, %101 : vector<16x32xf32>
    %103 = arith.mulf %102, %102 : vector<16x32xf32>
    %cst_40 = arith.constant dense<0.000000e+00> : vector<16xf32>
    %104 = vector.multi_reduction <add>, %103, %cst_40 [1] : vector<16x32xf32> to vector<16xf32>
    %105 = vector.shape_cast %104 : vector<16xf32> to vector<16x1xf32>
    %cst_41 = arith.constant 3.200000e+01 : f32
    %106 = vector.broadcast %cst_41 : f32 to vector<16x1xf32>
    %107 = arith.divf %105, %106 : vector<16x1xf32>
    %108 = vector.broadcast %100 : vector<16x1xf32> to vector<16x32xf32>
    %109 = arith.subf %94, %108 : vector<16x32xf32>
    %cst_42 = arith.constant 9.99999996E-13 : f32
    %110 = vector.broadcast %cst_42 : f32 to vector<16x1xf32>
    %111 = arith.addf %107, %110 : vector<16x1xf32>
    %112 = math.rsqrt %111 : vector<16x1xf32>
    %113 = vector.broadcast %112 : vector<16x1xf32> to vector<16x32xf32>
    %114 = arith.mulf %109, %113 : vector<16x32xf32>
    %115 = vector.broadcast %95 : vector<1x32xf32> to vector<16x32xf32>
    %116 = arith.mulf %114, %115 : vector<16x32xf32>
    %117 = vector.broadcast %96 : vector<1x32xf32> to vector<16x32xf32>
    %118 = arith.addf %116, %117 : vector<16x32xf32>
    %c0_43 = arith.constant 0 : index
    %c0_44 = arith.constant 0 : index
    %119 = vector.load %arg9[%c0_43, %c0_44] : memref<32x64xf32, #tpu.memory_space<vmem>>, vector<32x64xf32>
    %cst_45 = arith.constant dense<0.000000e+00> : vector<16x64xf32>
    %120 = tpu.matmul %118, %119, %cst_45 {dimension_numbers = #tpu.dot_dimension_numbers<[1], [0], [0], [1], [0, 0, 1, 1], [], []>} : vector<16x32xf32>, vector<32x64xf32>, vector<16x64xf32> -> vector<16x64xf32>
    %c0_46 = arith.constant 0 : index
    %c0_47 = arith.constant 0 : index
    %121 = vector.load %arg10[%c0_46, %c0_47] : memref<1x64xf32, #tpu.memory_space<vmem>>, vector<1x64xf32>
    %122 = vector.broadcast %121 : vector<1x64xf32> to vector<16x64xf32>
    %123 = arith.addf %120, %122 : vector<16x64xf32>
    %124 = arith.mulf %123, %123 : vector<16x64xf32>
    %125 = arith.mulf %123, %124 : vector<16x64xf32>
    %cst_48 = arith.constant 4.471500e-02 : f32
    %126 = vector.broadcast %cst_48 : f32 to vector<16x64xf32>
    %127 = arith.mulf %126, %125 : vector<16x64xf32>
    %128 = arith.addf %123, %127 : vector<16x64xf32>
    %cst_49 = arith.constant 0.797884583 : f32
    %129 = vector.broadcast %cst_49 : f32 to vector<16x64xf32>
    %130 = arith.mulf %129, %128 : vector<16x64xf32>
    %131 = math.tanh %130 : vector<16x64xf32>
    %cst_50 = arith.constant 1.000000e+00 : f32
    %132 = vector.broadcast %cst_50 : f32 to vector<16x64xf32>
    %133 = arith.addf %132, %131 : vector<16x64xf32>
    %cst_51 = arith.constant 5.000000e-01 : f32
    %134 = vector.broadcast %cst_51 : f32 to vector<16x64xf32>
    %135 = arith.mulf %134, %133 : vector<16x64xf32>
    %136 = arith.mulf %123, %135 : vector<16x64xf32>
    %c0_52 = arith.constant 0 : index
    %c0_53 = arith.constant 0 : index
    %137 = vector.load %arg11[%c0_52, %c0_53] : memref<64x32xf32, #tpu.memory_space<vmem>>, vector<64x32xf32>
    %cst_54 = arith.constant dense<0.000000e+00> : vector<16x32xf32>
    %138 = tpu.matmul %136, %137, %cst_54 {dimension_numbers = #tpu.dot_dimension_numbers<[1], [0], [0], [1], [0, 0, 1, 1], [], []>} : vector<16x64xf32>, vector<64x32xf32>, vector<16x32xf32> -> vector<16x32xf32>
    %c0_55 = arith.constant 0 : index
    %c0_56 = arith.constant 0 : index
    %139 = vector.load %arg12[%c0_55, %c0_56] : memref<1x32xf32, #tpu.memory_space<vmem>>, vector<1x32xf32>
    %140 = vector.broadcast %139 : vector<1x32xf32> to vector<16x32xf32>
    %141 = arith.addf %138, %140 : vector<16x32xf32>
    %142 = arith.addf %141, %118 : vector<16x32xf32>
    %c0_57 = arith.constant 0 : index
    %c0_58 = arith.constant 0 : index
    %143 = vector.load %arg13[%c0_57, %c0_58] : memref<1x32xf32, #tpu.memory_space<vmem>>, vector<1x32xf32>
    %c0_59 = arith.constant 0 : index
    %c0_60 = arith.constant 0 : index
    %144 = vector.load %arg14[%c0_59, %c0_60] : memref<1x32xf32, #tpu.memory_space<vmem>>, vector<1x32xf32>
    %cst_61 = arith.constant dense<0.000000e+00> : vector<16xf32>
    %145 = vector.multi_reduction <add>, %142, %cst_61 [1] : vector<16x32xf32> to vector<16xf32>
    %146 = vector.shape_cast %145 : vector<16xf32> to vector<16x1xf32>
    %cst_62 = arith.constant 3.200000e+01 : f32
    %147 = vector.broadcast %cst_62 : f32 to vector<16x1xf32>
    %148 = arith.divf %146, %147 : vector<16x1xf32>
    %149 = vector.broadcast %148 : vector<16x1xf32> to vector<16x32xf32>
    %150 = arith.subf %142, %149 : vector<16x32xf32>
    %151 = arith.mulf %150, %150 : vector<16x32xf32>
    %cst_63 = arith.constant dense<0.000000e+00> : vector<16xf32>
    %152 = vector.multi_reduction <add>, %151, %cst_63 [1] : vector<16x32xf32> to vector<16xf32>
    %153 = vector.shape_cast %152 : vector<16xf32> to vector<16x1xf32>
    %cst_64 = arith.constant 3.200000e+01 : f32
    %154 = vector.broadcast %cst_64 : f32 to vector<16x1xf32>
    %155 = arith.divf %153, %154 : vector<16x1xf32>
    %156 = vector.broadcast %148 : vector<16x1xf32> to vector<16x32xf32>
    %157 = arith.subf %142, %156 : vector<16x32xf32>
    %cst_65 = arith.constant 9.99999996E-13 : f32
    %158 = vector.broadcast %cst_65 : f32 to vector<16x1xf32>
    %159 = arith.addf %155, %158 : vector<16x1xf32>
    %160 = math.rsqrt %159 : vector<16x1xf32>
    %161 = vector.broadcast %160 : vector<16x1xf32> to vector<16x32xf32>
    %162 = arith.mulf %157, %161 : vector<16x32xf32>
    %163 = vector.broadcast %143 : vector<1x32xf32> to vector<16x32xf32>
    %164 = arith.mulf %162, %163 : vector<16x32xf32>
    %165 = vector.broadcast %144 : vector<1x32xf32> to vector<16x32xf32>
    %166 = arith.addf %164, %165 : vector<16x32xf32>
    %167 = vector.shape_cast %166 : vector<16x32xf32> to vector<1x16x32xf32>
    %c0_66 = arith.constant 0 : index
    %c0_67 = arith.constant 0 : index
    %c0_68 = arith.constant 0 : index
    %168 = vector.load %arg17[%c0_66, %c0_67, %c0_68] : memref<1x16x32xf32, #tpu.memory_space<vmem>>, vector<1x16x32xf32>
    tpu.vector_store %arg17[%c0_66, %c0_67, %c0_68], %167 {strides = array<i32>} : memref<1x16x32xf32, #tpu.memory_space<vmem>>, vector<1x16x32xf32>,
    %169 = vector.extract_strided_slice %166 {offsets = [0, 0], sizes = [1, 32], strides = [1, 1]} : vector<16x32xf32> to vector<1x32xf32>
    %c0_69 = arith.constant 0 : index
    %c0_70 = arith.constant 0 : index
    %170 = vector.load %arg15[%c0_69, %c0_70] : memref<32x32xf32, #tpu.memory_space<vmem>>, vector<32x32xf32>
    %cst_71 = arith.constant dense<0.000000e+00> : vector<1x32xf32>
    %171 = tpu.matmul %169, %170, %cst_71 {dimension_numbers = #tpu.dot_dimension_numbers<[1], [0], [0], [1], [0, 0, 1, 1], [], []>} : vector<1x32xf32>, vector<32x32xf32>, vector<1x32xf32> -> vector<1x32xf32>
    %c0_72 = arith.constant 0 : index
    %c0_73 = arith.constant 0 : index
    %172 = vector.load %arg16[%c0_72, %c0_73] : memref<1x32xf32, #tpu.memory_space<vmem>>, vector<1x32xf32>
    %173 = arith.addf %171, %172 : vector<1x32xf32>
    %174 = math.tanh %173 : vector<1x32xf32>
    %175 = vector.shape_cast %174 : vector<1x32xf32> to vector<1x1x32xf32>
    %c0_74 = arith.constant 0 : index
    %c0_75 = arith.constant 0 : index
    %c0_76 = arith.constant 0 : index
    %176 = vector.load %arg18[%c0_74, %c0_75, %c0_76] : memref<1x1x32xf32, #tpu.memory_space<vmem>>, vector<1x1x32xf32>
    tpu.vector_store %arg18[%c0_74, %c0_75, %c0_76], %175 {strides = array<i32>} : memref<1x1x32xf32, #tpu.memory_space<vmem>>, vector<1x1x32xf32>,
    return
  }
  func.func @transform_0(%arg0: i32) -> (i32, i32, i32) {
    %c0_i32 = arith.constant 0 : i32
    %c0_i32_0 = arith.constant 0 : i32
    %c0_i32_1 = arith.constant 0 : i32
    return %arg0, %c0_i32, %c0_i32_0 : i32, i32, i32
  }
  func.func @transform_1(%arg0: i32) -> (i32, i32, i32) {
    %c0_i32 = arith.constant 0 : i32
    %c0_i32_0 = arith.constant 0 : i32
    %c0_i32_1 = arith.constant 0 : i32
    return %arg0, %c0_i32, %c0_i32_0 : i32, i32, i32
  }
  func.func @transform_2(%arg0: i32) -> (i32, i32) {
    %c0_i32 = arith.constant 0 : i32
    %c0_i32_0 = arith.constant 0 : i32
    %c0_i32_1 = arith.constant 0 : i32
    return %c0_i32, %c0_i32_0 : i32, i32
  }
  func.func @transform_3(%arg0: i32) -> (i32, i32) {
    %c0_i32 = arith.constant 0 : i32
    %c0_i32_0 = arith.constant 0 : i32
    %c0_i32_1 = arith.constant 0 : i32
    return %c0_i32, %c0_i32_0 : i32, i32
  }
  func.func @transform_4(%arg0: i32) -> (i32, i32) {
    %c0_i32 = arith.constant 0 : i32
    %c0_i32_0 = arith.constant 0 : i32
    %c0_i32_1 = arith.constant 0 : i32
    return %c0_i32, %c0_i32_0 : i32, i32
  }
  func.func @transform_5(%arg0: i32) -> (i32, i32) {
    %c0_i32 = arith.constant 0 : i32
    %c0_i32_0 = arith.constant 0 : i32
    %c0_i32_1 = arith.constant 0 : i32
    return %c0_i32, %c0_i32_0 : i32, i32
  }
  func.func @transform_6(%arg0: i32) -> (i32, i32) {
    %c0_i32 = arith.constant 0 : i32
    %c0_i32_0 = arith.constant 0 : i32
    %c0_i32_1 = arith.constant 0 : i32
    return %c0_i32, %c0_i32_0 : i32, i32
  }
  func.func @transform_7(%arg0: i32) -> (i32, i32) {
    %c0_i32 = arith.constant 0 : i32
    %c0_i32_0 = arith.constant 0 : i32
    %c0_i32_1 = arith.constant 0 : i32
    return %c0_i32, %c0_i32_0 : i32, i32
  }
  func.func @transform_8(%arg0: i32) -> (i32, i32) {
    %c0_i32 = arith.constant 0 : i32
    %c0_i32_0 = arith.constant 0 : i32
    %c0_i32_1 = arith.constant 0 : i32
    return %c0_i32, %c0_i32_0 : i32, i32
  }
  func.func @transform_9(%arg0: i32) -> (i32, i32) {
    %c0_i32 = arith.constant 0 : i32
    %c0_i32_0 = arith.constant 0 : i32
    %c0_i32_1 = arith.constant 0 : i32
    return %c0_i32, %c0_i32_0 : i32, i32
  }
  func.func @transform_10(%arg0: i32) -> (i32, i32) {
    %c0_i32 = arith.constant 0 : i32
    %c0_i32_0 = arith.constant 0 : i32
    %c0_i32_1 = arith.constant 0 : i32
    return %c0_i32, %c0_i32_0 : i32, i32
  }
  func.func @transform_11(%arg0: i32) -> (i32, i32) {
    %c0_i32 = arith.constant 0 : i32
    %c0_i32_0 = arith.constant 0 : i32
    %c0_i32_1 = arith.constant 0 : i32
    return %c0_i32, %c0_i32_0 : i32, i32
  }
  func.func @transform_12(%arg0: i32) -> (i32, i32) {
    %c0_i32 = arith.constant 0 : i32
    %c0_i32_0 = arith.constant 0 : i32
    %c0_i32_1 = arith.constant 0 : i32
    return %c0_i32, %c0_i32_0 : i32, i32
  }
  func.func @transform_13(%arg0: i32) -> (i32, i32) {
    %c0_i32 = arith.constant 0 : i32
    %c0_i32_0 = arith.constant 0 : i32
    %c0_i32_1 = arith.constant 0 : i32
    return %c0_i32, %c0_i32_0 : i32, i32
  }
  func.func @transform_14(%arg0: i32) -> (i32, i32) {
    %c0_i32 = arith.constant 0 : i32
    %c0_i32_0 = arith.constant 0 : i32
    %c0_i32_1 = arith.constant 0 : i32
    return %c0_i32, %c0_i32_0 : i32, i32
  }
  func.func @transform_15(%arg0: i32) -> (i32, i32) {
    %c0_i32 = arith.constant 0 : i32
    %c0_i32_0 = arith.constant 0 : i32
    %c0_i32_1 = arith.constant 0 : i32
    return %c0_i32, %c0_i32_0 : i32, i32
  }
  func.func @transform_16(%arg0: i32) -> (i32, i32, i32) {
    %c0_i32 = arith.constant 0 : i32
    %c0_i32_0 = arith.constant 0 : i32
    %c0_i32_1 = arith.constant 0 : i32
    return %arg0, %c0_i32, %c0_i32_0 : i32, i32, i32
  }
  func.func @transform_17(%arg0: i32) -> (i32, i32, i32) {
    %c0_i32 = arith.constant 0 : i32
    %c0_i32_0 = arith.constant 0 : i32
    %c0_i32_1 = arith.constant 0 : i32
    return %arg0, %c0_i32, %c0_i32_0 : i32, i32, i32
  }
}

module attributes {stable_mosaic.version = 11 : i64} {
  func.func @_decoder_kernel(%arg0: i32, %arg1: i32, %arg2: memref<1x1x1x32xf32, #tpu.memory_space<vmem>>, %arg3: memref<1x16x32xf32, #tpu.memory_space<vmem>>, %arg4: memref<1x1x32xf32, #tpu.memory_space<vmem>>, %arg5: memref<1x1x16xf32, #tpu.memory_space<vmem>>, %arg6: memref<1x16x128xf32, #tpu.memory_space<vmem>>, %arg7: memref<128x32xf32, #tpu.memory_space<vmem>>, %arg8: memref<32x128xf32, #tpu.memory_space<vmem>>, %arg9: memref<32x96xf32, #tpu.memory_space<vmem>>, %arg10: memref<32x96xf32, #tpu.memory_space<vmem>>, %arg11: memref<1x96xf32, #tpu.memory_space<vmem>>, %arg12: memref<1x96xf32, #tpu.memory_space<vmem>>, %arg13: memref<96x1xf32, #tpu.memory_space<vmem>>, %arg14: memref<1x1xf32, #tpu.memory_space<vmem>>, %arg15: memref<1x1x3x128xf32, #tpu.memory_space<vmem>>, %arg16: memref<1x32xf32, #tpu.memory_space<vmem>>) attributes {dimension_semantics = [#tpu.dimension_semantics<parallel>, #tpu.dimension_semantics<arbitrary>], iteration_bounds = array<i64: 2, 2>, scalar_prefetch = 0 : i64, scratch_operands = 1 : i64, tpu.core_type = #tpu.core_type<tc>, window_params = [{transform_indices = @transform_0, window_bounds = array<i64: 1, 1, 1, 32>}, {transform_indices = @transform_1, window_bounds = array<i64: 1, 16, 32>}, {transform_indices = @transform_2, window_bounds = array<i64: 1, 1, 32>}, {transform_indices = @transform_3, window_bounds = array<i64: 1, 1, 16>}, {transform_indices = @transform_4, window_bounds = array<i64: 1, 16, 128>}, {pipeline_mode = #tpu.pipeline_mode<synchronous>, transform_indices = @transform_5, window_bounds = array<i64: 128, 32>}, {pipeline_mode = #tpu.pipeline_mode<synchronous>, transform_indices = @transform_6, window_bounds = array<i64: 32, 128>}, {pipeline_mode = #tpu.pipeline_mode<synchronous>, transform_indices = @transform_7, window_bounds = array<i64: 32, 96>}, {pipeline_mode = #tpu.pipeline_mode<synchronous>, transform_indices = @transform_8, window_bounds = array<i64: 32, 96>}, {pipeline_mode = #tpu.pipeline_mode<synchronous>, transform_indices = @transform_9, window_bounds = array<i64: 1, 96>}, {pipeline_mode = #tpu.pipeline_mode<synchronous>, transform_indices = @transform_10, window_bounds = array<i64: 1, 96>}, {pipeline_mode = #tpu.pipeline_mode<synchronous>, transform_indices = @transform_11, window_bounds = array<i64: 96, 1>}, {pipeline_mode = #tpu.pipeline_mode<synchronous>, transform_indices = @transform_12, window_bounds = array<i64: 1, 1>}, {transform_indices = @transform_13, window_bounds = array<i64: 1, 1, 3, 128>}]} {
    %c0_i32 = arith.constant 0 : i32
    %0 = arith.cmpi eq, %arg1, %c0_i32 : i32
    %1 = arith.extui %0 : i1 to i32
    %c0_i32_0 = arith.constant 0 : i32
    %2 = arith.cmpi ne, %1, %c0_i32_0 : i32
    scf.if %2 {
      %c0_97 = arith.constant 0 : index
      %c0_98 = arith.constant 0 : index
      %c0_99 = arith.constant 0 : index
      %264 = vector.load %arg4[%c0_97, %c0_98, %c0_99] : memref<1x1x32xf32, #tpu.memory_space<vmem>>, vector<1x1x32xf32>
      %265 = vector.shape_cast %264 : vector<1x1x32xf32> to vector<1x32xf32>
      %c0_100 = arith.constant 0 : index
      %c0_101 = arith.constant 0 : index
      %266 = vector.load %arg16[%c0_100, %c0_101] : memref<1x32xf32, #tpu.memory_space<vmem>>, vector<1x32xf32>
      tpu.vector_store %arg16[%c0_100, %c0_101], %265 {strides = array<i32>} : memref<1x32xf32, #tpu.memory_space<vmem>>, vector<1x32xf32>,
    } else {
    }
    %c0 = arith.constant 0 : index
    %c0_1 = arith.constant 0 : index
    %c0_2 = arith.constant 0 : index
    %3 = vector.load %arg3[%c0, %c0_1, %c0_2] : memref<1x16x32xf32, #tpu.memory_space<vmem>>, vector<1x16x32xf32>
    %4 = vector.shape_cast %3 : vector<1x16x32xf32> to vector<16x32xf32>
    %c0_3 = arith.constant 0 : index
    %c0_4 = arith.constant 0 : index
    %c0_5 = arith.constant 0 : index
    %5 = vector.load %arg5[%c0_3, %c0_4, %c0_5] : memref<1x1x16xf32, #tpu.memory_space<vmem>>, vector<1x1x16xf32>
    %6 = vector.shape_cast %5 : vector<1x1x16xf32> to vector<1x16xf32>
    %c0_6 = arith.constant 0 : index
    %c0_7 = arith.constant 0 : index
    %c0_8 = arith.constant 0 : index
    %7 = vector.load %arg6[%c0_6, %c0_7, %c0_8] : memref<1x16x128xf32, #tpu.memory_space<vmem>>, vector<1x16x128xf32>
    %8 = vector.shape_cast %7 : vector<1x16x128xf32> to vector<16x128xf32>
    %c0_9 = arith.constant 0 : index
    %c0_10 = arith.constant 0 : index
    %9 = vector.load %arg7[%c0_9, %c0_10] : memref<128x32xf32, #tpu.memory_space<vmem>>, vector<128x32xf32>
    %c0_11 = arith.constant 0 : index
    %c0_12 = arith.constant 0 : index
    %10 = vector.load %arg8[%c0_11, %c0_12] : memref<32x128xf32, #tpu.memory_space<vmem>>, vector<32x128xf32>
    %c0_13 = arith.constant 0 : index
    %c0_14 = arith.constant 0 : index
    %11 = vector.load %arg9[%c0_13, %c0_14] : memref<32x96xf32, #tpu.memory_space<vmem>>, vector<32x96xf32>
    %c0_15 = arith.constant 0 : index
    %c0_16 = arith.constant 0 : index
    %12 = vector.load %arg10[%c0_15, %c0_16] : memref<32x96xf32, #tpu.memory_space<vmem>>, vector<32x96xf32>
    %c0_17 = arith.constant 0 : index
    %c0_18 = arith.constant 0 : index
    %13 = vector.load %arg11[%c0_17, %c0_18] : memref<1x96xf32, #tpu.memory_space<vmem>>, vector<1x96xf32>
    %c0_19 = arith.constant 0 : index
    %c0_20 = arith.constant 0 : index
    %14 = vector.load %arg12[%c0_19, %c0_20] : memref<1x96xf32, #tpu.memory_space<vmem>>, vector<1x96xf32>
    %c0_21 = arith.constant 0 : index
    %c0_22 = arith.constant 0 : index
    %15 = vector.load %arg13[%c0_21, %c0_22] : memref<96x1xf32, #tpu.memory_space<vmem>>, vector<96x1xf32>
    %c0_23 = arith.constant 0 : index
    %c0_24 = arith.constant 0 : index
    %16 = vector.load %arg14[%c0_23, %c0_24] : memref<1x1xf32, #tpu.memory_space<vmem>>, vector<1x1xf32>
    %c0_25 = arith.constant 0 : index
    %c0_26 = arith.constant 0 : index
    %c0_27 = arith.constant 0 : index
    %c0_28 = arith.constant 0 : index
    %17 = vector.load %arg2[%c0_25, %c0_26, %c0_27, %c0_28] : memref<1x1x1x32xf32, #tpu.memory_space<vmem>>, vector<1x1x1x32xf32>
    %18 = vector.shape_cast %17 : vector<1x1x1x32xf32> to vector<1x32xf32>
    %c0_29 = arith.constant 0 : index
    %c0_30 = arith.constant 0 : index
    %19 = vector.load %arg16[%c0_29, %c0_30] : memref<1x32xf32, #tpu.memory_space<vmem>>, vector<1x32xf32>
    %20 = tpu.iota {dimensions = array<i32: 1>} : vector<1x128xi32>
    %cst = arith.constant dense<0.000000e+00> : vector<1x96xf32>
    %21 = tpu.matmul %18, %11, %cst {dimension_numbers = #tpu.dot_dimension_numbers<[1], [0], [0], [1], [0, 0, 1, 1], [], []>} : vector<1x32xf32>, vector<32x96xf32>, vector<1x96xf32> -> vector<1x96xf32>
    %22 = arith.addf %21, %13 : vector<1x96xf32>
    %cst_31 = arith.constant dense<0.000000e+00> : vector<1x96xf32>
    %23 = tpu.matmul %19, %12, %cst_31 {dimension_numbers = #tpu.dot_dimension_numbers<[1], [0], [0], [1], [0, 0, 1, 1], [], []>} : vector<1x32xf32>, vector<32x96xf32>, vector<1x96xf32> -> vector<1x96xf32>
    %24 = arith.addf %23, %14 : vector<1x96xf32>
    %25 = vector.extract_strided_slice %22 {offsets = [0, 0], sizes = [1, 32], strides = [1, 1]} : vector<1x96xf32> to vector<1x32xf32>
    %26 = vector.extract_strided_slice %24 {offsets = [0, 0], sizes = [1, 32], strides = [1, 1]} : vector<1x96xf32> to vector<1x32xf32>
    %27 = arith.addf %25, %26 : vector<1x32xf32>
    %28 = arith.negf %27 : vector<1x32xf32>
    %29 = math.exp %28 : vector<1x32xf32>
    %cst_32 = arith.constant 1.000000e+00 : f32
    %30 = vector.broadcast %cst_32 : f32 to vector<1x32xf32>
    %31 = arith.addf %30, %29 : vector<1x32xf32>
    %32 = arith.divf %30, %31 : vector<1x32xf32>
    %33 = vector.extract_strided_slice %22 {offsets = [0, 32], sizes = [1, 32], strides = [1, 1]} : vector<1x96xf32> to vector<1x32xf32>
    %34 = vector.extract_strided_slice %24 {offsets = [0, 32], sizes = [1, 32], strides = [1, 1]} : vector<1x96xf32> to vector<1x32xf32>
    %35 = arith.addf %33, %34 : vector<1x32xf32>
    %36 = arith.negf %35 : vector<1x32xf32>
    %37 = math.exp %36 : vector<1x32xf32>
    %cst_33 = arith.constant 1.000000e+00 : f32
    %38 = vector.broadcast %cst_33 : f32 to vector<1x32xf32>
    %39 = arith.addf %38, %37 : vector<1x32xf32>
    %40 = arith.divf %38, %39 : vector<1x32xf32>
    %41 = vector.extract_strided_slice %22 {offsets = [0, 64], sizes = [1, 32], strides = [1, 1]} : vector<1x96xf32> to vector<1x32xf32>
    %42 = vector.extract_strided_slice %24 {offsets = [0, 64], sizes = [1, 32], strides = [1, 1]} : vector<1x96xf32> to vector<1x32xf32>
    %43 = arith.mulf %32, %42 : vector<1x32xf32>
    %44 = arith.addf %41, %43 : vector<1x32xf32>
    %45 = math.tanh %44 : vector<1x32xf32>
    %cst_34 = arith.constant 1.000000e+00 : f32
    %46 = vector.broadcast %cst_34 : f32 to vector<1x32xf32>
    %47 = arith.subf %46, %40 : vector<1x32xf32>
    %48 = arith.mulf %47, %45 : vector<1x32xf32>
    %49 = arith.mulf %40, %19 : vector<1x32xf32>
    %50 = arith.addf %48, %49 : vector<1x32xf32>
    %cst_35 = arith.constant dense<0.000000e+00> : vector<1x16xf32>
    %51 = tpu.matmul %50, %4, %cst_35 {dimension_numbers = #tpu.dot_dimension_numbers<[1], [1], [0], [0], [0, 0, 1, 0], [], []>} : vector<1x32xf32>, vector<16x32xf32>, vector<1x16xf32> -> vector<1x16xf32>
    %cst_36 = arith.constant 5.000000e-01 : f32
    %52 = vector.broadcast %cst_36 : f32 to vector<1x16xf32>
    %53 = arith.cmpf ogt, %6, %52 : vector<1x16xf32>
    %cst_37 = arith.constant -1.000000e+09 : f32
    %54 = vector.broadcast %cst_37 : f32 to vector<1x16xf32>
    %55 = arith.select %53, %54, %51 : vector<1x16xi1>, vector<1x16xf32>
    %cst_38 = arith.constant dense<0xFF800000> : vector<1xf32>
    %56 = vector.multi_reduction <maximumf>, %55, %cst_38 [1] : vector<1x16xf32> to vector<1xf32>
    %57 = vector.shape_cast %56 : vector<1xf32> to vector<1x1xf32>
    %58 = vector.broadcast %57 : vector<1x1xf32> to vector<1x16xf32>
    %59 = arith.subf %55, %58 : vector<1x16xf32>
    %60 = math.exp %59 : vector<1x16xf32>
    %cst_39 = arith.constant dense<0.000000e+00> : vector<1xf32>
    %61 = vector.multi_reduction <add>, %60, %cst_39 [1] : vector<1x16xf32> to vector<1xf32>
    %62 = vector.shape_cast %61 : vector<1xf32> to vector<1x1xf32>
    %63 = vector.broadcast %62 : vector<1x1xf32> to vector<1x16xf32>
    %64 = arith.divf %60, %63 : vector<1x16xf32>
    %cst_40 = arith.constant dense<0.000000e+00> : vector<1x128xf32>
    %65 = tpu.matmul %50, %10, %cst_40 {dimension_numbers = #tpu.dot_dimension_numbers<[1], [0], [0], [1], [0, 0, 1, 1], [], []>} : vector<1x32xf32>, vector<32x128xf32>, vector<1x128xf32> -> vector<1x128xf32>
    %cst_41 = arith.constant dense<0xFF800000> : vector<1xf32>
    %66 = vector.multi_reduction <maximumf>, %65, %cst_41 [1] : vector<1x128xf32> to vector<1xf32>
    %67 = vector.shape_cast %66 : vector<1xf32> to vector<1x1xf32>
    %68 = vector.broadcast %67 : vector<1x1xf32> to vector<1x128xf32>
    %69 = arith.subf %65, %68 : vector<1x128xf32>
    %70 = math.exp %69 : vector<1x128xf32>
    %cst_42 = arith.constant dense<0.000000e+00> : vector<1xf32>
    %71 = vector.multi_reduction <add>, %70, %cst_42 [1] : vector<1x128xf32> to vector<1xf32>
    %72 = vector.shape_cast %71 : vector<1xf32> to vector<1x1xf32>
    %73 = vector.broadcast %72 : vector<1x1xf32> to vector<1x128xf32>
    %74 = arith.divf %70, %73 : vector<1x128xf32>
    %cst_43 = arith.constant dense<0.000000e+00> : vector<1x32xf32>
    %75 = tpu.matmul %64, %4, %cst_43 {dimension_numbers = #tpu.dot_dimension_numbers<[1], [0], [0], [1], [0, 0, 1, 1], [], []>} : vector<1x16xf32>, vector<16x32xf32>, vector<1x32xf32> -> vector<1x32xf32>
    %76 = tpu.concatenate %18, %50, %75 in 1 : vector<1x32xf32>, vector<1x32xf32>, vector<1x32xf32> -> vector<1x96xf32>
    %cst_44 = arith.constant dense<0.000000e+00> : vector<1x1xf32>
    %77 = tpu.matmul %76, %15, %cst_44 {dimension_numbers = #tpu.dot_dimension_numbers<[1], [0], [0], [1], [0, 0, 1, 1], [], []>} : vector<1x96xf32>, vector<96x1xf32>, vector<1x1xf32> -> vector<1x1xf32>
    %78 = arith.addf %77, %16 : vector<1x1xf32>
    %79 = arith.negf %78 : vector<1x1xf32>
    %80 = math.exp %79 : vector<1x1xf32>
    %cst_45 = arith.constant 1.000000e+00 : f32
    %81 = vector.broadcast %cst_45 : f32 to vector<1x1xf32>
    %82 = arith.addf %81, %80 : vector<1x1xf32>
    %83 = arith.divf %81, %82 : vector<1x1xf32>
    %cst_46 = arith.constant dense<0.000000e+00> : vector<1x128xf32>
    %84 = tpu.matmul %64, %8, %cst_46 {dimension_numbers = #tpu.dot_dimension_numbers<[1], [0], [0], [1], [0, 0, 1, 1], [], []>} : vector<1x16xf32>, vector<16x128xf32>, vector<1x128xf32> -> vector<1x128xf32>
    %85 = vector.broadcast %83 : vector<1x1xf32> to vector<1x128xf32>
    %86 = arith.mulf %85, %74 : vector<1x128xf32>
    %cst_47 = arith.constant 1.000000e+00 : f32
    %87 = vector.broadcast %cst_47 : f32 to vector<1x1xf32>
    %88 = arith.subf %87, %83 : vector<1x1xf32>
    %89 = vector.broadcast %88 : vector<1x1xf32> to vector<1x128xf32>
    %90 = arith.mulf %89, %84 : vector<1x128xf32>
    %91 = arith.addf %86, %90 : vector<1x128xf32>
    %cst_48 = arith.constant dense<0xFF800000> : vector<1xf32>
    %92 = vector.multi_reduction <maximumf>, %91, %cst_48 [1] : vector<1x128xf32> to vector<1xf32>
    %93 = vector.shape_cast %92 : vector<1xf32> to vector<1x1xf32>
    %94 = vector.broadcast %93 : vector<1x1xf32> to vector<1x128xf32>
    %95 = arith.cmpf oeq, %91, %94 : vector<1x128xf32>
    %c128_i32 = arith.constant 128 : i32
    %96 = vector.broadcast %c128_i32 : i32 to vector<1x128xi32>
    %97 = arith.select %95, %20, %96 : vector<1x128xi1>, vector<1x128xi32>
    %cst_49 = arith.constant dense<2147483647> : vector<1xi32>
    %98 = vector.multi_reduction <minsi>, %97, %cst_49 [1] : vector<1x128xi32> to vector<1xi32>
    %99 = vector.shape_cast %98 : vector<1xi32> to vector<1x1xi32>
    %100 = vector.broadcast %99 : vector<1x1xi32> to vector<1x128xi32>
    %101 = arith.cmpi eq, %20, %100 : vector<1x128xi32>
    %102 = arith.extui %101 : vector<1x128xi1> to vector<1x128xi32>
    %103 = arith.sitofp %102 : vector<1x128xi32> to vector<1x128xf32>
    %cst_50 = arith.constant dense<0.000000e+00> : vector<1x32xf32>
    %104 = tpu.matmul %103, %9, %cst_50 {dimension_numbers = #tpu.dot_dimension_numbers<[1], [0], [0], [1], [0, 0, 1, 1], [], []>} : vector<1x128xf32>, vector<128x32xf32>, vector<1x32xf32> -> vector<1x32xf32>
    %cst_51 = arith.constant dense<0.000000e+00> : vector<1x96xf32>
    %105 = tpu.matmul %104, %11, %cst_51 {dimension_numbers = #tpu.dot_dimension_numbers<[1], [0], [0], [1], [0, 0, 1, 1], [], []>} : vector<1x32xf32>, vector<32x96xf32>, vector<1x96xf32> -> vector<1x96xf32>
    %106 = arith.addf %105, %13 : vector<1x96xf32>
    %cst_52 = arith.constant dense<0.000000e+00> : vector<1x96xf32>
    %107 = tpu.matmul %50, %12, %cst_52 {dimension_numbers = #tpu.dot_dimension_numbers<[1], [0], [0], [1], [0, 0, 1, 1], [], []>} : vector<1x32xf32>, vector<32x96xf32>, vector<1x96xf32> -> vector<1x96xf32>
    %108 = arith.addf %107, %14 : vector<1x96xf32>
    %109 = vector.extract_strided_slice %106 {offsets = [0, 0], sizes = [1, 32], strides = [1, 1]} : vector<1x96xf32> to vector<1x32xf32>
    %110 = vector.extract_strided_slice %108 {offsets = [0, 0], sizes = [1, 32], strides = [1, 1]} : vector<1x96xf32> to vector<1x32xf32>
    %111 = arith.addf %109, %110 : vector<1x32xf32>
    %112 = arith.negf %111 : vector<1x32xf32>
    %113 = math.exp %112 : vector<1x32xf32>
    %cst_53 = arith.constant 1.000000e+00 : f32
    %114 = vector.broadcast %cst_53 : f32 to vector<1x32xf32>
    %115 = arith.addf %114, %113 : vector<1x32xf32>
    %116 = arith.divf %114, %115 : vector<1x32xf32>
    %117 = vector.extract_strided_slice %106 {offsets = [0, 32], sizes = [1, 32], strides = [1, 1]} : vector<1x96xf32> to vector<1x32xf32>
    %118 = vector.extract_strided_slice %108 {offsets = [0, 32], sizes = [1, 32], strides = [1, 1]} : vector<1x96xf32> to vector<1x32xf32>
    %119 = arith.addf %117, %118 : vector<1x32xf32>
    %120 = arith.negf %119 : vector<1x32xf32>
    %121 = math.exp %120 : vector<1x32xf32>
    %cst_54 = arith.constant 1.000000e+00 : f32
    %122 = vector.broadcast %cst_54 : f32 to vector<1x32xf32>
    %123 = arith.addf %122, %121 : vector<1x32xf32>
    %124 = arith.divf %122, %123 : vector<1x32xf32>
    %125 = vector.extract_strided_slice %106 {offsets = [0, 64], sizes = [1, 32], strides = [1, 1]} : vector<1x96xf32> to vector<1x32xf32>
    %126 = vector.extract_strided_slice %108 {offsets = [0, 64], sizes = [1, 32], strides = [1, 1]} : vector<1x96xf32> to vector<1x32xf32>
    %127 = arith.mulf %116, %126 : vector<1x32xf32>
    %128 = arith.addf %125, %127 : vector<1x32xf32>
    %129 = math.tanh %128 : vector<1x32xf32>
    %cst_55 = arith.constant 1.000000e+00 : f32
    %130 = vector.broadcast %cst_55 : f32 to vector<1x32xf32>
    %131 = arith.subf %130, %124 : vector<1x32xf32>
    %132 = arith.mulf %131, %129 : vector<1x32xf32>
    %133 = arith.mulf %124, %50 : vector<1x32xf32>
    %134 = arith.addf %132, %133 : vector<1x32xf32>
    %cst_56 = arith.constant dense<0.000000e+00> : vector<1x16xf32>
    %135 = tpu.matmul %134, %4, %cst_56 {dimension_numbers = #tpu.dot_dimension_numbers<[1], [1], [0], [0], [0, 0, 1, 0], [], []>} : vector<1x32xf32>, vector<16x32xf32>, vector<1x16xf32> -> vector<1x16xf32>
    %cst_57 = arith.constant 5.000000e-01 : f32
    %136 = vector.broadcast %cst_57 : f32 to vector<1x16xf32>
    %137 = arith.cmpf ogt, %6, %136 : vector<1x16xf32>
    %cst_58 = arith.constant -1.000000e+09 : f32
    %138 = vector.broadcast %cst_58 : f32 to vector<1x16xf32>
    %139 = arith.select %137, %138, %135 : vector<1x16xi1>, vector<1x16xf32>
    %cst_59 = arith.constant dense<0xFF800000> : vector<1xf32>
    %140 = vector.multi_reduction <maximumf>, %139, %cst_59 [1] : vector<1x16xf32> to vector<1xf32>
    %141 = vector.shape_cast %140 : vector<1xf32> to vector<1x1xf32>
    %142 = vector.broadcast %141 : vector<1x1xf32> to vector<1x16xf32>
    %143 = arith.subf %139, %142 : vector<1x16xf32>
    %144 = math.exp %143 : vector<1x16xf32>
    %cst_60 = arith.constant dense<0.000000e+00> : vector<1xf32>
    %145 = vector.multi_reduction <add>, %144, %cst_60 [1] : vector<1x16xf32> to vector<1xf32>
    %146 = vector.shape_cast %145 : vector<1xf32> to vector<1x1xf32>
    %147 = vector.broadcast %146 : vector<1x1xf32> to vector<1x16xf32>
    %148 = arith.divf %144, %147 : vector<1x16xf32>
    %cst_61 = arith.constant dense<0.000000e+00> : vector<1x128xf32>
    %149 = tpu.matmul %134, %10, %cst_61 {dimension_numbers = #tpu.dot_dimension_numbers<[1], [0], [0], [1], [0, 0, 1, 1], [], []>} : vector<1x32xf32>, vector<32x128xf32>, vector<1x128xf32> -> vector<1x128xf32>
    %cst_62 = arith.constant dense<0xFF800000> : vector<1xf32>
    %150 = vector.multi_reduction <maximumf>, %149, %cst_62 [1] : vector<1x128xf32> to vector<1xf32>
    %151 = vector.shape_cast %150 : vector<1xf32> to vector<1x1xf32>
    %152 = vector.broadcast %151 : vector<1x1xf32> to vector<1x128xf32>
    %153 = arith.subf %149, %152 : vector<1x128xf32>
    %154 = math.exp %153 : vector<1x128xf32>
    %cst_63 = arith.constant dense<0.000000e+00> : vector<1xf32>
    %155 = vector.multi_reduction <add>, %154, %cst_63 [1] : vector<1x128xf32> to vector<1xf32>
    %156 = vector.shape_cast %155 : vector<1xf32> to vector<1x1xf32>
    %157 = vector.broadcast %156 : vector<1x1xf32> to vector<1x128xf32>
    %158 = arith.divf %154, %157 : vector<1x128xf32>
    %cst_64 = arith.constant dense<0.000000e+00> : vector<1x32xf32>
    %159 = tpu.matmul %148, %4, %cst_64 {dimension_numbers = #tpu.dot_dimension_numbers<[1], [0], [0], [1], [0, 0, 1, 1], [], []>} : vector<1x16xf32>, vector<16x32xf32>, vector<1x32xf32> -> vector<1x32xf32>
    %160 = tpu.concatenate %104, %134, %159 in 1 : vector<1x32xf32>, vector<1x32xf32>, vector<1x32xf32> -> vector<1x96xf32>
    %cst_65 = arith.constant dense<0.000000e+00> : vector<1x1xf32>
    %161 = tpu.matmul %160, %15, %cst_65 {dimension_numbers = #tpu.dot_dimension_numbers<[1], [0], [0], [1], [0, 0, 1, 1], [], []>} : vector<1x96xf32>, vector<96x1xf32>, vector<1x1xf32> -> vector<1x1xf32>
    %162 = arith.addf %161, %16 : vector<1x1xf32>
    %163 = arith.negf %162 : vector<1x1xf32>
    %164 = math.exp %163 : vector<1x1xf32>
    %cst_66 = arith.constant 1.000000e+00 : f32
    %165 = vector.broadcast %cst_66 : f32 to vector<1x1xf32>
    %166 = arith.addf %165, %164 : vector<1x1xf32>
    %167 = arith.divf %165, %166 : vector<1x1xf32>
    %cst_67 = arith.constant dense<0.000000e+00> : vector<1x128xf32>
    %168 = tpu.matmul %148, %8, %cst_67 {dimension_numbers = #tpu.dot_dimension_numbers<[1], [0], [0], [1], [0, 0, 1, 1], [], []>} : vector<1x16xf32>, vector<16x128xf32>, vector<1x128xf32> -> vector<1x128xf32>
    %169 = vector.broadcast %167 : vector<1x1xf32> to vector<1x128xf32>
    %170 = arith.mulf %169, %158 : vector<1x128xf32>
    %cst_68 = arith.constant 1.000000e+00 : f32
    %171 = vector.broadcast %cst_68 : f32 to vector<1x1xf32>
    %172 = arith.subf %171, %167 : vector<1x1xf32>
    %173 = vector.broadcast %172 : vector<1x1xf32> to vector<1x128xf32>
    %174 = arith.mulf %173, %168 : vector<1x128xf32>
    %175 = arith.addf %170, %174 : vector<1x128xf32>
    %cst_69 = arith.constant dense<0xFF800000> : vector<1xf32>
    %176 = vector.multi_reduction <maximumf>, %175, %cst_69 [1] : vector<1x128xf32> to vector<1xf32>
    %177 = vector.shape_cast %176 : vector<1xf32> to vector<1x1xf32>
    %178 = vector.broadcast %177 : vector<1x1xf32> to vector<1x128xf32>
    %179 = arith.cmpf oeq, %175, %178 : vector<1x128xf32>
    %c128_i32_70 = arith.constant 128 : i32
    %180 = vector.broadcast %c128_i32_70 : i32 to vector<1x128xi32>
    %181 = arith.select %179, %20, %180 : vector<1x128xi1>, vector<1x128xi32>
    %cst_71 = arith.constant dense<2147483647> : vector<1xi32>
    %182 = vector.multi_reduction <minsi>, %181, %cst_71 [1] : vector<1x128xi32> to vector<1xi32>
    %183 = vector.shape_cast %182 : vector<1xi32> to vector<1x1xi32>
    %184 = vector.broadcast %183 : vector<1x1xi32> to vector<1x128xi32>
    %185 = arith.cmpi eq, %20, %184 : vector<1x128xi32>
    %186 = arith.extui %185 : vector<1x128xi1> to vector<1x128xi32>
    %187 = arith.sitofp %186 : vector<1x128xi32> to vector<1x128xf32>
    %cst_72 = arith.constant dense<0.000000e+00> : vector<1x32xf32>
    %188 = tpu.matmul %187, %9, %cst_72 {dimension_numbers = #tpu.dot_dimension_numbers<[1], [0], [0], [1], [0, 0, 1, 1], [], []>} : vector<1x128xf32>, vector<128x32xf32>, vector<1x32xf32> -> vector<1x32xf32>
    %cst_73 = arith.constant dense<0.000000e+00> : vector<1x96xf32>
    %189 = tpu.matmul %188, %11, %cst_73 {dimension_numbers = #tpu.dot_dimension_numbers<[1], [0], [0], [1], [0, 0, 1, 1], [], []>} : vector<1x32xf32>, vector<32x96xf32>, vector<1x96xf32> -> vector<1x96xf32>
    %190 = arith.addf %189, %13 : vector<1x96xf32>
    %cst_74 = arith.constant dense<0.000000e+00> : vector<1x96xf32>
    %191 = tpu.matmul %134, %12, %cst_74 {dimension_numbers = #tpu.dot_dimension_numbers<[1], [0], [0], [1], [0, 0, 1, 1], [], []>} : vector<1x32xf32>, vector<32x96xf32>, vector<1x96xf32> -> vector<1x96xf32>
    %192 = arith.addf %191, %14 : vector<1x96xf32>
    %193 = vector.extract_strided_slice %190 {offsets = [0, 0], sizes = [1, 32], strides = [1, 1]} : vector<1x96xf32> to vector<1x32xf32>
    %194 = vector.extract_strided_slice %192 {offsets = [0, 0], sizes = [1, 32], strides = [1, 1]} : vector<1x96xf32> to vector<1x32xf32>
    %195 = arith.addf %193, %194 : vector<1x32xf32>
    %196 = arith.negf %195 : vector<1x32xf32>
    %197 = math.exp %196 : vector<1x32xf32>
    %cst_75 = arith.constant 1.000000e+00 : f32
    %198 = vector.broadcast %cst_75 : f32 to vector<1x32xf32>
    %199 = arith.addf %198, %197 : vector<1x32xf32>
    %200 = arith.divf %198, %199 : vector<1x32xf32>
    %201 = vector.extract_strided_slice %190 {offsets = [0, 32], sizes = [1, 32], strides = [1, 1]} : vector<1x96xf32> to vector<1x32xf32>
    %202 = vector.extract_strided_slice %192 {offsets = [0, 32], sizes = [1, 32], strides = [1, 1]} : vector<1x96xf32> to vector<1x32xf32>
    %203 = arith.addf %201, %202 : vector<1x32xf32>
    %204 = arith.negf %203 : vector<1x32xf32>
    %205 = math.exp %204 : vector<1x32xf32>
    %cst_76 = arith.constant 1.000000e+00 : f32
    %206 = vector.broadcast %cst_76 : f32 to vector<1x32xf32>
    %207 = arith.addf %206, %205 : vector<1x32xf32>
    %208 = arith.divf %206, %207 : vector<1x32xf32>
    %209 = vector.extract_strided_slice %190 {offsets = [0, 64], sizes = [1, 32], strides = [1, 1]} : vector<1x96xf32> to vector<1x32xf32>
    %210 = vector.extract_strided_slice %192 {offsets = [0, 64], sizes = [1, 32], strides = [1, 1]} : vector<1x96xf32> to vector<1x32xf32>
    %211 = arith.mulf %200, %210 : vector<1x32xf32>
    %212 = arith.addf %209, %211 : vector<1x32xf32>
    %213 = math.tanh %212 : vector<1x32xf32>
    %cst_77 = arith.constant 1.000000e+00 : f32
    %214 = vector.broadcast %cst_77 : f32 to vector<1x32xf32>
    %215 = arith.subf %214, %208 : vector<1x32xf32>
    %216 = arith.mulf %215, %213 : vector<1x32xf32>
    %217 = arith.mulf %208, %134 : vector<1x32xf32>
    %218 = arith.addf %216, %217 : vector<1x32xf32>
    %cst_78 = arith.constant dense<0.000000e+00> : vector<1x16xf32>
    %219 = tpu.matmul %218, %4, %cst_78 {dimension_numbers = #tpu.dot_dimension_numbers<[1], [1], [0], [0], [0, 0, 1, 0], [], []>} : vector<1x32xf32>, vector<16x32xf32>, vector<1x16xf32> -> vector<1x16xf32>
    %cst_79 = arith.constant 5.000000e-01 : f32
    %220 = vector.broadcast %cst_79 : f32 to vector<1x16xf32>
    %221 = arith.cmpf ogt, %6, %220 : vector<1x16xf32>
    %cst_80 = arith.constant -1.000000e+09 : f32
    %222 = vector.broadcast %cst_80 : f32 to vector<1x16xf32>
    %223 = arith.select %221, %222, %219 : vector<1x16xi1>, vector<1x16xf32>
    %cst_81 = arith.constant dense<0xFF800000> : vector<1xf32>
    %224 = vector.multi_reduction <maximumf>, %223, %cst_81 [1] : vector<1x16xf32> to vector<1xf32>
    %225 = vector.shape_cast %224 : vector<1xf32> to vector<1x1xf32>
    %226 = vector.broadcast %225 : vector<1x1xf32> to vector<1x16xf32>
    %227 = arith.subf %223, %226 : vector<1x16xf32>
    %228 = math.exp %227 : vector<1x16xf32>
    %cst_82 = arith.constant dense<0.000000e+00> : vector<1xf32>
    %229 = vector.multi_reduction <add>, %228, %cst_82 [1] : vector<1x16xf32> to vector<1xf32>
    %230 = vector.shape_cast %229 : vector<1xf32> to vector<1x1xf32>
    %231 = vector.broadcast %230 : vector<1x1xf32> to vector<1x16xf32>
    %232 = arith.divf %228, %231 : vector<1x16xf32>
    %cst_83 = arith.constant dense<0.000000e+00> : vector<1x128xf32>
    %233 = tpu.matmul %218, %10, %cst_83 {dimension_numbers = #tpu.dot_dimension_numbers<[1], [0], [0], [1], [0, 0, 1, 1], [], []>} : vector<1x32xf32>, vector<32x128xf32>, vector<1x128xf32> -> vector<1x128xf32>
    %cst_84 = arith.constant dense<0xFF800000> : vector<1xf32>
    %234 = vector.multi_reduction <maximumf>, %233, %cst_84 [1] : vector<1x128xf32> to vector<1xf32>
    %235 = vector.shape_cast %234 : vector<1xf32> to vector<1x1xf32>
    %236 = vector.broadcast %235 : vector<1x1xf32> to vector<1x128xf32>
    %237 = arith.subf %233, %236 : vector<1x128xf32>
    %238 = math.exp %237 : vector<1x128xf32>
    %cst_85 = arith.constant dense<0.000000e+00> : vector<1xf32>
    %239 = vector.multi_reduction <add>, %238, %cst_85 [1] : vector<1x128xf32> to vector<1xf32>
    %240 = vector.shape_cast %239 : vector<1xf32> to vector<1x1xf32>
    %241 = vector.broadcast %240 : vector<1x1xf32> to vector<1x128xf32>
    %242 = arith.divf %238, %241 : vector<1x128xf32>
    %cst_86 = arith.constant dense<0.000000e+00> : vector<1x32xf32>
    %243 = tpu.matmul %232, %4, %cst_86 {dimension_numbers = #tpu.dot_dimension_numbers<[1], [0], [0], [1], [0, 0, 1, 1], [], []>} : vector<1x16xf32>, vector<16x32xf32>, vector<1x32xf32> -> vector<1x32xf32>
    %244 = tpu.concatenate %188, %218, %243 in 1 : vector<1x32xf32>, vector<1x32xf32>, vector<1x32xf32> -> vector<1x96xf32>
    %cst_87 = arith.constant dense<0.000000e+00> : vector<1x1xf32>
    %245 = tpu.matmul %244, %15, %cst_87 {dimension_numbers = #tpu.dot_dimension_numbers<[1], [0], [0], [1], [0, 0, 1, 1], [], []>} : vector<1x96xf32>, vector<96x1xf32>, vector<1x1xf32> -> vector<1x1xf32>
    %246 = arith.addf %245, %16 : vector<1x1xf32>
    %247 = arith.negf %246 : vector<1x1xf32>
    %248 = math.exp %247 : vector<1x1xf32>
    %cst_88 = arith.constant 1.000000e+00 : f32
    %249 = vector.broadcast %cst_88 : f32 to vector<1x1xf32>
    %250 = arith.addf %249, %248 : vector<1x1xf32>
    %251 = arith.divf %249, %250 : vector<1x1xf32>
    %cst_89 = arith.constant dense<0.000000e+00> : vector<1x128xf32>
    %252 = tpu.matmul %232, %8, %cst_89 {dimension_numbers = #tpu.dot_dimension_numbers<[1], [0], [0], [1], [0, 0, 1, 1], [], []>} : vector<1x16xf32>, vector<16x128xf32>, vector<1x128xf32> -> vector<1x128xf32>
    %253 = vector.broadcast %251 : vector<1x1xf32> to vector<1x128xf32>
    %254 = arith.mulf %253, %242 : vector<1x128xf32>
    %cst_90 = arith.constant 1.000000e+00 : f32
    %255 = vector.broadcast %cst_90 : f32 to vector<1x1xf32>
    %256 = arith.subf %255, %251 : vector<1x1xf32>
    %257 = vector.broadcast %256 : vector<1x1xf32> to vector<1x128xf32>
    %258 = arith.mulf %257, %252 : vector<1x128xf32>
    %259 = arith.addf %254, %258 : vector<1x128xf32>
    %c0_91 = arith.constant 0 : index
    %c0_92 = arith.constant 0 : index
    %260 = vector.load %arg16[%c0_91, %c0_92] : memref<1x32xf32, #tpu.memory_space<vmem>>, vector<1x32xf32>
    tpu.vector_store %arg16[%c0_91, %c0_92], %218 {strides = array<i32>} : memref<1x32xf32, #tpu.memory_space<vmem>>, vector<1x32xf32>,
    %261 = tpu.concatenate %91, %175, %259 in 0 : vector<1x128xf32>, vector<1x128xf32>, vector<1x128xf32> -> vector<3x128xf32>
    %262 = vector.shape_cast %261 : vector<3x128xf32> to vector<1x1x3x128xf32>
    %c0_93 = arith.constant 0 : index
    %c0_94 = arith.constant 0 : index
    %c0_95 = arith.constant 0 : index
    %c0_96 = arith.constant 0 : index
    %263 = vector.load %arg15[%c0_93, %c0_94, %c0_95, %c0_96] : memref<1x1x3x128xf32, #tpu.memory_space<vmem>>, vector<1x1x3x128xf32>
    tpu.vector_store %arg15[%c0_93, %c0_94, %c0_95, %c0_96], %262 {strides = array<i32>} : memref<1x1x3x128xf32, #tpu.memory_space<vmem>>, vector<1x1x3x128xf32>,
    return
  }
  func.func @transform_0(%arg0: i32, %arg1: i32) -> (i32, i32, i32, i32) {
    %c0_i32 = arith.constant 0 : i32
    %c0_i32_0 = arith.constant 0 : i32
    %c0_i32_1 = arith.constant 0 : i32
    return %arg0, %arg1, %c0_i32, %c0_i32_0 : i32, i32, i32, i32
  }
  func.func @transform_1(%arg0: i32, %arg1: i32) -> (i32, i32, i32) {
    %c0_i32 = arith.constant 0 : i32
    %c0_i32_0 = arith.constant 0 : i32
    %c0_i32_1 = arith.constant 0 : i32
    return %arg0, %c0_i32, %c0_i32_0 : i32, i32, i32
  }
  func.func @transform_2(%arg0: i32, %arg1: i32) -> (i32, i32, i32) {
    %c0_i32 = arith.constant 0 : i32
    %c0_i32_0 = arith.constant 0 : i32
    %c0_i32_1 = arith.constant 0 : i32
    return %arg0, %c0_i32, %c0_i32_0 : i32, i32, i32
  }
  func.func @transform_3(%arg0: i32, %arg1: i32) -> (i32, i32, i32) {
    %c0_i32 = arith.constant 0 : i32
    %c0_i32_0 = arith.constant 0 : i32
    %c0_i32_1 = arith.constant 0 : i32
    return %arg0, %c0_i32, %c0_i32_0 : i32, i32, i32
  }
  func.func @transform_4(%arg0: i32, %arg1: i32) -> (i32, i32, i32) {
    %c0_i32 = arith.constant 0 : i32
    %c0_i32_0 = arith.constant 0 : i32
    %c0_i32_1 = arith.constant 0 : i32
    return %arg0, %c0_i32, %c0_i32_0 : i32, i32, i32
  }
  func.func @transform_5(%arg0: i32, %arg1: i32) -> (i32, i32) {
    %c0_i32 = arith.constant 0 : i32
    %c0_i32_0 = arith.constant 0 : i32
    %c0_i32_1 = arith.constant 0 : i32
    return %c0_i32, %c0_i32_0 : i32, i32
  }
  func.func @transform_6(%arg0: i32, %arg1: i32) -> (i32, i32) {
    %c0_i32 = arith.constant 0 : i32
    %c0_i32_0 = arith.constant 0 : i32
    %c0_i32_1 = arith.constant 0 : i32
    return %c0_i32, %c0_i32_0 : i32, i32
  }
  func.func @transform_7(%arg0: i32, %arg1: i32) -> (i32, i32) {
    %c0_i32 = arith.constant 0 : i32
    %c0_i32_0 = arith.constant 0 : i32
    %c0_i32_1 = arith.constant 0 : i32
    return %c0_i32, %c0_i32_0 : i32, i32
  }
  func.func @transform_8(%arg0: i32, %arg1: i32) -> (i32, i32) {
    %c0_i32 = arith.constant 0 : i32
    %c0_i32_0 = arith.constant 0 : i32
    %c0_i32_1 = arith.constant 0 : i32
    return %c0_i32, %c0_i32_0 : i32, i32
  }
  func.func @transform_9(%arg0: i32, %arg1: i32) -> (i32, i32) {
    %c0_i32 = arith.constant 0 : i32
    %c0_i32_0 = arith.constant 0 : i32
    %c0_i32_1 = arith.constant 0 : i32
    return %c0_i32, %c0_i32_0 : i32, i32
  }
  func.func @transform_10(%arg0: i32, %arg1: i32) -> (i32, i32) {
    %c0_i32 = arith.constant 0 : i32
    %c0_i32_0 = arith.constant 0 : i32
    %c0_i32_1 = arith.constant 0 : i32
    return %c0_i32, %c0_i32_0 : i32, i32
  }
  func.func @transform_11(%arg0: i32, %arg1: i32) -> (i32, i32) {
    %c0_i32 = arith.constant 0 : i32
    %c0_i32_0 = arith.constant 0 : i32
    %c0_i32_1 = arith.constant 0 : i32
    return %c0_i32, %c0_i32_0 : i32, i32
  }
  func.func @transform_12(%arg0: i32, %arg1: i32) -> (i32, i32) {
    %c0_i32 = arith.constant 0 : i32
    %c0_i32_0 = arith.constant 0 : i32
    %c0_i32_1 = arith.constant 0 : i32
    return %c0_i32, %c0_i32_0 : i32, i32
  }
  func.func @transform_13(%arg0: i32, %arg1: i32) -> (i32, i32, i32, i32) {
    %c0_i32 = arith.constant 0 : i32
    %c0_i32_0 = arith.constant 0 : i32
    %c0_i32_1 = arith.constant 0 : i32
    return %arg0, %arg1, %c0_i32, %c0_i32_0 : i32, i32, i32, i32
  }
}

</mosaic_0001>

<llo_original>
// kernel: som_dst_forward.2
$region0: #{som_dst_forward.2}
  #allocation0 [shape = 'u32[]', space=smem, size = 0x4, offset = 0x4, fixed_abs, tag = 'smem constant byte address 0x4 - core index']
  #allocation1 [shape = 'u32[144,128]{1,0:T(1,128)}', space=vmem, size = 0x12000, scoped, tag = 'internal scratch']
  %s0 = inlined_call_operand.vmem [shape: f32[2,16,32], index: 0, kind: input, shape index: {}]
  %s1 = inlined_call_operand.vmem [shape: f32[2,1,16], index: 1, kind: input, shape index: {}]
  %s2 = inlined_call_operand.vmem [shape: f32[32,96], index: 2, kind: input, shape index: {}]
  %s3 = inlined_call_operand.vmem [shape: f32[1,96], index: 3, kind: input, shape index: {}]
  %s4 = inlined_call_operand.vmem [shape: f32[32,32], index: 4, kind: input, shape index: {}]
  %s5 = inlined_call_operand.vmem [shape: f32[1,32], index: 5, kind: input, shape index: {}]
  %s6 = inlined_call_operand.vmem [shape: f32[1,32], index: 6, kind: input, shape index: {}]
  %s7 = inlined_call_operand.vmem [shape: f32[1,32], index: 7, kind: input, shape index: {}]
  %s8 = inlined_call_operand.vmem [shape: f32[32,64], index: 8, kind: input, shape index: {}]
  %s9 = inlined_call_operand.vmem [shape: f32[1,64], index: 9, kind: input, shape index: {}]
  %s10 = inlined_call_operand.vmem [shape: f32[64,32], index: 10, kind: input, shape index: {}]
  %s11 = inlined_call_operand.vmem [shape: f32[1,32], index: 11, kind: input, shape index: {}]
  %s12 = inlined_call_operand.vmem [shape: f32[1,32], index: 12, kind: input, shape index: {}]
  %s13 = inlined_call_operand.vmem [shape: f32[1,32], index: 13, kind: input, shape index: {}]
  %s14 = inlined_call_operand.vmem [shape: f32[32,32], index: 14, kind: input, shape index: {}]
  %s15 = inlined_call_operand.vmem [shape: f32[1,32], index: 15, kind: input, shape index: {}]
  %s16 = inlined_call_operand.vmem [shape: f32[2,16,32], index: 16, kind: output, shape index: {0}]
  %s17 = inlined_call_operand.vmem [shape: f32[2,1,32], index: 17, kind: output, shape index: {1}]
  %18 = xla_tuple %s16, %s17
  %s19 = sld [smem:[#allocation0]]
  $region105: #{som_dst_forward.2} parent=0
    _
  %s21 = ssub.s32 1, %s19
  %s22 = scalar_select 0, %s21, %s19
  loop: start=0, step=1, limit=4
  $region2: #{som_dst_forward.2} parent=0 // loop_pre_header
    _
  $region3: #{som_dst_forward.2} parent=0 // loop_header
    %s24 = sphi 0, %s28
    %p25 = scmp.ge.s32.totalorder %s24, 4
    %s34 = sphi 0, %s36
    %s37 = sphi 0, %s34
    %s38 = sphi 0, %s37
    %s54 = sphi 0, %s38
    %s60 = sphi 0, %s62
    %s63 = sphi 0, %s60
    %s64 = sphi 0, %s63
    %s80 = sphi 0, %s64
    %s84 = sphi 0, %s84
    %s86 = sphi 0, %s84
    %s87 = sphi 0, %s86
    %s101 = sphi 0, %s87
    %s105 = sphi 0, %s105
    %s107 = sphi 0, %s105
    %s108 = sphi 0, %s107
    %s122 = sphi 0, %s108
    %s126 = sphi 0, %s126
    %s128 = sphi 0, %s126
    %s129 = sphi 0, %s128
    %s143 = sphi 0, %s129
    %s147 = sphi 0, %s147
    %s149 = sphi 0, %s147
    %s150 = sphi 0, %s149
    %s164 = sphi 0, %s150
    %s168 = sphi 0, %s168
    %s170 = sphi 0, %s168
    %s171 = sphi 0, %s170
    %s185 = sphi 0, %s171
    %s189 = sphi 0, %s189
    %s191 = sphi 0, %s189
    %s192 = sphi 0, %s191
    %s206 = sphi 0, %s192
    %s210 = sphi 0, %s210
    %s212 = sphi 0, %s210
    %s213 = sphi 0, %s212
    %s227 = sphi 0, %s213
    %s231 = sphi 0, %s231
    %s233 = sphi 0, %s231
    %s234 = sphi 0, %s233
    %s248 = sphi 0, %s234
    %s252 = sphi 0, %s252
    %s254 = sphi 0, %s252
    %s255 = sphi 0, %s254
    %s269 = sphi 0, %s255
    %s273 = sphi 0, %s273
    %s275 = sphi 0, %s273
    %s276 = sphi 0, %s275
    %s290 = sphi 0, %s276
    %s294 = sphi 0, %s294
    %s296 = sphi 0, %s294
    %s297 = sphi 0, %s296
    %s311 = sphi 0, %s297
    %s315 = sphi 0, %s315
    %s317 = sphi 0, %s315
    %s318 = sphi 0, %s317
    %s332 = sphi 0, %s318
    %s336 = sphi 0, %s336
    %s338 = sphi 0, %s336
    %s339 = sphi 0, %s338
    %s353 = sphi 0, %s339
    %s357 = sphi 0, %s357
    %s359 = sphi 0, %s357
    %s360 = sphi 0, %s359
    %s374 = sphi 0, %s360
    %s380 = sphi 0, %s382
    %s383 = sphi 0, %s380
    %s384 = sphi 0, %s383
    %s400 = sphi 0, %s384
    %s406 = sphi 0, %s408
    %s409 = sphi 0, %s406
    %s410 = sphi 0, %s409
    %s426 = sphi 0, %s410
  $region4: #{som_dst_forward.2} parent=0 // loop_header_branch
    %27 = sbr.rel (%p25) target = $region8
  $region5: #{som_dst_forward.2} parent=0 // loop_body
    %s29 = ssub.s32 %s24, 1
    %s30 = ssub.s32 %s24, 2
    %s31 = sadd.s32 %s24, 1
    %s32 = ssub.s32 %s24, %s31
    %p33 = scmp.eq.s32.totalorder %s32, 0
    %s35 = sadd.s32 %s34, 1
    %s36 = scalar_select %p33, %s34, %s35
    %p39 = pneg %p33
    %p40 = scmp.eq.s32.totalorder %s24, 1
    %p41 = por %p39, %p40
    %p42 = scmp.ne.s32.totalorder %s34, %s37
    %p43 = scmp.eq.s32.totalorder %s24, 0
    %p44 = por %p42, %p43
    %p45 = scmp.ne.s32.totalorder %s34, %s37
    %p46 = scmp.eq.s32.totalorder %s29, 1
    %p47 = por %p45, %p46
    %p48 = scmp.ne.s32.totalorder %s37, %s38
    %p49 = scmp.eq.s32.totalorder %s29, 0
    %p50 = por %p48, %p49
    %p51 = scmp.ne.s32.totalorder %s37, %s38
    %p52 = scmp.eq.s32.totalorder %s30, 1
    %p53 = por %p51, %p52
    %p55 = scmp.ne.s32.totalorder %s38, %s54
    %p56 = scmp.eq.s32.totalorder %s30, 0
    %p57 = por %p55, %p56
    %s58 = ssub.s32 %s24, %s31
    %p59 = scmp.eq.s32.totalorder %s58, 0
    %s61 = sadd.s32 %s60, 1
    %s62 = scalar_select %p59, %s60, %s61
    %p65 = pneg %p59
    %p66 = scmp.eq.s32.totalorder %s24, 1
    %p67 = por %p65, %p66
    %p68 = scmp.ne.s32.totalorder %s60, %s63
    %p69 = scmp.eq.s32.totalorder %s24, 0
    %p70 = por %p68, %p69
    %p71 = scmp.ne.s32.totalorder %s60, %s63
    %p72 = scmp.eq.s32.totalorder %s29, 1
    %p73 = por %p71, %p72
    %p74 = scmp.ne.s32.totalorder %s63, %s64
    %p75 = scmp.eq.s32.totalorder %s29, 0
    %p76 = por %p74, %p75
    %p77 = scmp.ne.s32.totalorder %s63, %s64
    %p78 = scmp.eq.s32.totalorder %s30, 1
    %p79 = por %p77, %p78
    %p81 = scmp.ne.s32.totalorder %s64, %s80
    %p82 = scmp.eq.s32.totalorder %s30, 0
    %p83 = por %p81, %p82
    %s85 = sadd.s32 %s84, 1
    %p88 = scmp.eq.s32.totalorder %s24, 1
    %p89 = scmp.ne.s32.totalorder %s84, %s86
    %p90 = scmp.eq.s32.totalorder %s24, 0
    %p91 = por %p89, %p90
    %p92 = scmp.ne.s32.totalorder %s84, %s86
    %p93 = scmp.eq.s32.totalorder %s29, 1
    %p94 = por %p92, %p93
    %p95 = scmp.ne.s32.totalorder %s86, %s87
    %p96 = scmp.eq.s32.totalorder %s29, 0
    %p97 = por %p95, %p96
    %p98 = scmp.ne.s32.totalorder %s86, %s87
    %p99 = scmp.eq.s32.totalorder %s30, 1
    %p100 = por %p98, %p99
    %p102 = scmp.ne.s32.totalorder %s87, %s101
    %p103 = scmp.eq.s32.totalorder %s30, 0
    %p104 = por %p102, %p103
    %s106 = sadd.s32 %s105, 1
    %p109 = scmp.eq.s32.totalorder %s24, 1
    %p110 = scmp.ne.s32.totalorder %s105, %s107
    %p111 = scmp.eq.s32.totalorder %s24, 0
    %p112 = por %p110, %p111
    %p113 = scmp.ne.s32.totalorder %s105, %s107
    %p114 = scmp.eq.s32.totalorder %s29, 1
    %p115 = por %p113, %p114
    %p116 = scmp.ne.s32.totalorder %s107, %s108
    %p117 = scmp.eq.s32.totalorder %s29, 0
    %p118 = por %p116, %p117
    %p119 = scmp.ne.s32.totalorder %s107, %s108
    %p120 = scmp.eq.s32.totalorder %s30, 1
    %p121 = por %p119, %p120
    %p123 = scmp.ne.s32.totalorder %s108, %s122
    %p124 = scmp.eq.s32.totalorder %s30, 0
    %p125 = por %p123, %p124
    %s127 = sadd.s32 %s126, 1
    %p130 = scmp.eq.s32.totalorder %s24, 1
    %p131 = scmp.ne.s32.totalorder %s126, %s128
    %p132 = scmp.eq.s32.totalorder %s24, 0
    %p133 = por %p131, %p132
    %p134 = scmp.ne.s32.totalorder %s126, %s128
    %p135 = scmp.eq.s32.totalorder %s29, 1
    %p136 = por %p134, %p135
    %p137 = scmp.ne.s32.totalorder %s128, %s129
    %p138 = scmp.eq.s32.totalorder %s29, 0
    %p139 = por %p137, %p138
    %p140 = scmp.ne.s32.totalorder %s128, %s129
    %p141 = scmp.eq.s32.totalorder %s30, 1
    %p142 = por %p140, %p141
    %p144 = scmp.ne.s32.totalorder %s129, %s143
    %p145 = scmp.eq.s32.totalorder %s30, 0
    %p146 = por %p144, %p145
    %s148 = sadd.s32 %s147, 1
    %p151 = scmp.eq.s32.totalorder %s24, 1
    %p152 = scmp.ne.s32.totalorder %s147, %s149
    %p153 = scmp.eq.s32.totalorder %s24, 0
    %p154 = por %p152, %p153
    %p155 = scmp.ne.s32.totalorder %s147, %s149
    %p156 = scmp.eq.s32.totalorder %s29, 1
    %p157 = por %p155, %p156
    %p158 = scmp.ne.s32.totalorder %s149, %s150
    %p159 = scmp.eq.s32.totalorder %s29, 0
    %p160 = por %p158, %p159
    %p161 = scmp.ne.s32.totalorder %s149, %s150
    %p162 = scmp.eq.s32.totalorder %s30, 1
    %p163 = por %p161, %p162
    %p165 = scmp.ne.s32.totalorder %s150, %s164
    %p166 = scmp.eq.s32.totalorder %s30, 0
    %p167 = por %p165, %p166
    %s169 = sadd.s32 %s168, 1
    %p172 = scmp.eq.s32.totalorder %s24, 1
    %p173 = scmp.ne.s32.totalorder %s168, %s170
    %p174 = scmp.eq.s32.totalorder %s24, 0
    %p175 = por %p173, %p174
    %p176 = scmp.ne.s32.totalorder %s168, %s170
    %p177 = scmp.eq.s32.totalorder %s29, 1
    %p178 = por %p176, %p177
    %p179 = scmp.ne.s32.totalorder %s170, %s171
    %p180 = scmp.eq.s32.totalorder %s29, 0
    %p181 = por %p179, %p180
    %p182 = scmp.ne.s32.totalorder %s170, %s171
    %p183 = scmp.eq.s32.totalorder %s30, 1
    %p184 = por %p182, %p183
    %p186 = scmp.ne.s32.totalorder %s171, %s185
    %p187 = scmp.eq.s32.totalorder %s30, 0
    %p188 = por %p186, %p187
    %s190 = sadd.s32 %s189, 1
    %p193 = scmp.eq.s32.totalorder %s24, 1
    %p194 = scmp.ne.s32.totalorder %s189, %s191
    %p195 = scmp.eq.s32.totalorder %s24, 0
    %p196 = por %p194, %p195
    %p197 = scmp.ne.s32.totalorder %s189, %s191
    %p198 = scmp.eq.s32.totalorder %s29, 1
    %p199 = por %p197, %p198
    %p200 = scmp.ne.s32.totalorder %s191, %s192
    %p201 = scmp.eq.s32.totalorder %s29, 0
    %p202 = por %p200, %p201
    %p203 = scmp.ne.s32.totalorder %s191, %s192
    %p204 = scmp.eq.s32.totalorder %s30, 1
    %p205 = por %p203, %p204
    %p207 = scmp.ne.s32.totalorder %s192, %s206
    %p208 = scmp.eq.s32.totalorder %s30, 0
    %p209 = por %p207, %p208
    %s211 = sadd.s32 %s210, 1
    %p214 = scmp.eq.s32.totalorder %s24, 1
    %p215 = scmp.ne.s32.totalorder %s210, %s212
    %p216 = scmp.eq.s32.totalorder %s24, 0
    %p217 = por %p215, %p216
    %p218 = scmp.ne.s32.totalorder %s210, %s212
    %p219 = scmp.eq.s32.totalorder %s29, 1
    %p220 = por %p218, %p219
    %p221 = scmp.ne.s32.totalorder %s212, %s213
    %p222 = scmp.eq.s32.totalorder %s29, 0
    %p223 = por %p221, %p222
    %p224 = scmp.ne.s32.totalorder %s212, %s213
    %p225 = scmp.eq.s32.totalorder %s30, 1
    %p226 = por %p224, %p225
    %p228 = scmp.ne.s32.totalorder %s213, %s227
    %p229 = scmp.eq.s32.totalorder %s30, 0
    %p230 = por %p228, %p229
    %s232 = sadd.s32 %s231, 1
    %p235 = scmp.eq.s32.totalorder %s24, 1
    %p236 = scmp.ne.s32.totalorder %s231, %s233
    %p237 = scmp.eq.s32.totalorder %s24, 0
    %p238 = por %p236, %p237
    %p239 = scmp.ne.s32.totalorder %s231, %s233
    %p240 = scmp.eq.s32.totalorder %s29, 1
    %p241 = por %p239, %p240
    %p242 = scmp.ne.s32.totalorder %s233, %s234
    %p243 = scmp.eq.s32.totalorder %s29, 0
    %p244 = por %p242, %p243
    %p245 = scmp.ne.s32.totalorder %s233, %s234
    %p246 = scmp.eq.s32.totalorder %s30, 1
    %p247 = por %p245, %p246
    %p249 = scmp.ne.s32.totalorder %s234, %s248
    %p250 = scmp.eq.s32.totalorder %s30, 0
    %p251 = por %p249, %p250
    %s253 = sadd.s32 %s252, 1
    %p256 = scmp.eq.s32.totalorder %s24, 1
    %p257 = scmp.ne.s32.totalorder %s252, %s254
    %p258 = scmp.eq.s32.totalorder %s24, 0
    %p259 = por %p257, %p258
    %p260 = scmp.ne.s32.totalorder %s252, %s254
    %p261 = scmp.eq.s32.totalorder %s29, 1
    %p262 = por %p260, %p261
    %p263 = scmp.ne.s32.totalorder %s254, %s255
    %p264 = scmp.eq.s32.totalorder %s29, 0
    %p265 = por %p263, %p264
    %p266 = scmp.ne.s32.totalorder %s254, %s255
    %p267 = scmp.eq.s32.totalorder %s30, 1
    %p268 = por %p266, %p267
    %p270 = scmp.ne.s32.totalorder %s255, %s269
    %p271 = scmp.eq.s32.totalorder %s30, 0
    %p272 = por %p270, %p271
    %s274 = sadd.s32 %s273, 1
    %p277 = scmp.eq.s32.totalorder %s24, 1
    %p278 = scmp.ne.s32.totalorder %s273, %s275
    %p279 = scmp.eq.s32.totalorder %s24, 0
    %p280 = por %p278, %p279
    %p281 = scmp.ne.s32.totalorder %s273, %s275
    %p282 = scmp.eq.s32.totalorder %s29, 1
    %p283 = por %p281, %p282
    %p284 = scmp.ne.s32.totalorder %s275, %s276
    %p285 = scmp.eq.s32.totalorder %s29, 0
    %p286 = por %p284, %p285
    %p287 = scmp.ne.s32.totalorder %s275, %s276
    %p288 = scmp.eq.s32.totalorder %s30, 1
    %p289 = por %p287, %p288
    %p291 = scmp.ne.s32.totalorder %s276, %s290
    %p292 = scmp.eq.s32.totalorder %s30, 0
    %p293 = por %p291, %p292
    %s295 = sadd.s32 %s294, 1
    %p298 = scmp.eq.s32.totalorder %s24, 1
    %p299 = scmp.ne.s32.totalorder %s294, %s296
    %p300 = scmp.eq.s32.totalorder %s24, 0
    %p301 = por %p299, %p300
    %p302 = scmp.ne.s32.totalorder %s294, %s296
    %p303 = scmp.eq.s32.totalorder %s29, 1
    %p304 = por %p302, %p303
    %p305 = scmp.ne.s32.totalorder %s296, %s297
    %p306 = scmp.eq.s32.totalorder %s29, 0
    %p307 = por %p305, %p306
    %p308 = scmp.ne.s32.totalorder %s296, %s297
    %p309 = scmp.eq.s32.totalorder %s30, 1
    %p310 = por %p308, %p309
    %p312 = scmp.ne.s32.totalorder %s297, %s311
    %p313 = scmp.eq.s32.totalorder %s30, 0
    %p314 = por %p312, %p313
    %s316 = sadd.s32 %s315, 1
    %p319 = scmp.eq.s32.totalorder %s24, 1
    %p320 = scmp.ne.s32.totalorder %s315, %s317
    %p321 = scmp.eq.s32.totalorder %s24, 0
    %p322 = por %p320, %p321
    %p323 = scmp.ne.s32.totalorder %s315, %s317
    %p324 = scmp.eq.s32.totalorder %s29, 1
    %p325 = por %p323, %p324
    %p326 = scmp.ne.s32.totalorder %s317, %s318
    %p327 = scmp.eq.s32.totalorder %s29, 0
    %p328 = por %p326, %p327
    %p329 = scmp.ne.s32.totalorder %s317, %s318
    %p330 = scmp.eq.s32.totalorder %s30, 1
    %p331 = por %p329, %p330
    %p333 = scmp.ne.s32.totalorder %s318, %s332
    %p334 = scmp.eq.s32.totalorder %s30, 0
    %p335 = por %p333, %p334
    %s337 = sadd.s32 %s336, 1
    %p340 = scmp.eq.s32.totalorder %s24, 1
    %p341 = scmp.ne.s32.totalorder %s336, %s338
    %p342 = scmp.eq.s32.totalorder %s24, 0
    %p343 = por %p341, %p342
    %p344 = scmp.ne.s32.totalorder %s336, %s338
    %p345 = scmp.eq.s32.totalorder %s29, 1
    %p346 = por %p344, %p345
    %p347 = scmp.ne.s32.totalorder %s338, %s339
    %p348 = scmp.eq.s32.totalorder %s29, 0
    %p349 = por %p347, %p348
    %p350 = scmp.ne.s32.totalorder %s338, %s339
    %p351 = scmp.eq.s32.totalorder %s30, 1
    %p352 = por %p350, %p351
    %p354 = scmp.ne.s32.totalorder %s339, %s353
    %p355 = scmp.eq.s32.totalorder %s30, 0
    %p356 = por %p354, %p355
    %s358 = sadd.s32 %s357, 1
    %p361 = scmp.eq.s32.totalorder %s24, 1
    %p362 = scmp.ne.s32.totalorder %s357, %s359
    %p363 = scmp.eq.s32.totalorder %s24, 0
    %p364 = por %p362, %p363
    %p365 = scmp.ne.s32.totalorder %s357, %s359
    %p366 = scmp.eq.s32.totalorder %s29, 1
    %p367 = por %p365, %p366
    %p368 = scmp.ne.s32.totalorder %s359, %s360
    %p369 = scmp.eq.s32.totalorder %s29, 0
    %p370 = por %p368, %p369
    %p371 = scmp.ne.s32.totalorder %s359, %s360
    %p372 = scmp.eq.s32.totalorder %s30, 1
    %p373 = por %p371, %p372
    %p375 = scmp.ne.s32.totalorder %s360, %s374
    %p376 = scmp.eq.s32.totalorder %s30, 0
    %p377 = por %p375, %p376
    %s378 = ssub.s32 %s24, %s31
    %p379 = scmp.eq.s32.totalorder %s378, 0
    %s381 = sadd.s32 %s380, 1
    %s382 = scalar_select %p379, %s380, %s381
    %p385 = pneg %p379
    %p386 = scmp.eq.s32.totalorder %s24, 1
    %p387 = por %p385, %p386
    %p388 = scmp.ne.s32.totalorder %s380, %s383
    %p389 = scmp.eq.s32.totalorder %s24, 0
    %p390 = por %p388, %p389
    %p391 = scmp.ne.s32.totalorder %s380, %s383
    %p392 = scmp.eq.s32.totalorder %s29, 1
    %p393 = por %p391, %p392
    %p394 = scmp.ne.s32.totalorder %s383, %s384
    %p395 = scmp.eq.s32.totalorder %s29, 0
    %p396 = por %p394, %p395
    %p397 = scmp.ne.s32.totalorder %s383, %s384
    %p398 = scmp.eq.s32.totalorder %s30, 1
    %p399 = por %p397, %p398
    %p401 = scmp.ne.s32.totalorder %s384, %s400
    %p402 = scmp.eq.s32.totalorder %s30, 0
    %p403 = por %p401, %p402
    %s404 = ssub.s32 %s24, %s31
    %p405 = scmp.eq.s32.totalorder %s404, 0
    %s407 = sadd.s32 %s406, 1
    %s408 = scalar_select %p405, %s406, %s407
    %p411 = pneg %p405
    %p412 = scmp.eq.s32.totalorder %s24, 1
    %p413 = por %p411, %p412
    %p414 = scmp.ne.s32.totalorder %s406, %s409
    %p415 = scmp.eq.s32.totalorder %s24, 0
    %p416 = por %p414, %p415
    %p417 = scmp.ne.s32.totalorder %s406, %s409
    %p418 = scmp.eq.s32.totalorder %s29, 1
    %p419 = por %p417, %p418
    %p420 = scmp.ne.s32.totalorder %s409, %s410
    %p421 = scmp.eq.s32.totalorder %s29, 0
    %p422 = por %p420, %p421
    %p423 = scmp.ne.s32.totalorder %s409, %s410
    %p424 = scmp.eq.s32.totalorder %s30, 1
    %p425 = por %p423, %p424
    %p427 = scmp.ne.s32.totalorder %s410, %s426
    %p428 = scmp.eq.s32.totalorder %s30, 0
    %p429 = por %p427, %p428
    %p430 = scmp.le.s32.totalorder 1, %s24
    %p431 = scmp.lt.s32.totalorder %s24, 3
    %p432 = pnand %p430, %p431
    %p433 = pneg %p432
    // Predicated region
    $region9: #{som_dst_forward.2} parent=5 // pred_check
      _
    $region10: #{som_dst_forward.2} parent=5 // pred_check_branch
      %435 = sbr.rel (%p432) target = $region12
    $region11: #{som_dst_forward.2} parent=5 // pred_region
      %s436 = ssub.s32 %s24, 1
      // Predicated region
      $region13: #{som_dst_forward.2} parent=11 // pred_check
        %p437 = pneg %p97
      $region14: #{som_dst_forward.2} parent=11 // pred_check_branch
        %439 = sbr.rel (%p437) target = $region16
      $region15: #{som_dst_forward.2} parent=11 // pred_region
        _
      $region16: #{som_dst_forward.2} parent=11 // pred_fallthru
        _
      // Predicated region
      $region17: #{som_dst_forward.2} parent=11 // pred_check
        %p440 = pneg %p118
      $region18: #{som_dst_forward.2} parent=11 // pred_check_branch
        %442 = sbr.rel (%p440) target = $region20
      $region19: #{som_dst_forward.2} parent=11 // pred_region
        _
      $region20: #{som_dst_forward.2} parent=11 // pred_fallthru
        _
      // Predicated region
      $region21: #{som_dst_forward.2} parent=11 // pred_check
        %p443 = pneg %p139
      $region22: #{som_dst_forward.2} parent=11 // pred_check_branch
        %445 = sbr.rel (%p443) target = $region24
      $region23: #{som_dst_forward.2} parent=11 // pred_region
        _
      $region24: #{som_dst_forward.2} parent=11 // pred_fallthru
        _
      // Predicated region
      $region25: #{som_dst_forward.2} parent=11 // pred_check
        %p446 = pneg %p160
      $region26: #{som_dst_forward.2} parent=11 // pred_check_branch
        %448 = sbr.rel (%p446) target = $region28
      $region27: #{som_dst_forward.2} parent=11 // pred_region
        _
      $region28: #{som_dst_forward.2} parent=11 // pred_fallthru
        _
      // Predicated region
      $region29: #{som_dst_forward.2} parent=11 // pred_check
        %p449 = pneg %p181
      $region30: #{som_dst_forward.2} parent=11 // pred_check_branch
        %451 = sbr.rel (%p449) target = $region32
      $region31: #{som_dst_forward.2} parent=11 // pred_region
        _
      $region32: #{som_dst_forward.2} parent=11 // pred_fallthru
        _
      // Predicated region
      $region33: #{som_dst_forward.2} parent=11 // pred_check
        %p452 = pneg %p202
      $region34: #{som_dst_forward.2} parent=11 // pred_check_branch
        %454 = sbr.rel (%p452) target = $region36
      $region35: #{som_dst_forward.2} parent=11 // pred_region
        _
      $region36: #{som_dst_forward.2} parent=11 // pred_fallthru
        _
      // Predicated region
      $region37: #{som_dst_forward.2} parent=11 // pred_check
        %p455 = pneg %p223
      $region38: #{som_dst_forward.2} parent=11 // pred_check_branch
        %457 = sbr.rel (%p455) target = $region40
      $region39: #{som_dst_forward.2} parent=11 // pred_region
        _
      $region40: #{som_dst_forward.2} parent=11 // pred_fallthru
        _
      // Predicated region
      $region41: #{som_dst_forward.2} parent=11 // pred_check
        %p458 = pneg %p244
      $region42: #{som_dst_forward.2} parent=11 // pred_check_branch
        %460 = sbr.rel (%p458) target = $region44
      $region43: #{som_dst_forward.2} parent=11 // pred_region
        _
      $region44: #{som_dst_forward.2} parent=11 // pred_fallthru
        _
      // Predicated region
      $region45: #{som_dst_forward.2} parent=11 // pred_check
        %p461 = pneg %p265
      $region46: #{som_dst_forward.2} parent=11 // pred_check_branch
        %463 = sbr.rel (%p461) target = $region48
      $region47: #{som_dst_forward.2} parent=11 // pred_region
        _
      $region48: #{som_dst_forward.2} parent=11 // pred_fallthru
        _
      // Predicated region
      $region49: #{som_dst_forward.2} parent=11 // pred_check
        %p464 = pneg %p286
      $region50: #{som_dst_forward.2} parent=11 // pred_check_branch
        %466 = sbr.rel (%p464) target = $region52
      $region51: #{som_dst_forward.2} parent=11 // pred_region
        _
      $region52: #{som_dst_forward.2} parent=11 // pred_fallthru
        _
      // Predicated region
      $region53: #{som_dst_forward.2} parent=11 // pred_check
        %p467 = pneg %p307
      $region54: #{som_dst_forward.2} parent=11 // pred_check_branch
        %469 = sbr.rel (%p467) target = $region56
      $region55: #{som_dst_forward.2} parent=11 // pred_region
        _
      $region56: #{som_dst_forward.2} parent=11 // pred_fallthru
        _
      // Predicated region
      $region57: #{som_dst_forward.2} parent=11 // pred_check
        %p470 = pneg %p328
      $region58: #{som_dst_forward.2} parent=11 // pred_check_branch
        %472 = sbr.rel (%p470) target = $region60
      $region59: #{som_dst_forward.2} parent=11 // pred_region
        _
      $region60: #{som_dst_forward.2} parent=11 // pred_fallthru
        _
      // Predicated region
      $region61: #{som_dst_forward.2} parent=11 // pred_check
        %p473 = pneg %p349
      $region62: #{som_dst_forward.2} parent=11 // pred_check_branch
        %475 = sbr.rel (%p473) target = $region64
      $region63: #{som_dst_forward.2} parent=11 // pred_region
        _
      $region64: #{som_dst_forward.2} parent=11 // pred_fallthru
        _
      // Predicated region
      $region65: #{som_dst_forward.2} parent=11 // pred_check
        %p476 = pneg %p370
      $region66: #{som_dst_forward.2} parent=11 // pred_check_branch
        %478 = sbr.rel (%p476) target = $region68
      $region67: #{som_dst_forward.2} parent=11 // pred_region
        _
      $region68: #{som_dst_forward.2} parent=11 // pred_fallthru
        _
    $region12: #{som_dst_forward.2} parent=5 // pred_fallthru
      _
    %p479 = scmp.lt.s32.totalorder %s24, 2
    // Predicated region
    $region69: #{som_dst_forward.2} parent=5 // pred_check
      %p480 = pneg %p479
    $region70: #{som_dst_forward.2} parent=5 // pred_check_branch
      %482 = sbr.rel (%p480) target = $region72
    $region71: #{som_dst_forward.2} parent=5 // pred_region
      // Predicated region
      $region73: #{som_dst_forward.2} parent=71 // pred_check
        %p483 = pneg %p44
      $region74: #{som_dst_forward.2} parent=71 // pred_check_branch
        %485 = sbr.rel (%p483) target = $region76
      $region75: #{som_dst_forward.2} parent=71 // pred_region
        %p486 = scmp.lt.s32.totalorder %s24, 1
        %s487 = scalar_select %p486, %s24, 1
        %s488 = smul.addr %s487, 2
        %s489 = smul.addr %s488, 8
        %s490 = scalar_lea.vmem %s0, %s489
      $region76: #{som_dst_forward.2} parent=71 // pred_fallthru
        _
      // Predicated region
      $region77: #{som_dst_forward.2} parent=71 // pred_check
        %p491 = pneg %p70
      $region78: #{som_dst_forward.2} parent=71 // pred_check_branch
        %493 = sbr.rel (%p491) target = $region80
      $region79: #{som_dst_forward.2} parent=71 // pred_region
        %p494 = scmp.lt.s32.totalorder %s24, 1
        %s495 = scalar_select %p494, %s24, 1
        %s496 = scalar_lea.vmem %s1, %s495
      $region80: #{som_dst_forward.2} parent=71 // pred_fallthru
        _
    $region72: #{som_dst_forward.2} parent=5 // pred_fallthru
      _
    %p497 = scmp.le.s32.totalorder 1, %s24
    %p498 = scmp.lt.s32.totalorder %s24, 3
    %p499 = pnand %p497, %p498
    %p500 = pneg %p499
    // Predicated region
    $region81: #{som_dst_forward.2} parent=5 // pred_check
      _
    $region82: #{som_dst_forward.2} parent=5 // pred_check_branch
      %502 = sbr.rel (%p499) target = $region84
    $region83: #{som_dst_forward.2} parent=5 // pred_region
      %s503 = ssub.s32 %s24, 1
      %p504 = scmp.lt.s32.totalorder %s29, 1
      %s505 = scalar_select %p504, %s29, 1
      %s506 = smul.addr %s505, 2
      %s507 = smul.addr %s506, 8
      %s508 = scalar_lea.vmem %s0, %s507
      %p509 = pneg %p50
      %p510 = pneg %p47
      %p511 = scmp.lt.s32.totalorder %s29, 1
      %s512 = scalar_select %p511, %s29, 1
      %s513 = scalar_lea.vmem %s1, %s512
      %p514 = pneg %p76
      %p515 = pneg %p73
      %p516 = pneg %p97
      %p517 = pneg %p94
      %p518 = pneg %p118
      %p519 = pneg %p115
      %p520 = pneg %p139
      %p521 = pneg %p136
      %p522 = pneg %p160
      %p523 = pneg %p157
      %p524 = pneg %p181
      %p525 = pneg %p178
      %p526 = pneg %p202
      %p527 = pneg %p199
      %p528 = pneg %p223
      %p529 = pneg %p220
      %p530 = pneg %p244
      %p531 = pneg %p241
      %p532 = pneg %p265
      %p533 = pneg %p262
      %p534 = pneg %p286
      %p535 = pneg %p283
      %p536 = pneg %p307
      %p537 = pneg %p304
      %p538 = pneg %p328
      %p539 = pneg %p325
      %p540 = pneg %p349
      %p541 = pneg %p346
      %p542 = pneg %p370
      %p543 = pneg %p367
      %p544 = pneg %p396
      %p545 = pneg %p393
      %p546 = scmp.lt.s32.totalorder %s29, 1
      %s547 = scalar_select %p546, %s29, 1
      %s548 = smul.addr %s547, 2
      %s549 = smul.addr %s548, 8
      %s550 = scalar_lea.vmem %s16, %s549
      %p551 = pneg %p422
      %p552 = pneg %p419
      %p553 = scmp.lt.s32.totalorder %s29, 1
      %s554 = scalar_select %p553, %s29, 1
      %s555 = scalar_lea.vmem %s17, %s554
      %p556 = scmp.lt.s32.totalorder %s29, 1
      %s557 = scalar_select %p556, %s29, 1
      %s558 = smul.addr %s557, 2
      %s559 = smul.addr %s558, 8
      %s560 = scalar_lea.vmem %s0, %s559
      %p561 = scmp.lt.s32.totalorder %s29, 1
      %s562 = scalar_select %p561, %s29, 1
      %s563 = scalar_lea.vmem %s1, %s562
      %p564 = scmp.lt.s32.totalorder %s29, 1
      %s565 = scalar_select %p564, %s29, 1
      %s566 = smul.addr %s565, 2
      %s567 = smul.addr %s566, 8
      %s568 = scalar_lea.vmem %s16, %s567
      %p569 = scmp.lt.s32.totalorder %s29, 1
      %s570 = scalar_select %p569, %s29, 1
      %s571 = scalar_lea.vmem %s17, %s570
      %v572 = vld [vmem:[%s560] sm:$0xff]
      %v573 = vld [vmem:[%s560 + $0x8] sm:$0xff]
      %v574 = vld [vmem:[%s563] sm:$0x1]
      %v575 = vld [vmem:[%s2] sm:$0xff]
      %v576 = vld [vmem:[%s2 + $0x8] sm:$0xff]
      %v577 = vld [vmem:[%s2 + $0x10] sm:$0xff]
      %v578 = vld [vmem:[%s2 + $0x18] sm:$0xff]
      %v579 = vld [vmem:[%s3] sm:$0x1]
      %v581 = vlaneseq
      %v582 = vshrl.u32 %v581, 7
      %v583 = vsub.s32 0, %v582
      %v584 = vrot.slane %v579, %v583
      %vm586 = vcmask 261120
      %v588 = vsel %vm586, %v572, 0
      %v591 = vsel %vm586, %v573, 0
      %593 = vmatprep.subr.mxu0 0.0
      %594 = vmatpush1.msra.mxu0 %v575
      %595 = vmatprep.subr.mxu0 0.0
      %596 = vmatpush1.msra.mxu0 %v576
      %597 = vmatprep.subr.mxu0 0.0
      %598 = vmatpush1.msra.mxu0 %v577
      %599 = vmatprep.subr.mxu0 0.0
      %600 = vmatpush1.msra.mxu0 %v578
      %601 = vmatprep.subr.mxu0 0.0
      %602 = vmatpush1.msra.mxu0 0.0
      %603 = vmatprep.subr.mxu0 0.0
      %604 = vmatpush1.msra.mxu0 0.0
      %605 = vmatprep.subr.mxu0 0.0
      %606 = vmatpush1.msra.mxu0 0.0
      %607 = vmatprep.subr.mxu0 0.0
      %608 = vmatpush1.msra.mxu0 0.0
      %609 = vmatprep.subr.mxu0 0.0
      %610 = vmatpush1.msra.mxu0 0.0
      %611 = vmatprep.subr.mxu0 0.0
      %612 = vmatpush1.msra.mxu0 0.0
      %613 = vmatprep.subr.mxu0 0.0
      %614 = vmatpush1.msra.mxu0 0.0
      %615 = vmatprep.subr.mxu0 0.0
      %616 = vmatpush1.msra.mxu0 0.0
      %617 = vmatprep.subr.mxu0 0.0
      %618 = vmatpush1.msra.mxu0 0.0
      %619 = vmatprep.subr.mxu0 0.0
      %620 = vmatpush1.msra.mxu0 0.0
      %621 = vmatprep.subr.mxu0 0.0
      %622 = vmatpush1.msra.mxu0 0.0
      %623 = vmatprep.subr.mxu0 0.0
      %624 = vmatpush1.msra.mxu0 0.0
      %625 = vmatprep.subr.mxu0 0.0
      %626 = vmatpush1.msra.mxu0 0.0
      %627 = vmatprep.subr.mxu0 0.0
      %628 = vmatpush1.msra.mxu0 0.0
      %629 = vmatprep.subr.mxu0 0.0
      %630 = vmatpush1.msra.mxu0 0.0
      %631 = vmatprep.subr.mxu0 0.0
      %632 = vmatpush1.msra.mxu0 0.0
      %633 = vmatprep.subr.mxu0 0.0
      %634 = vmatpush1.msra.mxu0 0.0
      %635 = vmatprep.subr.mxu0 0.0
      %636 = vmatpush1.msra.mxu0 0.0
      %637 = vmatprep.subr.mxu0 0.0
      %638 = vmatpush1.msra.mxu0 0.0
      %639 = vmatprep.subr.mxu0 0.0
      %640 = vmatpush1.msra.mxu0 0.0
      %641 = vmatprep.subr.mxu0 0.0
      %642 = vmatpush1.msra.mxu0 0.0
      %643 = vmatprep.subr.mxu0 0.0
      %644 = vmatpush1.msra.mxu0 0.0
      %645 = vmatprep.subr.mxu0 0.0
      %646 = vmatpush1.msra.mxu0 0.0
      %647 = vmatprep.subr.mxu0 0.0
      %648 = vmatpush1.msra.mxu0 0.0
      %649 = vmatprep.subr.mxu0 0.0
      %650 = vmatpush1.msra.mxu0 0.0
      %651 = vmatprep.subr.mxu0 0.0
      %652 = vmatpush1.msra.mxu0 0.0
      %653 = vmatprep.subr.mxu0 0.0
      %654 = vmatpush1.msra.mxu0 0.0
      %655 = vmatprep.subr.mxu0 0.0
      %656 = vmatpush1.msra.mxu0 0.0
      %657 = vmatprep.mubr.f32.mxu0 0.0
      %658 = vmatmul.mubr.f32.gmra.mrb[0].mxu0 %v588
      %v659 = vpop.f32.mrb[0].mxu0
      %v660 = vadd.f32 %v584, %v659
      %v661 = vpop.f32.mrb[0].mxu0
      %662 = vmatprep.mubr.f32.mxu0 0.0
      %663 = vmatmul.mubr.f32.gmra.mrb[0].mxu0 %v591
      %v664 = vpop.f32.mrb[0].mxu0
      %v665 = vadd.f32 %v584, %v664
      %v666 = vpop.f32.mrb[0].mxu0
      %667 = vdwg.mxu0
      %670 = vrot.lane.b32.xlu0 %v660, 96
      %v671 = vpop.permute.xlu0 %670
      %672 = vrot.lane.b32.xlu0 %v665, 96
      %v673 = vpop.permute.xlu0 %672
      %vm674 = vcmask 64512
      %v675 = vsel %vm674, %v660, 0
      %v677 = vsel %vm674, %v665, 0
      %v679 = vsel %vm674, %v671, 0
      %v681 = vsel %vm674, %v673, 0
      %683 = vmatprep.subr.mxu0 0.0
      %684 = vmatpush1.xpose.msra.mxu0 %v679
      %685 = vmatprep.subr.mxu0 0.0
      %686 = vmatpush1.xpose.msra.mxu0 %v681
      %687 = vmatprep.subr.mxu0 0.0
      %688 = vmatpush1.xpose.msra.mxu0 0.0
      %689 = vmatprep.subr.mxu0 0.0
      %690 = vmatpush1.xpose.msra.mxu0 0.0
      %691 = vmatprep.subr.mxu0 0.0
      %692 = vmatpush1.xpose.msra.mxu0 0.0
      %693 = vmatprep.subr.mxu0 0.0
      %694 = vmatpush1.xpose.msra.mxu0 0.0
      %695 = vmatprep.subr.mxu0 0.0
      %696 = vmatpush1.xpose.msra.mxu0 0.0
      %697 = vmatprep.subr.mxu0 0.0
      %698 = vmatpush1.xpose.msra.mxu0 0.0
      %699 = vmatprep.subr.mxu0 0.0
      %700 = vmatpush1.xpose.msra.mxu0 0.0
      %701 = vmatprep.subr.mxu0 0.0
      %702 = vmatpush1.xpose.msra.mxu0 0.0
      %703 = vmatprep.subr.mxu0 0.0
      %704 = vmatpush1.xpose.msra.mxu0 0.0
      %705 = vmatprep.subr.mxu0 0.0
      %706 = vmatpush1.xpose.msra.mxu0 0.0
      %707 = vmatprep.subr.mxu0 0.0
      %708 = vmatpush1.xpose.msra.mxu0 0.0
      %709 = vmatprep.subr.mxu0 0.0
      %710 = vmatpush1.xpose.msra.mxu0 0.0
      %711 = vmatprep.subr.mxu0 0.0
      %712 = vmatpush1.xpose.msra.mxu0 0.0
      %713 = vmatprep.subr.mxu0 0.0
      %714 = vmatpush1.xpose.msra.mxu0 0.0
      %715 = vmatprep.subr.mxu0 0.0
      %716 = vmatpush1.xpose.msra.mxu0 0.0
      %717 = vmatprep.subr.mxu0 0.0
      %718 = vmatpush1.xpose.msra.mxu0 0.0
      %719 = vmatprep.subr.mxu0 0.0
      %720 = vmatpush1.xpose.msra.mxu0 0.0
      %721 = vmatprep.subr.mxu0 0.0
      %722 = vmatpush1.xpose.msra.mxu0 0.0
      %723 = vmatprep.subr.mxu0 0.0
      %724 = vmatpush1.xpose.msra.mxu0 0.0
      %725 = vmatprep.subr.mxu0 0.0
      %726 = vmatpush1.xpose.msra.mxu0 0.0
      %727 = vmatprep.subr.mxu0 0.0
      %728 = vmatpush1.xpose.msra.mxu0 0.0
      %729 = vmatprep.subr.mxu0 0.0
      %730 = vmatpush1.xpose.msra.mxu0 0.0
      %731 = vmatprep.subr.mxu0 0.0
      %732 = vmatpush1.xpose.msra.mxu0 0.0
      %733 = vmatprep.subr.mxu0 0.0
      %734 = vmatpush1.xpose.msra.mxu0 0.0
      %735 = vmatprep.subr.mxu0 0.0
      %736 = vmatpush1.xpose.msra.mxu0 0.0
      %737 = vmatprep.subr.mxu0 0.0
      %738 = vmatpush1.xpose.msra.mxu0 0.0
      %739 = vmatprep.subr.mxu0 0.0
      %740 = vmatpush1.xpose.msra.mxu0 0.0
      %741 = vmatprep.subr.mxu0 0.0
      %742 = vmatpush1.xpose.msra.mxu0 0.0
      %743 = vmatprep.subr.mxu0 0.0
      %744 = vmatpush1.xpose.msra.mxu0 0.0
      %745 = vmatprep.subr.mxu0 0.0
      %746 = vmatpush1.xpose.msra.mxu0 0.0
      %747 = vmatprep.mubr.f32.mxu0 0.0
      %748 = vmatmul.mubr.f32.gmra.mrb[0].mxu0 %v675
      %v749 = vpop.f32.mrb[0].mxu0
      %v750 = vadd.f32 0.0, %v749
      %v751 = vpop.f32.mrb[0].mxu0
      %752 = vmatprep.mubr.f32.mxu0 0.0
      %753 = vmatmul.mubr.f32.gmra.mrb[0].mxu0 %v677
      %v754 = vpop.f32.mrb[0].mxu0
      %v755 = vadd.f32 0.0, %v754
      %v756 = vpop.f32.mrb[0].mxu0
      %757 = vdwg.mxu0
      %v758 = vmul.f32 %v750, 0.35355338
      %v759 = vmul.f32 %v755, 0.35355338
      %v761 = vlaneseq
      %v762 = vshrl.u32 %v761, 7
      %v763 = vsub.s32 0, %v762
      %v764 = vrot.slane %v574, %v763
      %v766 = vadd.f32 %v758, %v764
      %v767 = vadd.f32 %v759, %v764
      %vm768 = vcmask 130048
      %v769 = vsel %vm768, %v766, -inf
      %770 = vmax.xlane.f32.xlu0 %v769
      %v771 = vpop.xlane.xlu0 %770
      %v772 = vsel %vm768, %v767, -inf
      %773 = vmax.xlane.f32.xlu0 %v772
      %v774 = vpop.xlane.xlu0 %773
      %v775 = vsub.f32 %v766, %v771
      %v776 = vsub.f32 %v767, %v774
      %v777 = vmul.f32 %v775, 1.442695
      %v778 = vpow.pop %v777
      %v779 = vmul.f32 %v776, 1.442695
      %v780 = vpow.pop %v779
      %v781 = vsel %vm768, %v778, 0.0
      %782 = vadd.xlane.f32.xlu0 %v781
      %v783 = vpop.xlane.xlu0 %782
      %v784 = vsel %vm768, %v780, 0.0
      %785 = vadd.xlane.f32.xlu0 %v784
      %v786 = vpop.xlane.xlu0 %785
      %v787 = vrcp.pop %v783
      %v788 = vrcp.pop %v786
      %v789 = vmul.f32 %v778, %v787
      %v790 = vmul.f32 %v780, %v788
      %791 = vrot.lane.b32.xlu0 %v660, 64
      %v792 = vpop.permute.xlu0 %791
      %793 = vrot.lane.b32.xlu0 %v665, 64
      %v794 = vpop.permute.xlu0 %793
      %v798 = vsel %vm768, %v789, 0
      %v801 = vsel %vm768, %v790, 0
      %803 = vmatprep.subr.mxu0 0.0
      %804 = vmatpush1.msra.mxu0 %v792
      %805 = vmatprep.subr.mxu0 0.0
      %806 = vmatpush1.msra.mxu0 %v794
      %807 = vmatprep.subr.mxu0 0.0
      %808 = vmatpush1.msra.mxu0 0.0
      %809 = vmatprep.subr.mxu0 0.0
      %810 = vmatpush1.msra.mxu0 0.0
      %811 = vmatprep.subr.mxu0 0.0
      %812 = vmatpush1.msra.mxu0 0.0
      %813 = vmatprep.subr.mxu0 0.0
      %814 = vmatpush1.msra.mxu0 0.0
      %815 = vmatprep.subr.mxu0 0.0
      %816 = vmatpush1.msra.mxu0 0.0
      %817 = vmatprep.subr.mxu0 0.0
      %818 = vmatpush1.msra.mxu0 0.0
      %819 = vmatprep.subr.mxu0 0.0
      %820 = vmatpush1.msra.mxu0 0.0
      %821 = vmatprep.subr.mxu0 0.0
      %822 = vmatpush1.msra.mxu0 0.0
      %823 = vmatprep.subr.mxu0 0.0
      %824 = vmatpush1.msra.mxu0 0.0
      %825 = vmatprep.subr.mxu0 0.0
      %826 = vmatpush1.msra.mxu0 0.0
      %827 = vmatprep.subr.mxu0 0.0
      %828 = vmatpush1.msra.mxu0 0.0
      %829 = vmatprep.subr.mxu0 0.0
      %830 = vmatpush1.msra.mxu0 0.0
      %831 = vmatprep.subr.mxu0 0.0
      %832 = vmatpush1.msra.mxu0 0.0
      %833 = vmatprep.subr.mxu0 0.0
      %834 = vmatpush1.msra.mxu0 0.0
      %835 = vmatprep.subr.mxu0 0.0
      %836 = vmatpush1.msra.mxu0 0.0
      %837 = vmatprep.subr.mxu0 0.0
      %838 = vmatpush1.msra.mxu0 0.0
      %839 = vmatprep.subr.mxu0 0.0
      %840 = vmatpush1.msra.mxu0 0.0
      %841 = vmatprep.subr.mxu0 0.0
      %842 = vmatpush1.msra.mxu0 0.0
      %843 = vmatprep.subr.mxu0 0.0
      %844 = vmatpush1.msra.mxu0 0.0
      %845 = vmatprep.subr.mxu0 0.0
      %846 = vmatpush1.msra.mxu0 0.0
      %847 = vmatprep.subr.mxu0 0.0
      %848 = vmatpush1.msra.mxu0 0.0
      %849 = vmatprep.subr.mxu0 0.0
      %850 = vmatpush1.msra.mxu0 0.0
      %851 = vmatprep.subr.mxu0 0.0
      %852 = vmatpush1.msra.mxu0 0.0
      %853 = vmatprep.subr.mxu0 0.0
      %854 = vmatpush1.msra.mxu0 0.0
      %855 = vmatprep.subr.mxu0 0.0
      %856 = vmatpush1.msra.mxu0 0.0
      %857 = vmatprep.subr.mxu0 0.0
      %858 = vmatpush1.msra.mxu0 0.0
      %859 = vmatprep.subr.mxu0 0.0
      %860 = vmatpush1.msra.mxu0 0.0
      %861 = vmatprep.subr.mxu0 0.0
      %862 = vmatpush1.msra.mxu0 0.0
      %863 = vmatprep.subr.mxu0 0.0
      %864 = vmatpush1.msra.mxu0 0.0
      %865 = vmatprep.subr.mxu0 0.0
      %866 = vmatpush1.msra.mxu0 0.0
      %867 = vmatprep.mubr.f32.mxu0 0.0
      %868 = vmatmul.mubr.f32.gmra.mrb[0].mxu0 %v798
      %v869 = vpop.f32.mrb[0].mxu0
      %v870 = vadd.f32 0.0, %v869
      %v871 = vpop.f32.mrb[0].mxu0
      %872 = vmatprep.mubr.f32.mxu0 0.0
      %873 = vmatmul.mubr.f32.gmra.mrb[0].mxu0 %v801
      %v874 = vpop.f32.mrb[0].mxu0
      %v875 = vadd.f32 0.0, %v874
      %v876 = vpop.f32.mrb[0].mxu0
      %877 = vdwg.mxu0
      %878 = vrot.lane.b32.xlu0 %v660, 120
      %v879 = vpop.permute.xlu0 %878
      %880 = vrot.lane.b32.xlu0 %v665, 120
      %v881 = vpop.permute.xlu0 %880
      %882 = vrot.lane.b32.xlu0 %v660, 88
      %v883 = vpop.permute.xlu0 %882
      %884 = vrot.lane.b32.xlu0 %v665, 88
      %v885 = vpop.permute.xlu0 %884
      %v886 = vsel %vm674, %v879, 0
      %v888 = vsel %vm674, %v881, 0
      %v890 = vsel %vm674, %v883, 0
      %v892 = vsel %vm674, %v885, 0
      %894 = vmatprep.subr.mxu0 0.0
      %895 = vmatpush1.xpose.msra.mxu0 %v890
      %896 = vmatprep.subr.mxu0 0.0
      %897 = vmatpush1.xpose.msra.mxu0 %v892
      %898 = vmatprep.subr.mxu0 0.0
      %899 = vmatpush1.xpose.msra.mxu0 0.0
      %900 = vmatprep.subr.mxu0 0.0
      %901 = vmatpush1.xpose.msra.mxu0 0.0
      %902 = vmatprep.subr.mxu0 0.0
      %903 = vmatpush1.xpose.msra.mxu0 0.0
      %904 = vmatprep.subr.mxu0 0.0
      %905 = vmatpush1.xpose.msra.mxu0 0.0
      %906 = vmatprep.subr.mxu0 0.0
      %907 = vmatpush1.xpose.msra.mxu0 0.0
      %908 = vmatprep.subr.mxu0 0.0
      %909 = vmatpush1.xpose.msra.mxu0 0.0
      %910 = vmatprep.subr.mxu0 0.0
      %911 = vmatpush1.xpose.msra.mxu0 0.0
      %912 = vmatprep.subr.mxu0 0.0
      %913 = vmatpush1.xpose.msra.mxu0 0.0
      %914 = vmatprep.subr.mxu0 0.0
      %915 = vmatpush1.xpose.msra.mxu0 0.0
      %916 = vmatprep.subr.mxu0 0.0
      %917 = vmatpush1.xpose.msra.mxu0 0.0
      %918 = vmatprep.subr.mxu0 0.0
      %919 = vmatpush1.xpose.msra.mxu0 0.0
      %920 = vmatprep.subr.mxu0 0.0
      %921 = vmatpush1.xpose.msra.mxu0 0.0
      %922 = vmatprep.subr.mxu0 0.0
      %923 = vmatpush1.xpose.msra.mxu0 0.0
      %924 = vmatprep.subr.mxu0 0.0
      %925 = vmatpush1.xpose.msra.mxu0 0.0
      %926 = vmatprep.subr.mxu0 0.0
      %927 = vmatpush1.xpose.msra.mxu0 0.0
      %928 = vmatprep.subr.mxu0 0.0
      %929 = vmatpush1.xpose.msra.mxu0 0.0
      %930 = vmatprep.subr.mxu0 0.0
      %931 = vmatpush1.xpose.msra.mxu0 0.0
      %932 = vmatprep.subr.mxu0 0.0
      %933 = vmatpush1.xpose.msra.mxu0 0.0
      %934 = vmatprep.subr.mxu0 0.0
      %935 = vmatpush1.xpose.msra.mxu0 0.0
      %936 = vmatprep.subr.mxu0 0.0
      %937 = vmatpush1.xpose.msra.mxu0 0.0
      %938 = vmatprep.subr.mxu0 0.0
      %939 = vmatpush1.xpose.msra.mxu0 0.0
      %940 = vmatprep.subr.mxu0 0.0
      %941 = vmatpush1.xpose.msra.mxu0 0.0
      %942 = vmatprep.subr.mxu0 0.0
      %943 = vmatpush1.xpose.msra.mxu0 0.0
      %944 = vmatprep.subr.mxu0 0.0
      %945 = vmatpush1.xpose.msra.mxu0 0.0
      %946 = vmatprep.subr.mxu0 0.0
      %947 = vmatpush1.xpose.msra.mxu0 0.0
      %948 = vmatprep.subr.mxu0 0.0
      %949 = vmatpush1.xpose.msra.mxu0 0.0
      %950 = vmatprep.subr.mxu0 0.0
      %951 = vmatpush1.xpose.msra.mxu0 0.0
      %952 = vmatprep.subr.mxu0 0.0
      %953 = vmatpush1.xpose.msra.mxu0 0.0
      %954 = vmatprep.subr.mxu0 0.0
      %955 = vmatpush1.xpose.msra.mxu0 0.0
      %956 = vmatprep.subr.mxu0 0.0
      %957 = vmatpush1.xpose.msra.mxu0 0.0
      %958 = vmatprep.mubr.f32.mxu0 0.0
      %959 = vmatmul.mubr.f32.gmra.mrb[0].mxu0 %v886
      %v960 = vpop.f32.mrb[0].mxu0
      %v961 = vadd.f32 0.0, %v960
      %v962 = vpop.f32.mrb[0].mxu0
      %963 = vmatprep.mubr.f32.mxu0 0.0
      %964 = vmatmul.mubr.f32.gmra.mrb[0].mxu0 %v888
      %v965 = vpop.f32.mrb[0].mxu0
      %v966 = vadd.f32 0.0, %v965
      %v967 = vpop.f32.mrb[0].mxu0
      %968 = vdwg.mxu0
      %v969 = vmul.f32 %v961, 0.35355338
      %v970 = vmul.f32 %v966, 0.35355338
      %v971 = vadd.f32 %v969, %v764
      %v972 = vadd.f32 %v970, %v764
      %v973 = vsel %vm768, %v971, -inf
      %974 = vmax.xlane.f32.xlu0 %v973
      %v975 = vpop.xlane.xlu0 %974
      %v976 = vsel %vm768, %v972, -inf
      %977 = vmax.xlane.f32.xlu0 %v976
      %v978 = vpop.xlane.xlu0 %977
      %v979 = vsub.f32 %v971, %v975
      %v980 = vsub.f32 %v972, %v978
      %v981 = vmul.f32 %v979, 1.442695
      %v982 = vpow.pop %v981
      %v983 = vmul.f32 %v980, 1.442695
      %v984 = vpow.pop %v983
      %v985 = vsel %vm768, %v982, 0.0
      %986 = vadd.xlane.f32.xlu0 %v985
      %v987 = vpop.xlane.xlu0 %986
      %v988 = vsel %vm768, %v984, 0.0
      %989 = vadd.xlane.f32.xlu0 %v988
      %v990 = vpop.xlane.xlu0 %989
      %v991 = vrcp.pop %v987
      %v992 = vrcp.pop %v990
      %v993 = vmul.f32 %v982, %v991
      %v994 = vmul.f32 %v984, %v992
      %995 = vrot.lane.b32.xlu0 %v660, 56
      %v996 = vpop.permute.xlu0 %995
      %997 = vrot.lane.b32.xlu0 %v665, 56
      %v998 = vpop.permute.xlu0 %997
      %v1002 = vsel %vm768, %v993, 0
      %v1005 = vsel %vm768, %v994, 0
      %1007 = vmatprep.subr.mxu0 0.0
      %1008 = vmatpush1.msra.mxu0 %v996
      %1009 = vmatprep.subr.mxu0 0.0
      %1010 = vmatpush1.msra.mxu0 %v998
      %1011 = vmatprep.subr.mxu0 0.0
      %1012 = vmatpush1.msra.mxu0 0.0
      %1013 = vmatprep.subr.mxu0 0.0
      %1014 = vmatpush1.msra.mxu0 0.0
      %1015 = vmatprep.subr.mxu0 0.0
      %1016 = vmatpush1.msra.mxu0 0.0
      %1017 = vmatprep.subr.mxu0 0.0
      %1018 = vmatpush1.msra.mxu0 0.0
      %1019 = vmatprep.subr.mxu0 0.0
      %1020 = vmatpush1.msra.mxu0 0.0
      %1021 = vmatprep.subr.mxu0 0.0
      %1022 = vmatpush1.msra.mxu0 0.0
      %1023 = vmatprep.subr.mxu0 0.0
      %1024 = vmatpush1.msra.mxu0 0.0
      %1025 = vmatprep.subr.mxu0 0.0
      %1026 = vmatpush1.msra.mxu0 0.0
      %1027 = vmatprep.subr.mxu0 0.0
      %1028 = vmatpush1.msra.mxu0 0.0
      %1029 = vmatprep.subr.mxu0 0.0
      %1030 = vmatpush1.msra.mxu0 0.0
      %1031 = vmatprep.subr.mxu0 0.0
      %1032 = vmatpush1.msra.mxu0 0.0
      %1033 = vmatprep.subr.mxu0 0.0
      %1034 = vmatpush1.msra.mxu0 0.0
      %1035 = vmatprep.subr.mxu0 0.0
      %1036 = vmatpush1.msra.mxu0 0.0
      %1037 = vmatprep.subr.mxu0 0.0
      %1038 = vmatpush1.msra.mxu0 0.0
      %1039 = vmatprep.subr.mxu0 0.0
      %1040 = vmatpush1.msra.mxu0 0.0
      %1041 = vmatprep.subr.mxu0 0.0
      %1042 = vmatpush1.msra.mxu0 0.0
      %1043 = vmatprep.subr.mxu0 0.0
      %1044 = vmatpush1.msra.mxu0 0.0
      %1045 = vmatprep.subr.mxu0 0.0
      %1046 = vmatpush1.msra.mxu0 0.0
      %1047 = vmatprep.subr.mxu0 0.0
      %1048 = vmatpush1.msra.mxu0 0.0
      %1049 = vmatprep.subr.mxu0 0.0
      %1050 = vmatpush1.msra.mxu0 0.0
      %1051 = vmatprep.subr.mxu0 0.0
      %1052 = vmatpush1.msra.mxu0 0.0
      %1053 = vmatprep.subr.mxu0 0.0
      %1054 = vmatpush1.msra.mxu0 0.0
      %1055 = vmatprep.subr.mxu0 0.0
      %1056 = vmatpush1.msra.mxu0 0.0
      %1057 = vmatprep.subr.mxu0 0.0
      %1058 = vmatpush1.msra.mxu0 0.0
      %1059 = vmatprep.subr.mxu0 0.0
      %1060 = vmatpush1.msra.mxu0 0.0
      %1061 = vmatprep.subr.mxu0 0.0
      %1062 = vmatpush1.msra.mxu0 0.0
      %1063 = vmatprep.subr.mxu0 0.0
      %1064 = vmatpush1.msra.mxu0 0.0
      %1065 = vmatprep.subr.mxu0 0.0
      %1066 = vmatpush1.msra.mxu0 0.0
      %1067 = vmatprep.subr.mxu0 0.0
      %1068 = vmatpush1.msra.mxu0 0.0
      %1069 = vmatprep.subr.mxu0 0.0
      %1070 = vmatpush1.msra.mxu0 0.0
      %1071 = vmatprep.mubr.f32.mxu0 0.0
      %1072 = vmatmul.mubr.f32.gmra.mrb[0].mxu0 %v1002
      %v1073 = vpop.f32.mrb[0].mxu0
      %v1074 = vadd.f32 0.0, %v1073
      %v1075 = vpop.f32.mrb[0].mxu0
      %1076 = vmatprep.mubr.f32.mxu0 0.0
      %1077 = vmatmul.mubr.f32.gmra.mrb[0].mxu0 %v1005
      %v1078 = vpop.f32.mrb[0].mxu0
      %v1079 = vadd.f32 0.0, %v1078
      %v1080 = vpop.f32.mrb[0].mxu0
      %1081 = vdwg.mxu0
      %1082 = vrot.lane.b32.xlu0 %v660, 112
      %v1083 = vpop.permute.xlu0 %1082
      %1084 = vrot.lane.b32.xlu0 %v665, 112
      %v1085 = vpop.permute.xlu0 %1084
      %1086 = vrot.lane.b32.xlu0 %v660, 80
      %v1087 = vpop.permute.xlu0 %1086
      %1088 = vrot.lane.b32.xlu0 %v665, 80
      %v1089 = vpop.permute.xlu0 %1088
      %v1090 = vsel %vm674, %v1083, 0
      %v1092 = vsel %vm674, %v1085, 0
      %v1094 = vsel %vm674, %v1087, 0
      %v1096 = vsel %vm674, %v1089, 0
      %1098 = vmatprep.subr.mxu0 0.0
      %1099 = vmatpush1.xpose.msra.mxu0 %v1094
      %1100 = vmatprep.subr.mxu0 0.0
      %1101 = vmatpush1.xpose.msra.mxu0 %v1096
      %1102 = vmatprep.subr.mxu0 0.0
      %1103 = vmatpush1.xpose.msra.mxu0 0.0
      %1104 = vmatprep.subr.mxu0 0.0
      %1105 = vmatpush1.xpose.msra.mxu0 0.0
      %1106 = vmatprep.subr.mxu0 0.0
      %1107 = vmatpush1.xpose.msra.mxu0 0.0
      %1108 = vmatprep.subr.mxu0 0.0
      %1109 = vmatpush1.xpose.msra.mxu0 0.0
      %1110 = vmatprep.subr.mxu0 0.0
      %1111 = vmatpush1.xpose.msra.mxu0 0.0
      %1112 = vmatprep.subr.mxu0 0.0
      %1113 = vmatpush1.xpose.msra.mxu0 0.0
      %1114 = vmatprep.subr.mxu0 0.0
      %1115 = vmatpush1.xpose.msra.mxu0 0.0
      %1116 = vmatprep.subr.mxu0 0.0
      %1117 = vmatpush1.xpose.msra.mxu0 0.0
      %1118 = vmatprep.subr.mxu0 0.0
      %1119 = vmatpush1.xpose.msra.mxu0 0.0
      %1120 = vmatprep.subr.mxu0 0.0
      %1121 = vmatpush1.xpose.msra.mxu0 0.0
      %1122 = vmatprep.subr.mxu0 0.0
      %1123 = vmatpush1.xpose.msra.mxu0 0.0
      %1124 = vmatprep.subr.mxu0 0.0
      %1125 = vmatpush1.xpose.msra.mxu0 0.0
      %1126 = vmatprep.subr.mxu0 0.0
      %1127 = vmatpush1.xpose.msra.mxu0 0.0
      %1128 = vmatprep.subr.mxu0 0.0
      %1129 = vmatpush1.xpose.msra.mxu0 0.0
      %1130 = vmatprep.subr.mxu0 0.0
      %1131 = vmatpush1.xpose.msra.mxu0 0.0
      %1132 = vmatprep.subr.mxu0 0.0
      %1133 = vmatpush1.xpose.msra.mxu0 0.0
      %1134 = vmatprep.subr.mxu0 0.0
      %1135 = vmatpush1.xpose.msra.mxu0 0.0
      %1136 = vmatprep.subr.mxu0 0.0
      %1137 = vmatpush1.xpose.msra.mxu0 0.0
      %1138 = vmatprep.subr.mxu0 0.0
      %1139 = vmatpush1.xpose.msra.mxu0 0.0
      %1140 = vmatprep.subr.mxu0 0.0
      %1141 = vmatpush1.xpose.msra.mxu0 0.0
      %1142 = vmatprep.subr.mxu0 0.0
      %1143 = vmatpush1.xpose.msra.mxu0 0.0
      %1144 = vmatprep.subr.mxu0 0.0
      %1145 = vmatpush1.xpose.msra.mxu0 0.0
      %1146 = vmatprep.subr.mxu0 0.0
      %1147 = vmatpush1.xpose.msra.mxu0 0.0
      %1148 = vmatprep.subr.mxu0 0.0
      %1149 = vmatpush1.xpose.msra.mxu0 0.0
      %1150 = vmatprep.subr.mxu0 0.0
      %1151 = vmatpush1.xpose.msra.mxu0 0.0
      %1152 = vmatprep.subr.mxu0 0.0
      %1153 = vmatpush1.xpose.msra.mxu0 0.0
      %1154 = vmatprep.subr.mxu0 0.0
      %1155 = vmatpush1.xpose.msra.mxu0 0.0
      %1156 = vmatprep.subr.mxu0 0.0
      %1157 = vmatpush1.xpose.msra.mxu0 0.0
      %1158 = vmatprep.subr.mxu0 0.0
      %1159 = vmatpush1.xpose.msra.mxu0 0.0
      %1160 = vmatprep.subr.mxu0 0.0
      %1161 = vmatpush1.xpose.msra.mxu0 0.0
      %1162 = vmatprep.mubr.f32.mxu0 0.0
      %1163 = vmatmul.mubr.f32.gmra.mrb[0].mxu0 %v1090
      %v1164 = vpop.f32.mrb[0].mxu0
      %v1165 = vadd.f32 0.0, %v1164
      %v1166 = vpop.f32.mrb[0].mxu0
      %1167 = vmatprep.mubr.f32.mxu0 0.0
      %1168 = vmatmul.mubr.f32.gmra.mrb[0].mxu0 %v1092
      %v1169 = vpop.f32.mrb[0].mxu0
      %v1170 = vadd.f32 0.0, %v1169
      %v1171 = vpop.f32.mrb[0].mxu0
      %1172 = vdwg.mxu0
      %v1173 = vmul.f32 %v1165, 0.35355338
      %v1174 = vmul.f32 %v1170, 0.35355338
      %v1175 = vadd.f32 %v1173, %v764
      %v1176 = vadd.f32 %v1174, %v764
      %v1177 = vsel %vm768, %v1175, -inf
      %1178 = vmax.xlane.f32.xlu0 %v1177
      %v1179 = vpop.xlane.xlu0 %1178
      %v1180 = vsel %vm768, %v1176, -inf
      %1181 = vmax.xlane.f32.xlu0 %v1180
      %v1182 = vpop.xlane.xlu0 %1181
      %v1183 = vsub.f32 %v1175, %v1179
      %v1184 = vsub.f32 %v1176, %v1182
      %v1185 = vmul.f32 %v1183, 1.442695
      %v1186 = vpow.pop %v1185
      %v1187 = vmul.f32 %v1184, 1.442695
      %v1188 = vpow.pop %v1187
      %v1189 = vsel %vm768, %v1186, 0.0
      %1190 = vadd.xlane.f32.xlu0 %v1189
      %v1191 = vpop.xlane.xlu0 %1190
      %v1192 = vsel %vm768, %v1188, 0.0
      %1193 = vadd.xlane.f32.xlu0 %v1192
      %v1194 = vpop.xlane.xlu0 %1193
      %v1195 = vrcp.pop %v1191
      %v1196 = vrcp.pop %v1194
      %v1197 = vmul.f32 %v1186, %v1195
      %v1198 = vmul.f32 %v1188, %v1196
      %1199 = vrot.lane.b32.xlu0 %v660, 48
      %v1200 = vpop.permute.xlu0 %1199
      %1201 = vrot.lane.b32.xlu0 %v665, 48
      %v1202 = vpop.permute.xlu0 %1201
      %v1206 = vsel %vm768, %v1197, 0
      %v1209 = vsel %vm768, %v1198, 0
      %1211 = vmatprep.subr.mxu0 0.0
      %1212 = vmatpush1.msra.mxu0 %v1200
      %1213 = vmatprep.subr.mxu0 0.0
      %1214 = vmatpush1.msra.mxu0 %v1202
      %1215 = vmatprep.subr.mxu0 0.0
      %1216 = vmatpush1.msra.mxu0 0.0
      %1217 = vmatprep.subr.mxu0 0.0
      %1218 = vmatpush1.msra.mxu0 0.0
      %1219 = vmatprep.subr.mxu0 0.0
      %1220 = vmatpush1.msra.mxu0 0.0
      %1221 = vmatprep.subr.mxu0 0.0
      %1222 = vmatpush1.msra.mxu0 0.0
      %1223 = vmatprep.subr.mxu0 0.0
      %1224 = vmatpush1.msra.mxu0 0.0
      %1225 = vmatprep.subr.mxu0 0.0
      %1226 = vmatpush1.msra.mxu0 0.0
      %1227 = vmatprep.subr.mxu0 0.0
      %1228 = vmatpush1.msra.mxu0 0.0
      %1229 = vmatprep.subr.mxu0 0.0
      %1230 = vmatpush1.msra.mxu0 0.0
      %1231 = vmatprep.subr.mxu0 0.0
      %1232 = vmatpush1.msra.mxu0 0.0
      %1233 = vmatprep.subr.mxu0 0.0
      %1234 = vmatpush1.msra.mxu0 0.0
      %1235 = vmatprep.subr.mxu0 0.0
      %1236 = vmatpush1.msra.mxu0 0.0
      %1237 = vmatprep.subr.mxu0 0.0
      %1238 = vmatpush1.msra.mxu0 0.0
      %1239 = vmatprep.subr.mxu0 0.0
      %1240 = vmatpush1.msra.mxu0 0.0
      %1241 = vmatprep.subr.mxu0 0.0
      %1242 = vmatpush1.msra.mxu0 0.0
      %1243 = vmatprep.subr.mxu0 0.0
      %1244 = vmatpush1.msra.mxu0 0.0
      %1245 = vmatprep.subr.mxu0 0.0
      %1246 = vmatpush1.msra.mxu0 0.0
      %1247 = vmatprep.subr.mxu0 0.0
      %1248 = vmatpush1.msra.mxu0 0.0
      %1249 = vmatprep.subr.mxu0 0.0
      %1250 = vmatpush1.msra.mxu0 0.0
      %1251 = vmatprep.subr.mxu0 0.0
      %1252 = vmatpush1.msra.mxu0 0.0
      %1253 = vmatprep.subr.mxu0 0.0
      %1254 = vmatpush1.msra.mxu0 0.0
      %1255 = vmatprep.subr.mxu0 0.0
      %1256 = vmatpush1.msra.mxu0 0.0
      %1257 = vmatprep.subr.mxu0 0.0
      %1258 = vmatpush1.msra.mxu0 0.0
      %1259 = vmatprep.subr.mxu0 0.0
      %1260 = vmatpush1.msra.mxu0 0.0
      %1261 = vmatprep.subr.mxu0 0.0
      %1262 = vmatpush1.msra.mxu0 0.0
      %1263 = vmatprep.subr.mxu0 0.0
      %1264 = vmatpush1.msra.mxu0 0.0
      %1265 = vmatprep.subr.mxu0 0.0
      %1266 = vmatpush1.msra.mxu0 0.0
      %1267 = vmatprep.subr.mxu0 0.0
      %1268 = vmatpush1.msra.mxu0 0.0
      %1269 = vmatprep.subr.mxu0 0.0
      %1270 = vmatpush1.msra.mxu0 0.0
      %1271 = vmatprep.subr.mxu0 0.0
      %1272 = vmatpush1.msra.mxu0 0.0
      %1273 = vmatprep.subr.mxu0 0.0
      %1274 = vmatpush1.msra.mxu0 0.0
      %1275 = vmatprep.mubr.f32.mxu0 0.0
      %1276 = vmatmul.mubr.f32.gmra.mrb[0].mxu0 %v1206
      %v1277 = vpop.f32.mrb[0].mxu0
      %v1278 = vadd.f32 0.0, %v1277
      %v1279 = vpop.f32.mrb[0].mxu0
      %1280 = vmatprep.mubr.f32.mxu0 0.0
      %1281 = vmatmul.mubr.f32.gmra.mrb[0].mxu0 %v1209
      %v1282 = vpop.f32.mrb[0].mxu0
      %v1283 = vadd.f32 0.0, %v1282
      %v1284 = vpop.f32.mrb[0].mxu0
      %1285 = vdwg.mxu0
      %1286 = vrot.lane.b32.xlu0 %v660, 104
      %v1287 = vpop.permute.xlu0 %1286
      %1288 = vrot.lane.b32.xlu0 %v665, 104
      %v1289 = vpop.permute.xlu0 %1288
      %1290 = vrot.lane.b32.xlu0 %v660, 72
      %v1291 = vpop.permute.xlu0 %1290
      %1292 = vrot.lane.b32.xlu0 %v665, 72
      %v1293 = vpop.permute.xlu0 %1292
      %v1294 = vsel %vm674, %v1287, 0
      %v1296 = vsel %vm674, %v1289, 0
      %v1298 = vsel %vm674, %v1291, 0
      %v1300 = vsel %vm674, %v1293, 0
      %1302 = vmatprep.subr.mxu0 0.0
      %1303 = vmatpush1.xpose.msra.mxu0 %v1298
      %1304 = vmatprep.subr.mxu0 0.0
      %1305 = vmatpush1.xpose.msra.mxu0 %v1300
      %1306 = vmatprep.subr.mxu0 0.0
      %1307 = vmatpush1.xpose.msra.mxu0 0.0
      %1308 = vmatprep.subr.mxu0 0.0
      %1309 = vmatpush1.xpose.msra.mxu0 0.0
      %1310 = vmatprep.subr.mxu0 0.0
      %1311 = vmatpush1.xpose.msra.mxu0 0.0
      %1312 = vmatprep.subr.mxu0 0.0
      %1313 = vmatpush1.xpose.msra.mxu0 0.0
      %1314 = vmatprep.subr.mxu0 0.0
      %1315 = vmatpush1.xpose.msra.mxu0 0.0
      %1316 = vmatprep.subr.mxu0 0.0
      %1317 = vmatpush1.xpose.msra.mxu0 0.0
      %1318 = vmatprep.subr.mxu0 0.0
      %1319 = vmatpush1.xpose.msra.mxu0 0.0
      %1320 = vmatprep.subr.mxu0 0.0
      %1321 = vmatpush1.xpose.msra.mxu0 0.0
      %1322 = vmatprep.subr.mxu0 0.0
      %1323 = vmatpush1.xpose.msra.mxu0 0.0
      %1324 = vmatprep.subr.mxu0 0.0
      %1325 = vmatpush1.xpose.msra.mxu0 0.0
      %1326 = vmatprep.subr.mxu0 0.0
      %1327 = vmatpush1.xpose.msra.mxu0 0.0
      %1328 = vmatprep.subr.mxu0 0.0
      %1329 = vmatpush1.xpose.msra.mxu0 0.0
      %1330 = vmatprep.subr.mxu0 0.0
      %1331 = vmatpush1.xpose.msra.mxu0 0.0
      %1332 = vmatprep.subr.mxu0 0.0
      %1333 = vmatpush1.xpose.msra.mxu0 0.0
      %1334 = vmatprep.subr.mxu0 0.0
      %1335 = vmatpush1.xpose.msra.mxu0 0.0
      %1336 = vmatprep.subr.mxu0 0.0
      %1337 = vmatpush1.xpose.msra.mxu0 0.0
      %1338 = vmatprep.subr.mxu0 0.0
      %1339 = vmatpush1.xpose.msra.mxu0 0.0
      %1340 = vmatprep.subr.mxu0 0.0
      %1341 = vmatpush1.xpose.msra.mxu0 0.0
      %1342 = vmatprep.subr.mxu0 0.0
      %1343 = vmatpush1.xpose.msra.mxu0 0.0
      %1344 = vmatprep.subr.mxu0 0.0
      %1345 = vmatpush1.xpose.msra.mxu0 0.0
      %1346 = vmatprep.subr.mxu0 0.0
      %1347 = vmatpush1.xpose.msra.mxu0 0.0
      %1348 = vmatprep.subr.mxu0 0.0
      %1349 = vmatpush1.xpose.msra.mxu0 0.0
      %1350 = vmatprep.subr.mxu0 0.0
      %1351 = vmatpush1.xpose.msra.mxu0 0.0
      %1352 = vmatprep.subr.mxu0 0.0
      %1353 = vmatpush1.xpose.msra.mxu0 0.0
      %1354 = vmatprep.subr.mxu0 0.0
      %1355 = vmatpush1.xpose.msra.mxu0 0.0
      %1356 = vmatprep.subr.mxu0 0.0
      %1357 = vmatpush1.xpose.msra.mxu0 0.0
      %1358 = vmatprep.subr.mxu0 0.0
      %1359 = vmatpush1.xpose.msra.mxu0 0.0
      %1360 = vmatprep.subr.mxu0 0.0
      %1361 = vmatpush1.xpose.msra.mxu0 0.0
      %1362 = vmatprep.subr.mxu0 0.0
      %1363 = vmatpush1.xpose.msra.mxu0 0.0
      %1364 = vmatprep.subr.mxu0 0.0
      %1365 = vmatpush1.xpose.msra.mxu0 0.0
      %1366 = vmatprep.mubr.f32.mxu0 0.0
      %1367 = vmatmul.mubr.f32.gmra.mrb[0].mxu0 %v1294
      %v1368 = vpop.f32.mrb[0].mxu0
      %v1369 = vadd.f32 0.0, %v1368
      %v1370 = vpop.f32.mrb[0].mxu0
      %1371 = vmatprep.mubr.f32.mxu0 0.0
      %1372 = vmatmul.mubr.f32.gmra.mrb[0].mxu0 %v1296
      %v1373 = vpop.f32.mrb[0].mxu0
      %v1374 = vadd.f32 0.0, %v1373
      %v1375 = vpop.f32.mrb[0].mxu0
      %1376 = vdwg.mxu0
      %v1377 = vmul.f32 %v1369, 0.35355338
      %v1378 = vmul.f32 %v1374, 0.35355338
      %v1379 = vadd.f32 %v1377, %v764
      %v1380 = vadd.f32 %v1378, %v764
      %v1381 = vsel %vm768, %v1379, -inf
      %1382 = vmax.xlane.f32.xlu0 %v1381
      %v1383 = vpop.xlane.xlu0 %1382
      %v1384 = vsel %vm768, %v1380, -inf
      %1385 = vmax.xlane.f32.xlu0 %v1384
      %v1386 = vpop.xlane.xlu0 %1385
      %v1387 = vsub.f32 %v1379, %v1383
      %v1388 = vsub.f32 %v1380, %v1386
      %v1389 = vmul.f32 %v1387, 1.442695
      %v1390 = vpow.pop %v1389
      %v1391 = vmul.f32 %v1388, 1.442695
      %v1392 = vpow.pop %v1391
      %v1393 = vsel %vm768, %v1390, 0.0
      %1394 = vadd.xlane.f32.xlu0 %v1393
      %v1395 = vpop.xlane.xlu0 %1394
      %v1396 = vsel %vm768, %v1392, 0.0
      %1397 = vadd.xlane.f32.xlu0 %v1396
      %v1398 = vpop.xlane.xlu0 %1397
      %v1399 = vrcp.pop %v1395
      %v1400 = vrcp.pop %v1398
      %v1401 = vmul.f32 %v1390, %v1399
      %v1402 = vmul.f32 %v1392, %v1400
      %1403 = vrot.lane.b32.xlu0 %v660, 40
      %v1404 = vpop.permute.xlu0 %1403
      %1405 = vrot.lane.b32.xlu0 %v665, 40
      %v1406 = vpop.permute.xlu0 %1405
      %v1410 = vsel %vm768, %v1401, 0
      %v1413 = vsel %vm768, %v1402, 0
      %1415 = vmatprep.subr.mxu0 0.0
      %1416 = vmatpush1.msra.mxu0 %v1404
      %1417 = vmatprep.subr.mxu0 0.0
      %1418 = vmatpush1.msra.mxu0 %v1406
      %1419 = vmatprep.subr.mxu0 0.0
      %1420 = vmatpush1.msra.mxu0 0.0
      %1421 = vmatprep.subr.mxu0 0.0
      %1422 = vmatpush1.msra.mxu0 0.0
      %1423 = vmatprep.subr.mxu0 0.0
      %1424 = vmatpush1.msra.mxu0 0.0
      %1425 = vmatprep.subr.mxu0 0.0
      %1426 = vmatpush1.msra.mxu0 0.0
      %1427 = vmatprep.subr.mxu0 0.0
      %1428 = vmatpush1.msra.mxu0 0.0
      %1429 = vmatprep.subr.mxu0 0.0
      %1430 = vmatpush1.msra.mxu0 0.0
      %1431 = vmatprep.subr.mxu0 0.0
      %1432 = vmatpush1.msra.mxu0 0.0
      %1433 = vmatprep.subr.mxu0 0.0
      %1434 = vmatpush1.msra.mxu0 0.0
      %1435 = vmatprep.subr.mxu0 0.0
      %1436 = vmatpush1.msra.mxu0 0.0
      %1437 = vmatprep.subr.mxu0 0.0
      %1438 = vmatpush1.msra.mxu0 0.0
      %1439 = vmatprep.subr.mxu0 0.0
      %1440 = vmatpush1.msra.mxu0 0.0
      %1441 = vmatprep.subr.mxu0 0.0
      %1442 = vmatpush1.msra.mxu0 0.0
      %1443 = vmatprep.subr.mxu0 0.0
      %1444 = vmatpush1.msra.mxu0 0.0
      %1445 = vmatprep.subr.mxu0 0.0
      %1446 = vmatpush1.msra.mxu0 0.0
      %1447 = vmatprep.subr.mxu0 0.0
      %1448 = vmatpush1.msra.mxu0 0.0
      %1449 = vmatprep.subr.mxu0 0.0
      %1450 = vmatpush1.msra.mxu0 0.0
      %1451 = vmatprep.subr.mxu0 0.0
      %1452 = vmatpush1.msra.mxu0 0.0
      %1453 = vmatprep.subr.mxu0 0.0
      %1454 = vmatpush1.msra.mxu0 0.0
      %1455 = vmatprep.subr.mxu0 0.0
      %1456 = vmatpush1.msra.mxu0 0.0
      %1457 = vmatprep.subr.mxu0 0.0
      %1458 = vmatpush1.msra.mxu0 0.0
      %1459 = vmatprep.subr.mxu0 0.0
      %1460 = vmatpush1.msra.mxu0 0.0
      %1461 = vmatprep.subr.mxu0 0.0
      %1462 = vmatpush1.msra.mxu0 0.0
      %1463 = vmatprep.subr.mxu0 0.0
      %1464 = vmatpush1.msra.mxu0 0.0
      %1465 = vmatprep.subr.mxu0 0.0
      %1466 = vmatpush1.msra.mxu0 0.0
      %1467 = vmatprep.subr.mxu0 0.0
      %1468 = vmatpush1.msra.mxu0 0.0
      %1469 = vmatprep.subr.mxu0 0.0
      %1470 = vmatpush1.msra.mxu0 0.0
      %1471 = vmatprep.subr.mxu0 0.0
      %1472 = vmatpush1.msra.mxu0 0.0
      %1473 = vmatprep.subr.mxu0 0.0
      %1474 = vmatpush1.msra.mxu0 0.0
      %1475 = vmatprep.subr.mxu0 0.0
      %1476 = vmatpush1.msra.mxu0 0.0
      %1477 = vmatprep.subr.mxu0 0.0
      %1478 = vmatpush1.msra.mxu0 0.0
      %1479 = vmatprep.mubr.f32.mxu0 0.0
      %1480 = vmatmul.mubr.f32.gmra.mrb[0].mxu0 %v1410
      %v1481 = vpop.f32.mrb[0].mxu0
      %v1482 = vadd.f32 0.0, %v1481
      %v1483 = vpop.f32.mrb[0].mxu0
      %1484 = vmatprep.mubr.f32.mxu0 0.0
      %1485 = vmatmul.mubr.f32.gmra.mrb[0].mxu0 %v1413
      %v1486 = vpop.f32.mrb[0].mxu0
      %v1487 = vadd.f32 0.0, %v1486
      %v1488 = vpop.f32.mrb[0].mxu0
      %1489 = vdwg.mxu0
      %1492 = vrot.lane.b32.xlu0 %v1074, 8
      %v1493 = vpop.permute.xlu0 %1492
      %1494 = vrot.lane.b32.xlu0 %v1079, 8
      %v1495 = vpop.permute.xlu0 %1494
      %1500 = vrot.lane.b32.xlu0 %v1278, 16
      %v1501 = vpop.permute.xlu0 %1500
      %1502 = vrot.lane.b32.xlu0 %v1283, 16
      %v1503 = vpop.permute.xlu0 %1502
      %1508 = vrot.lane.b32.xlu0 %v1482, 24
      %v1509 = vpop.permute.xlu0 %1508
      %1510 = vrot.lane.b32.xlu0 %v1487, 24
      %v1511 = vpop.permute.xlu0 %1510
      %v1514 = vsel %vm674, %v870, %v1493
      %v1515 = vsel %vm674, %v875, %v1495
      %v1516 = vsel %vm768, %v1514, %v1501
      %v1517 = vsel %vm768, %v1515, %v1503
      %vm1518 = vcmask 195584
      %v1519 = vsel %vm1518, %v1516, %v1509
      %v1520 = vsel %vm1518, %v1517, %v1511
      %v1521 = vld [vmem:[%s4] sm:$0xff]
      %v1522 = vld [vmem:[%s4 + $0x8] sm:$0xff]
      %v1523 = vld [vmem:[%s4 + $0x10] sm:$0xff]
      %v1524 = vld [vmem:[%s4 + $0x18] sm:$0xff]
      %v1525 = vld [vmem:[%s5] sm:$0x1]
      %v1527 = vlaneseq
      %v1528 = vshrl.u32 %v1527, 7
      %v1529 = vsub.s32 0, %v1528
      %v1530 = vrot.slane %v1525, %v1529
      %v1533 = vsel %vm586, %v1519, 0
      %v1536 = vsel %vm586, %v1520, 0
      %1538 = vmatprep.subr.mxu0 0.0
      %1539 = vmatpush1.msra.mxu0 %v1521
      %1540 = vmatprep.subr.mxu0 0.0
      %1541 = vmatpush1.msra.mxu0 %v1522
      %1542 = vmatprep.subr.mxu0 0.0
      %1543 = vmatpush1.msra.mxu0 %v1523
      %1544 = vmatprep.subr.mxu0 0.0
      %1545 = vmatpush1.msra.mxu0 %v1524
      %1546 = vmatprep.subr.mxu0 0.0
      %1547 = vmatpush1.msra.mxu0 0.0
      %1548 = vmatprep.subr.mxu0 0.0
      %1549 = vmatpush1.msra.mxu0 0.0
      %1550 = vmatprep.subr.mxu0 0.0
      %1551 = vmatpush1.msra.mxu0 0.0
      %1552 = vmatprep.subr.mxu0 0.0
      %1553 = vmatpush1.msra.mxu0 0.0
      %1554 = vmatprep.subr.mxu0 0.0
      %1555 = vmatpush1.msra.mxu0 0.0
      %1556 = vmatprep.subr.mxu0 0.0
      %1557 = vmatpush1.msra.mxu0 0.0
      %1558 = vmatprep.subr.mxu0 0.0
      %1559 = vmatpush1.msra.mxu0 0.0
      %1560 = vmatprep.subr.mxu0 0.0
      %1561 = vmatpush1.msra.mxu0 0.0
      %1562 = vmatprep.subr.mxu0 0.0
      %1563 = vmatpush1.msra.mxu0 0.0
      %1564 = vmatprep.subr.mxu0 0.0
      %1565 = vmatpush1.msra.mxu0 0.0
      %1566 = vmatprep.subr.mxu0 0.0
      %1567 = vmatpush1.msra.mxu0 0.0
      %1568 = vmatprep.subr.mxu0 0.0
      %1569 = vmatpush1.msra.mxu0 0.0
      %1570 = vmatprep.subr.mxu0 0.0
      %1571 = vmatpush1.msra.mxu0 0.0
      %1572 = vmatprep.subr.mxu0 0.0
      %1573 = vmatpush1.msra.mxu0 0.0
      %1574 = vmatprep.subr.mxu0 0.0
      %1575 = vmatpush1.msra.mxu0 0.0
      %1576 = vmatprep.subr.mxu0 0.0
      %1577 = vmatpush1.msra.mxu0 0.0
      %1578 = vmatprep.subr.mxu0 0.0
      %1579 = vmatpush1.msra.mxu0 0.0
      %1580 = vmatprep.subr.mxu0 0.0
      %1581 = vmatpush1.msra.mxu0 0.0
      %1582 = vmatprep.subr.mxu0 0.0
      %1583 = vmatpush1.msra.mxu0 0.0
      %1584 = vmatprep.subr.mxu0 0.0
      %1585 = vmatpush1.msra.mxu0 0.0
      %1586 = vmatprep.subr.mxu0 0.0
      %1587 = vmatpush1.msra.mxu0 0.0
      %1588 = vmatprep.subr.mxu0 0.0
      %1589 = vmatpush1.msra.mxu0 0.0
      %1590 = vmatprep.subr.mxu0 0.0
      %1591 = vmatpush1.msra.mxu0 0.0
      %1592 = vmatprep.subr.mxu0 0.0
      %1593 = vmatpush1.msra.mxu0 0.0
      %1594 = vmatprep.subr.mxu0 0.0
      %1595 = vmatpush1.msra.mxu0 0.0
      %1596 = vmatprep.subr.mxu0 0.0
      %1597 = vmatpush1.msra.mxu0 0.0
      %1598 = vmatprep.subr.mxu0 0.0
      %1599 = vmatpush1.msra.mxu0 0.0
      %1600 = vmatprep.subr.mxu0 0.0
      %1601 = vmatpush1.msra.mxu0 0.0
      %1602 = vmatprep.mubr.f32.mxu0 0.0
      %1603 = vmatmul.mubr.f32.gmra.mrb[0].mxu0 %v1533
      %v1604 = vpop.f32.mrb[0].mxu0
      %v1605 = vadd.f32 %v1530, %v1604
      %v1606 = vpop.f32.mrb[0].mxu0
      %1607 = vmatprep.mubr.f32.mxu0 0.0
      %1608 = vmatmul.mubr.f32.gmra.mrb[0].mxu0 %v1536
      %v1609 = vpop.f32.mrb[0].mxu0
      %v1610 = vadd.f32 %v1530, %v1609
      %v1611 = vpop.f32.mrb[0].mxu0
      %1612 = vdwg.mxu0
      %v1613 = vadd.f32 %v1605, %v572
      %v1614 = vadd.f32 %v1610, %v573
      %v1615 = vld [vmem:[%s6] sm:$0x1]
      %v1616 = vld [vmem:[%s7] sm:$0x1]
      %v1617 = vsel %vm586, %v1613, 0.0
      %1618 = vadd.xlane.f32.xlu0 %v1617
      %v1619 = vpop.xlane.xlu0 %1618
      %v1620 = vsel %vm586, %v1614, 0.0
      %1621 = vadd.xlane.f32.xlu0 %v1620
      %v1622 = vpop.xlane.xlu0 %1621
      %v1623 = vrcp.pop 32.0
      %v1624 = vmul.f32 %v1619, %v1623
      %v1625 = vmul.f32 %v1622, %v1623
      %v1626 = vsub.f32 %v1613, %v1624
      %v1627 = vsub.f32 %v1614, %v1625
      %v1628 = vmul.f32 %v1626, %v1626
      %v1629 = vmul.f32 %v1627, %v1627
      %v1630 = vsel %vm586, %v1628, 0.0
      %1631 = vadd.xlane.f32.xlu0 %v1630
      %v1632 = vpop.xlane.xlu0 %1631
      %v1633 = vsel %vm586, %v1629, 0.0
      %1634 = vadd.xlane.f32.xlu0 %v1633
      %v1635 = vpop.xlane.xlu0 %1634
      %v1636 = vmul.f32 %v1632, %v1623
      %v1637 = vmul.f32 %v1635, %v1623
      %v1638 = vadd.f32 %v1636, 1e-12
      %v1639 = vadd.f32 %v1637, 1e-12
      %v1640 = vrsqrt.pop %v1638
      %v1641 = vrsqrt.pop %v1639
      %v1642 = vmul.f32 %v1626, %v1640
      %v1643 = vmul.f32 %v1627, %v1641
      %v1645 = vlaneseq
      %v1646 = vshrl.u32 %v1645, 7
      %v1647 = vsub.s32 0, %v1646
      %v1648 = vrot.slane %v1615, %v1647
      %v1650 = vmul.f32 %v1642, %v1648
      %v1651 = vmul.f32 %v1643, %v1648
      %v1653 = vlaneseq
      %v1654 = vshrl.u32 %v1653, 7
      %v1655 = vsub.s32 0, %v1654
      %v1656 = vrot.slane %v1616, %v1655
      %v1658 = vadd.f32 %v1650, %v1656
      %v1659 = vadd.f32 %v1651, %v1656
      %v1660 = vld [vmem:[%s8] sm:$0xff]
      %v1661 = vld [vmem:[%s8 + $0x8] sm:$0xff]
      %v1662 = vld [vmem:[%s8 + $0x10] sm:$0xff]
      %v1663 = vld [vmem:[%s8 + $0x18] sm:$0xff]
      %v1664 = vld [vmem:[%s9] sm:$0x1]
      %v1666 = vlaneseq
      %v1667 = vshrl.u32 %v1666, 7
      %v1668 = vsub.s32 0, %v1667
      %v1669 = vrot.slane %v1664, %v1668
      %v1672 = vsel %vm586, %v1658, 0
      %v1675 = vsel %vm586, %v1659, 0
      %1677 = vmatprep.subr.mxu0 0.0
      %1678 = vmatpush1.msra.mxu0 %v1660
      %1679 = vmatprep.subr.mxu0 0.0
      %1680 = vmatpush1.msra.mxu0 %v1661
      %1681 = vmatprep.subr.mxu0 0.0
      %1682 = vmatpush1.msra.mxu0 %v1662
      %1683 = vmatprep.subr.mxu0 0.0
      %1684 = vmatpush1.msra.mxu0 %v1663
      %1685 = vmatprep.subr.mxu0 0.0
      %1686 = vmatpush1.msra.mxu0 0.0
      %1687 = vmatprep.subr.mxu0 0.0
      %1688 = vmatpush1.msra.mxu0 0.0
      %1689 = vmatprep.subr.mxu0 0.0
      %1690 = vmatpush1.msra.mxu0 0.0
      %1691 = vmatprep.subr.mxu0 0.0
      %1692 = vmatpush1.msra.mxu0 0.0
      %1693 = vmatprep.subr.mxu0 0.0
      %1694 = vmatpush1.msra.mxu0 0.0
      %1695 = vmatprep.subr.mxu0 0.0
      %1696 = vmatpush1.msra.mxu0 0.0
      %1697 = vmatprep.subr.mxu0 0.0
      %1698 = vmatpush1.msra.mxu0 0.0
      %1699 = vmatprep.subr.mxu0 0.0
      %1700 = vmatpush1.msra.mxu0 0.0
      %1701 = vmatprep.subr.mxu0 0.0
      %1702 = vmatpush1.msra.mxu0 0.0
      %1703 = vmatprep.subr.mxu0 0.0
      %1704 = vmatpush1.msra.mxu0 0.0
      %1705 = vmatprep.subr.mxu0 0.0
      %1706 = vmatpush1.msra.mxu0 0.0
      %1707 = vmatprep.subr.mxu0 0.0
      %1708 = vmatpush1.msra.mxu0 0.0
      %1709 = vmatprep.subr.mxu0 0.0
      %1710 = vmatpush1.msra.mxu0 0.0
      %1711 = vmatprep.subr.mxu0 0.0
      %1712 = vmatpush1.msra.mxu0 0.0
      %1713 = vmatprep.subr.mxu0 0.0
      %1714 = vmatpush1.msra.mxu0 0.0
      %1715 = vmatprep.subr.mxu0 0.0
      %1716 = vmatpush1.msra.mxu0 0.0
      %1717 = vmatprep.subr.mxu0 0.0
      %1718 = vmatpush1.msra.mxu0 0.0
      %1719 = vmatprep.subr.mxu0 0.0
      %1720 = vmatpush1.msra.mxu0 0.0
      %1721 = vmatprep.subr.mxu0 0.0
      %1722 = vmatpush1.msra.mxu0 0.0
      %1723 = vmatprep.subr.mxu0 0.0
      %1724 = vmatpush1.msra.mxu0 0.0
      %1725 = vmatprep.subr.mxu0 0.0
      %1726 = vmatpush1.msra.mxu0 0.0
      %1727 = vmatprep.subr.mxu0 0.0
      %1728 = vmatpush1.msra.mxu0 0.0
      %1729 = vmatprep.subr.mxu0 0.0
      %1730 = vmatpush1.msra.mxu0 0.0
      %1731 = vmatprep.subr.mxu0 0.0
      %1732 = vmatpush1.msra.mxu0 0.0
      %1733 = vmatprep.subr.mxu0 0.0
      %1734 = vmatpush1.msra.mxu0 0.0
      %1735 = vmatprep.subr.mxu0 0.0
      %1736 = vmatpush1.msra.mxu0 0.0
      %1737 = vmatprep.subr.mxu0 0.0
      %1738 = vmatpush1.msra.mxu0 0.0
      %1739 = vmatprep.subr.mxu0 0.0
      %1740 = vmatpush1.msra.mxu0 0.0
      %1741 = vmatprep.mubr.f32.mxu0 0.0
      %1742 = vmatmul.mubr.f32.gmra.mrb[0].mxu0 %v1672
      %v1743 = vpop.f32.mrb[0].mxu0
      %v1744 = vadd.f32 %v1669, %v1743
      %v1745 = vpop.f32.mrb[0].mxu0
      %1746 = vmatprep.mubr.f32.mxu0 0.0
      %1747 = vmatmul.mubr.f32.gmra.mrb[0].mxu0 %v1675
      %v1748 = vpop.f32.mrb[0].mxu0
      %v1749 = vadd.f32 %v1669, %v1748
      %v1750 = vpop.f32.mrb[0].mxu0
      %1751 = vdwg.mxu0
      %v1752 = vmul.f32 %v1744, %v1744
      %v1753 = vmul.f32 %v1749, %v1749
      %v1754 = vmul.f32 %v1744, %v1752
      %v1755 = vmul.f32 %v1749, %v1753
      %v1756 = vmul.f32 %v1754, 0.044715
      %v1757 = vmul.f32 %v1755, 0.044715
      %v1758 = vadd.f32 %v1744, %v1756
      %v1759 = vadd.f32 %v1749, %v1757
      %v1760 = vmul.f32 %v1758, 0.7978846
      %v1761 = vmul.f32 %v1759, 0.7978846
      %v1762 = vtanh.pop %v1760
      %v1763 = vtanh.pop %v1761
      %v1764 = vadd.f32 %v1762, 1.0
      %v1765 = vadd.f32 %v1763, 1.0
      %v1766 = vmul.f32 %v1764, 0.5
      %v1767 = vmul.f32 %v1765, 0.5
      %v1768 = vmul.f32 %v1744, %v1766
      %v1769 = vmul.f32 %v1749, %v1767
      %v1770 = vld [vmem:[%s10] sm:$0xff]
      %v1771 = vld [vmem:[%s10 + $0x8] sm:$0xff]
      %v1772 = vld [vmem:[%s10 + $0x10] sm:$0xff]
      %v1773 = vld [vmem:[%s10 + $0x18] sm:$0xff]
      %v1774 = vld [vmem:[%s10 + $0x20] sm:$0xff]
      %v1775 = vld [vmem:[%s10 + $0x28] sm:$0xff]
      %v1776 = vld [vmem:[%s10 + $0x30] sm:$0xff]
      %v1777 = vld [vmem:[%s10 + $0x38] sm:$0xff]
      %v1778 = vld [vmem:[%s11] sm:$0x1]
      %v1780 = vlaneseq
      %v1781 = vshrl.u32 %v1780, 7
      %v1782 = vsub.s32 0, %v1781
      %v1783 = vrot.slane %v1778, %v1782
      %vm1785 = vcmask 523264
      %v1787 = vsel %vm1785, %v1768, 0
      %v1790 = vsel %vm1785, %v1769, 0
      %1792 = vmatprep.subr.mxu0 0.0
      %1793 = vmatpush1.msra.mxu0 %v1770
      %1794 = vmatprep.subr.mxu0 0.0
      %1795 = vmatpush1.msra.mxu0 %v1771
      %1796 = vmatprep.subr.mxu0 0.0
      %1797 = vmatpush1.msra.mxu0 %v1772
      %1798 = vmatprep.subr.mxu0 0.0
      %1799 = vmatpush1.msra.mxu0 %v1773
      %1800 = vmatprep.subr.mxu0 0.0
      %1801 = vmatpush1.msra.mxu0 %v1774
      %1802 = vmatprep.subr.mxu0 0.0
      %1803 = vmatpush1.msra.mxu0 %v1775
      %1804 = vmatprep.subr.mxu0 0.0
      %1805 = vmatpush1.msra.mxu0 %v1776
      %1806 = vmatprep.subr.mxu0 0.0
      %1807 = vmatpush1.msra.mxu0 %v1777
      %1808 = vmatprep.subr.mxu0 0.0
      %1809 = vmatpush1.msra.mxu0 0.0
      %1810 = vmatprep.subr.mxu0 0.0
      %1811 = vmatpush1.msra.mxu0 0.0
      %1812 = vmatprep.subr.mxu0 0.0
      %1813 = vmatpush1.msra.mxu0 0.0
      %1814 = vmatprep.subr.mxu0 0.0
      %1815 = vmatpush1.msra.mxu0 0.0
      %1816 = vmatprep.subr.mxu0 0.0
      %1817 = vmatpush1.msra.mxu0 0.0
      %1818 = vmatprep.subr.mxu0 0.0
      %1819 = vmatpush1.msra.mxu0 0.0
      %1820 = vmatprep.subr.mxu0 0.0
      %1821 = vmatpush1.msra.mxu0 0.0
      %1822 = vmatprep.subr.mxu0 0.0
      %1823 = vmatpush1.msra.mxu0 0.0
      %1824 = vmatprep.subr.mxu0 0.0
      %1825 = vmatpush1.msra.mxu0 0.0
      %1826 = vmatprep.subr.mxu0 0.0
      %1827 = vmatpush1.msra.mxu0 0.0
      %1828 = vmatprep.subr.mxu0 0.0
      %1829 = vmatpush1.msra.mxu0 0.0
      %1830 = vmatprep.subr.mxu0 0.0
      %1831 = vmatpush1.msra.mxu0 0.0
      %1832 = vmatprep.subr.mxu0 0.0
      %1833 = vmatpush1.msra.mxu0 0.0
      %1834 = vmatprep.subr.mxu0 0.0
      %1835 = vmatpush1.msra.mxu0 0.0
      %1836 = vmatprep.subr.mxu0 0.0
      %1837 = vmatpush1.msra.mxu0 0.0
      %1838 = vmatprep.subr.mxu0 0.0
      %1839 = vmatpush1.msra.mxu0 0.0
      %1840 = vmatprep.subr.mxu0 0.0
      %1841 = vmatpush1.msra.mxu0 0.0
      %1842 = vmatprep.subr.mxu0 0.0
      %1843 = vmatpush1.msra.mxu0 0.0
      %1844 = vmatprep.subr.mxu0 0.0
      %1845 = vmatpush1.msra.mxu0 0.0
      %1846 = vmatprep.subr.mxu0 0.0
      %1847 = vmatpush1.msra.mxu0 0.0
      %1848 = vmatprep.subr.mxu0 0.0
      %1849 = vmatpush1.msra.mxu0 0.0
      %1850 = vmatprep.subr.mxu0 0.0
      %1851 = vmatpush1.msra.mxu0 0.0
      %1852 = vmatprep.subr.mxu0 0.0
      %1853 = vmatpush1.msra.mxu0 0.0
      %1854 = vmatprep.subr.mxu0 0.0
      %1855 = vmatpush1.msra.mxu0 0.0
      %1856 = vmatprep.mubr.f32.mxu0 0.0
      %1857 = vmatmul.mubr.f32.gmra.mrb[0].mxu0 %v1787
      %v1858 = vpop.f32.mrb[0].mxu0
      %v1859 = vadd.f32 %v1783, %v1858
      %v1860 = vpop.f32.mrb[0].mxu0
      %1861 = vmatprep.mubr.f32.mxu0 0.0
      %1862 = vmatmul.mubr.f32.gmra.mrb[0].mxu0 %v1790
      %v1863 = vpop.f32.mrb[0].mxu0
      %v1864 = vadd.f32 %v1783, %v1863
      %v1865 = vpop.f32.mrb[0].mxu0
      %1866 = vdwg.mxu0
      %v1867 = vadd.f32 %v1859, %v1658
      %v1868 = vadd.f32 %v1864, %v1659
      %v1869 = vld [vmem:[%s12] sm:$0x1]
      %v1870 = vld [vmem:[%s13] sm:$0x1]
      %v1871 = vsel %vm586, %v1867, 0.0
      %1872 = vadd.xlane.f32.xlu0 %v1871
      %v1873 = vpop.xlane.xlu0 %1872
      %v1874 = vsel %vm586, %v1868, 0.0
      %1875 = vadd.xlane.f32.xlu0 %v1874
      %v1876 = vpop.xlane.xlu0 %1875
      %v1877 = vmul.f32 %v1873, %v1623
      %v1878 = vmul.f32 %v1876, %v1623
      %v1879 = vsub.f32 %v1867, %v1877
      %v1880 = vsub.f32 %v1868, %v1878
      %v1881 = vmul.f32 %v1879, %v1879
      %v1882 = vmul.f32 %v1880, %v1880
      %v1883 = vsel %vm586, %v1881, 0.0
      %1884 = vadd.xlane.f32.xlu0 %v1883
      %v1885 = vpop.xlane.xlu0 %1884
      %v1886 = vsel %vm586, %v1882, 0.0
      %1887 = vadd.xlane.f32.xlu0 %v1886
      %v1888 = vpop.xlane.xlu0 %1887
      %v1889 = vmul.f32 %v1885, %v1623
      %v1890 = vmul.f32 %v1888, %v1623
      %v1891 = vadd.f32 %v1889, 1e-12
      %v1892 = vadd.f32 %v1890, 1e-12
      %v1893 = vrsqrt.pop %v1891
      %v1894 = vrsqrt.pop %v1892
      %v1895 = vmul.f32 %v1879, %v1893
      %v1896 = vmul.f32 %v1880, %v1894
      %v1898 = vlaneseq
      %v1899 = vshrl.u32 %v1898, 7
      %v1900 = vsub.s32 0, %v1899
      %v1901 = vrot.slane %v1869, %v1900
      %v1903 = vmul.f32 %v1895, %v1901
      %v1904 = vmul.f32 %v1896, %v1901
      %v1906 = vlaneseq
      %v1907 = vshrl.u32 %v1906, 7
      %v1908 = vsub.s32 0, %v1907
      %v1909 = vrot.slane %v1870, %v1908
      %v1911 = vadd.f32 %v1903, %v1909
      %v1912 = vadd.f32 %v1904, %v1909
      %1913 = vst.msk [vmem:[%s568] sm:$0xff] %vm586, %v1911
      %1914 = vst.msk [vmem:[%s568 + $0x8] sm:$0xff] %vm586, %v1912
      %v1915 = vld [vmem:[%s14] sm:$0xff]
      %v1916 = vld [vmem:[%s14 + $0x8] sm:$0xff]
      %v1917 = vld [vmem:[%s14 + $0x10] sm:$0xff]
      %v1918 = vld [vmem:[%s14 + $0x18] sm:$0xff]
      %v1919 = vld [vmem:[%s15] sm:$0x1]
      %v1921 = vsel %vm586, %v1911, 0
      %1923 = vmatprep.subr.mxu0 0.0
      %1924 = vmatpush1.msra.mxu0 %v1915
      %1925 = vmatprep.subr.mxu0 0.0
      %1926 = vmatpush1.msra.mxu0 %v1916
      %1927 = vmatprep.subr.mxu0 0.0
      %1928 = vmatpush1.msra.mxu0 %v1917
      %1929 = vmatprep.subr.mxu0 0.0
      %1930 = vmatpush1.msra.mxu0 %v1918
      %1931 = vmatprep.subr.mxu0 0.0
      %1932 = vmatpush1.msra.mxu0 0.0
      %1933 = vmatprep.subr.mxu0 0.0
      %1934 = vmatpush1.msra.mxu0 0.0
      %1935 = vmatprep.subr.mxu0 0.0
      %1936 = vmatpush1.msra.mxu0 0.0
      %1937 = vmatprep.subr.mxu0 0.0
      %1938 = vmatpush1.msra.mxu0 0.0
      %1939 = vmatprep.subr.mxu0 0.0
      %1940 = vmatpush1.msra.mxu0 0.0
      %1941 = vmatprep.subr.mxu0 0.0
      %1942 = vmatpush1.msra.mxu0 0.0
      %1943 = vmatprep.subr.mxu0 0.0
      %1944 = vmatpush1.msra.mxu0 0.0
      %1945 = vmatprep.subr.mxu0 0.0
      %1946 = vmatpush1.msra.mxu0 0.0
      %1947 = vmatprep.subr.mxu0 0.0
      %1948 = vmatpush1.msra.mxu0 0.0
      %1949 = vmatprep.subr.mxu0 0.0
      %1950 = vmatpush1.msra.mxu0 0.0
      %1951 = vmatprep.subr.mxu0 0.0
      %1952 = vmatpush1.msra.mxu0 0.0
      %1953 = vmatprep.subr.mxu0 0.0
      %1954 = vmatpush1.msra.mxu0 0.0
      %1955 = vmatprep.subr.mxu0 0.0
      %1956 = vmatpush1.msra.mxu0 0.0
      %1957 = vmatprep.subr.mxu0 0.0
      %1958 = vmatpush1.msra.mxu0 0.0
      %1959 = vmatprep.subr.mxu0 0.0
      %1960 = vmatpush1.msra.mxu0 0.0
      %1961 = vmatprep.subr.mxu0 0.0
      %1962 = vmatpush1.msra.mxu0 0.0
      %1963 = vmatprep.subr.mxu0 0.0
      %1964 = vmatpush1.msra.mxu0 0.0
      %1965 = vmatprep.subr.mxu0 0.0
      %1966 = vmatpush1.msra.mxu0 0.0
      %1967 = vmatprep.subr.mxu0 0.0
      %1968 = vmatpush1.msra.mxu0 0.0
      %1969 = vmatprep.subr.mxu0 0.0
      %1970 = vmatpush1.msra.mxu0 0.0
      %1971 = vmatprep.subr.mxu0 0.0
      %1972 = vmatpush1.msra.mxu0 0.0
      %1973 = vmatprep.subr.mxu0 0.0
      %1974 = vmatpush1.msra.mxu0 0.0
      %1975 = vmatprep.subr.mxu0 0.0
      %1976 = vmatpush1.msra.mxu0 0.0
      %1977 = vmatprep.subr.mxu0 0.0
      %1978 = vmatpush1.msra.mxu0 0.0
      %1979 = vmatprep.subr.mxu0 0.0
      %1980 = vmatpush1.msra.mxu0 0.0
      %1981 = vmatprep.subr.mxu0 0.0
      %1982 = vmatpush1.msra.mxu0 0.0
      %1983 = vmatprep.subr.mxu0 0.0
      %1984 = vmatpush1.msra.mxu0 0.0
      %1985 = vmatprep.subr.mxu0 0.0
      %1986 = vmatpush1.msra.mxu0 0.0
      %1987 = vmatprep.mubr.f32.mxu0 0.0
      %1988 = vmatmul.mubr.f32.gmra.mrb[0].mxu0 %v1921
      %v1989 = vpop.f32.mrb[0].mxu0
      %v1990 = vadd.f32 %v1919, %v1989
      %v1991 = vpop.f32.mrb[0].mxu0
      %1992 = vdwg.mxu0
      %v1993 = vtanh.pop %v1990
      %vm1994 = vcmask 253952
      %1995 = vst.msk [vmem:[%s571] sm:$0x1] %vm1994, %v1993
      %p1996 = scmp.lt.s32.totalorder %s29, 1
      %s1997 = scalar_select %p1996, %s29, 1
      %s1998 = smul.addr %s1997, 2
      %s1999 = smul.addr %s1998, 8
      %s2000 = scalar_lea.vmem %s16, %s1999
      %p2001 = scmp.lt.s32.totalorder %s29, 1
      %s2002 = scalar_select %p2001, %s29, 1
      %s2003 = scalar_lea.vmem %s17, %s2002
      // Predicated region
      $region85: #{som_dst_forward.2} parent=83 // pred_check
        %p2004 = pneg %p393
      $region86: #{som_dst_forward.2} parent=83 // pred_check_branch
        %2006 = sbr.rel (%p2004) target = $region88
      $region87: #{som_dst_forward.2} parent=83 // pred_region
        _
      $region88: #{som_dst_forward.2} parent=83 // pred_fallthru
        _
      // Predicated region
      $region89: #{som_dst_forward.2} parent=83 // pred_check
        %p2007 = pneg %p419
      $region90: #{som_dst_forward.2} parent=83 // pred_check_branch
        %2009 = sbr.rel (%p2007) target = $region92
      $region91: #{som_dst_forward.2} parent=83 // pred_region
        _
      $region92: #{som_dst_forward.2} parent=83 // pred_fallthru
        _
    $region84: #{som_dst_forward.2} parent=5 // pred_fallthru
      _
    %p2010 = scmp.le.s32.totalorder 2, %s24
    // Predicated region
    $region93: #{som_dst_forward.2} parent=5 // pred_check
      %p2011 = pneg %p2010
    $region94: #{som_dst_forward.2} parent=5 // pred_check_branch
      %2013 = sbr.rel (%p2011) target = $region96
    $region95: #{som_dst_forward.2} parent=5 // pred_region
      %s2014 = ssub.s32 %s24, 2
      // Predicated region
      $region97: #{som_dst_forward.2} parent=95 // pred_check
        %p2015 = pneg %p399
      $region98: #{som_dst_forward.2} parent=95 // pred_check_branch
        %2017 = sbr.rel (%p2015) target = $region100
      $region99: #{som_dst_forward.2} parent=95 // pred_region
        %p2018 = scmp.lt.s32.totalorder %s30, 1
        %s2019 = scalar_select %p2018, %s30, 1
        %s2020 = smul.addr %s2019, 2
        %s2021 = smul.addr %s2020, 8
        %s2022 = scalar_lea.vmem %s16, %s2021
      $region100: #{som_dst_forward.2} parent=95 // pred_fallthru
        _
      // Predicated region
      $region101: #{som_dst_forward.2} parent=95 // pred_check
        %p2023 = pneg %p425
      $region102: #{som_dst_forward.2} parent=95 // pred_check_branch
        %2025 = sbr.rel (%p2023) target = $region104
      $region103: #{som_dst_forward.2} parent=95 // pred_region
        %p2026 = scmp.lt.s32.totalorder %s30, 1
        %s2027 = scalar_select %p2026, %s30, 1
        %s2028 = scalar_lea.vmem %s17, %s2027
      $region104: #{som_dst_forward.2} parent=95 // pred_fallthru
        _
    $region96: #{som_dst_forward.2} parent=5 // pred_fallthru
      _
  $region6: #{som_dst_forward.2} parent=0 // loop_footer
    %s28 = sadd.s32 1, %s24
  $region7: #{som_dst_forward.2} parent=0 // loop_footer_branch
    %23 = sbr.rel target = $region3
  $region8: #{som_dst_forward.2} parent=0 // loop_exit
    _

// kernel: som_dst_forward.3
$region0: #{som_dst_forward.3}
  #allocation0 [shape = 'u32[]', space=smem, size = 0x4, offset = 0x4, fixed_abs, tag = 'smem constant byte address 0x4 - core index']
  #allocation1 [shape = 'u32[144,128]{1,0:T(1,128)}', space=vmem, size = 0x12000, scoped, tag = 'internal scratch']
  #allocation2 [shape = 'f32[1,32]{1,0:T(1,128)}', space=vmem, size = 0x200, scoped, tag = 'scratch operand']
  #allocation3 [shape = 'f32[1,1]{1,0:T(1,128)S(1)}', space=vmem, size = 0x200, scoped, tag = 'scoped memory for som_dst_forward.3']
  %s0 = inlined_call_operand.vmem [shape: f32[2,2,1,32], index: 0, kind: input, shape index: {}]
  %s1 = inlined_call_operand.vmem [shape: f32[2,16,32], index: 1, kind: input, shape index: {}]
  %s2 = inlined_call_operand.vmem [shape: f32[2,1,32], index: 2, kind: input, shape index: {}]
  %s3 = inlined_call_operand.vmem [shape: f32[2,1,16], index: 3, kind: input, shape index: {}]
  %s4 = inlined_call_operand.vmem [shape: f32[2,16,128], index: 4, kind: input, shape index: {}]
  %s5 = inlined_call_operand.vmem [shape: f32[128,32], index: 5, kind: input, shape index: {}]
  %s6 = inlined_call_operand.vmem [shape: f32[32,128], index: 6, kind: input, shape index: {}]
  %s7 = inlined_call_operand.vmem [shape: f32[32,96], index: 7, kind: input, shape index: {}]
  %s8 = inlined_call_operand.vmem [shape: f32[32,96], index: 8, kind: input, shape index: {}]
  %s9 = inlined_call_operand.vmem [shape: f32[1,96], index: 9, kind: input, shape index: {}]
  %s10 = inlined_call_operand.vmem [shape: f32[1,96], index: 10, kind: input, shape index: {}]
  %s11 = inlined_call_operand.vmem [shape: f32[96,1], index: 11, kind: input, shape index: {}]
  %s12 = inlined_call_operand.<no memory space> [shape: f32[1,1], index: 12, kind: input, shape index: {}]
  %s13 = inlined_call_operand.vmem [shape: f32[2,2,3,128], index: 13, kind: output, shape index: {}]
  %s14 = sld [smem:[#allocation0]]
  $region89: #{som_dst_forward.3} parent=0
    _
  %s16 = ssub.s32 1, %s14
  %s17 = scalar_select 0, %s16, %s14
  %v18 = vstv %s12
  %19 = vst [vmem:[#allocation3] sm:$0x1] %v18
  loop: start=0, step=1, limit=6
  $region2: #{som_dst_forward.3} parent=0 // loop_pre_header
    _
  $region3: #{som_dst_forward.3} parent=0 // loop_header
    %s21 = sphi 0, %s25
    %p22 = scmp.ge.s32.totalorder %s21, 6
    %s28 = sphi 0, %s40
    %s29 = sphi 0, %s36
    %s30 = sphi 0, %s28
    %s31 = sphi 0, %s29
    %s32 = sphi 0, %s30
    %s33 = sphi 0, %s31
    %s45 = sphi 0, %s47
    %s48 = sphi 0, %s45
    %s49 = sphi 0, %s48
    %s65 = sphi 0, %s49
    %s71 = sphi 0, %s73
    %s74 = sphi 0, %s71
    %s75 = sphi 0, %s74
    %s91 = sphi 0, %s75
    %s97 = sphi 0, %s99
    %s100 = sphi 0, %s97
    %s101 = sphi 0, %s100
    %s117 = sphi 0, %s101
    %s123 = sphi 0, %s125
    %s126 = sphi 0, %s123
    %s127 = sphi 0, %s126
    %s143 = sphi 0, %s127
    %s149 = sphi 0, %s151
    %s152 = sphi 0, %s149
    %s153 = sphi 0, %s152
    %s169 = sphi 0, %s153
    %s173 = sphi 0, %s173
    %s175 = sphi 0, %s173
    %s176 = sphi 0, %s175
    %s190 = sphi 0, %s176
    %s194 = sphi 0, %s194
    %s196 = sphi 0, %s194
    %s197 = sphi 0, %s196
    %s211 = sphi 0, %s197
    %s215 = sphi 0, %s215
    %s217 = sphi 0, %s215
    %s218 = sphi 0, %s217
    %s232 = sphi 0, %s218
    %s236 = sphi 0, %s236
    %s238 = sphi 0, %s236
    %s239 = sphi 0, %s238
    %s253 = sphi 0, %s239
    %s257 = sphi 0, %s257
    %s259 = sphi 0, %s257
    %s260 = sphi 0, %s259
    %s274 = sphi 0, %s260
    %s278 = sphi 0, %s278
    %s280 = sphi 0, %s278
    %s281 = sphi 0, %s280
    %s295 = sphi 0, %s281
    %s299 = sphi 0, %s299
    %s301 = sphi 0, %s299
    %s302 = sphi 0, %s301
    %s316 = sphi 0, %s302
    %s320 = sphi 0, %s320
    %s322 = sphi 0, %s320
    %s323 = sphi 0, %s322
    %s337 = sphi 0, %s323
    %s345 = sphi 0, %s347
    %s348 = sphi 0, %s345
    %s349 = sphi 0, %s348
    %s365 = sphi 0, %s349
  $region4: #{som_dst_forward.3} parent=0 // loop_header_branch
    %24 = sbr.rel (%p22) target = $region8
  $region5: #{som_dst_forward.3} parent=0 // loop_body
    %s26 = ssub.s32 %s21, 1
    %s27 = ssub.s32 %s21, 2
    %s34 = sadd.s32 1, %s29
    %p35 = scmp.ge.s32.totalorder %s34, 2
    %s36 = scalar_select %p35, 0, %s34
    %s37 = sadd.s32 1, %s28
    %s38 = scalar_select %p35, %s37, %s28
    %p39 = scmp.ge.s32.totalorder %s38, 2
    %s40 = scalar_select %p39, 0, %s38
    %s41 = ssub.s32 %s28, %s40
    %s42 = ssub.s32 %s29, %s36
    %s43 = sor.u32 %s41, %s42
    %p44 = scmp.eq.s32.totalorder %s43, 0
    %s46 = sadd.s32 %s45, 1
    %s47 = scalar_select %p44, %s45, %s46
    %p50 = pneg %p44
    %p51 = scmp.eq.s32.totalorder %s21, 3
    %p52 = por %p50, %p51
    %p53 = scmp.ne.s32.totalorder %s45, %s48
    %p54 = scmp.eq.s32.totalorder %s21, 0
    %p55 = por %p53, %p54
    %p56 = scmp.ne.s32.totalorder %s45, %s48
    %p57 = scmp.eq.s32.totalorder %s26, 3
    %p58 = por %p56, %p57
    %p59 = scmp.ne.s32.totalorder %s48, %s49
    %p60 = scmp.eq.s32.totalorder %s26, 0
    %p61 = por %p59, %p60
    %p62 = scmp.ne.s32.totalorder %s48, %s49
    %p63 = scmp.eq.s32.totalorder %s27, 3
    %p64 = por %p62, %p63
    %p66 = scmp.ne.s32.totalorder %s49, %s65
    %p67 = scmp.eq.s32.totalorder %s27, 0
    %p68 = por %p66, %p67
    %s69 = ssub.s32 %s28, %s40
    %p70 = scmp.eq.s32.totalorder %s69, 0
    %s72 = sadd.s32 %s71, 1
    %s73 = scalar_select %p70, %s71, %s72
    %p76 = pneg %p70
    %p77 = scmp.eq.s32.totalorder %s21, 3
    %p78 = por %p76, %p77
    %p79 = scmp.ne.s32.totalorder %s71, %s74
    %p80 = scmp.eq.s32.totalorder %s21, 0
    %p81 = por %p79, %p80
    %p82 = scmp.ne.s32.totalorder %s71, %s74
    %p83 = scmp.eq.s32.totalorder %s26, 3
    %p84 = por %p82, %p83
    %p85 = scmp.ne.s32.totalorder %s74, %s75
    %p86 = scmp.eq.s32.totalorder %s26, 0
    %p87 = por %p85, %p86
    %p88 = scmp.ne.s32.totalorder %s74, %s75
    %p89 = scmp.eq.s32.totalorder %s27, 3
    %p90 = por %p88, %p89
    %p92 = scmp.ne.s32.totalorder %s75, %s91
    %p93 = scmp.eq.s32.totalorder %s27, 0
    %p94 = por %p92, %p93
    %s95 = ssub.s32 %s28, %s40
    %p96 = scmp.eq.s32.totalorder %s95, 0
    %s98 = sadd.s32 %s97, 1
    %s99 = scalar_select %p96, %s97, %s98
    %p102 = pneg %p96
    %p103 = scmp.eq.s32.totalorder %s21, 3
    %p104 = por %p102, %p103
    %p105 = scmp.ne.s32.totalorder %s97, %s100
    %p106 = scmp.eq.s32.totalorder %s21, 0
    %p107 = por %p105, %p106
    %p108 = scmp.ne.s32.totalorder %s97, %s100
    %p109 = scmp.eq.s32.totalorder %s26, 3
    %p110 = por %p108, %p109
    %p111 = scmp.ne.s32.totalorder %s100, %s101
    %p112 = scmp.eq.s32.totalorder %s26, 0
    %p113 = por %p111, %p112
    %p114 = scmp.ne.s32.totalorder %s100, %s101
    %p115 = scmp.eq.s32.totalorder %s27, 3
    %p116 = por %p114, %p115
    %p118 = scmp.ne.s32.totalorder %s101, %s117
    %p119 = scmp.eq.s32.totalorder %s27, 0
    %p120 = por %p118, %p119
    %s121 = ssub.s32 %s28, %s40
    %p122 = scmp.eq.s32.totalorder %s121, 0
    %s124 = sadd.s32 %s123, 1
    %s125 = scalar_select %p122, %s123, %s124
    %p128 = pneg %p122
    %p129 = scmp.eq.s32.totalorder %s21, 3
    %p130 = por %p128, %p129
    %p131 = scmp.ne.s32.totalorder %s123, %s126
    %p132 = scmp.eq.s32.totalorder %s21, 0
    %p133 = por %p131, %p132
    %p134 = scmp.ne.s32.totalorder %s123, %s126
    %p135 = scmp.eq.s32.totalorder %s26, 3
    %p136 = por %p134, %p135
    %p137 = scmp.ne.s32.totalorder %s126, %s127
    %p138 = scmp.eq.s32.totalorder %s26, 0
    %p139 = por %p137, %p138
    %p140 = scmp.ne.s32.totalorder %s126, %s127
    %p141 = scmp.eq.s32.totalorder %s27, 3
    %p142 = por %p140, %p141
    %p144 = scmp.ne.s32.totalorder %s127, %s143
    %p145 = scmp.eq.s32.totalorder %s27, 0
    %p146 = por %p144, %p145
    %s147 = ssub.s32 %s28, %s40
    %p148 = scmp.eq.s32.totalorder %s147, 0
    %s150 = sadd.s32 %s149, 1
    %s151 = scalar_select %p148, %s149, %s150
    %p154 = pneg %p148
    %p155 = scmp.eq.s32.totalorder %s21, 3
    %p156 = por %p154, %p155
    %p157 = scmp.ne.s32.totalorder %s149, %s152
    %p158 = scmp.eq.s32.totalorder %s21, 0
    %p159 = por %p157, %p158
    %p160 = scmp.ne.s32.totalorder %s149, %s152
    %p161 = scmp.eq.s32.totalorder %s26, 3
    %p162 = por %p160, %p161
    %p163 = scmp.ne.s32.totalorder %s152, %s153
    %p164 = scmp.eq.s32.totalorder %s26, 0
    %p165 = por %p163, %p164
    %p166 = scmp.ne.s32.totalorder %s152, %s153
    %p167 = scmp.eq.s32.totalorder %s27, 3
    %p168 = por %p166, %p167
    %p170 = scmp.ne.s32.totalorder %s153, %s169
    %p171 = scmp.eq.s32.totalorder %s27, 0
    %p172 = por %p170, %p171
    %s174 = sadd.s32 %s173, 1
    %p177 = scmp.eq.s32.totalorder %s21, 3
    %p178 = scmp.ne.s32.totalorder %s173, %s175
    %p179 = scmp.eq.s32.totalorder %s21, 0
    %p180 = por %p178, %p179
    %p181 = scmp.ne.s32.totalorder %s173, %s175
    %p182 = scmp.eq.s32.totalorder %s26, 3
    %p183 = por %p181, %p182
    %p184 = scmp.ne.s32.totalorder %s175, %s176
    %p185 = scmp.eq.s32.totalorder %s26, 0
    %p186 = por %p184, %p185
    %p187 = scmp.ne.s32.totalorder %s175, %s176
    %p188 = scmp.eq.s32.totalorder %s27, 3
    %p189 = por %p187, %p188
    %p191 = scmp.ne.s32.totalorder %s176, %s190
    %p192 = scmp.eq.s32.totalorder %s27, 0
    %p193 = por %p191, %p192
    %s195 = sadd.s32 %s194, 1
    %p198 = scmp.eq.s32.totalorder %s21, 3
    %p199 = scmp.ne.s32.totalorder %s194, %s196
    %p200 = scmp.eq.s32.totalorder %s21, 0
    %p201 = por %p199, %p200
    %p202 = scmp.ne.s32.totalorder %s194, %s196
    %p203 = scmp.eq.s32.totalorder %s26, 3
    %p204 = por %p202, %p203
    %p205 = scmp.ne.s32.totalorder %s196, %s197
    %p206 = scmp.eq.s32.totalorder %s26, 0
    %p207 = por %p205, %p206
    %p208 = scmp.ne.s32.totalorder %s196, %s197
    %p209 = scmp.eq.s32.totalorder %s27, 3
    %p210 = por %p208, %p209
    %p212 = scmp.ne.s32.totalorder %s197, %s211
    %p213 = scmp.eq.s32.totalorder %s27, 0
    %p214 = por %p212, %p213
    %s216 = sadd.s32 %s215, 1
    %p219 = scmp.eq.s32.totalorder %s21, 3
    %p220 = scmp.ne.s32.totalorder %s215, %s217
    %p221 = scmp.eq.s32.totalorder %s21, 0
    %p222 = por %p220, %p221
    %p223 = scmp.ne.s32.totalorder %s215, %s217
    %p224 = scmp.eq.s32.totalorder %s26, 3
    %p225 = por %p223, %p224
    %p226 = scmp.ne.s32.totalorder %s217, %s218
    %p227 = scmp.eq.s32.totalorder %s26, 0
    %p228 = por %p226, %p227
    %p229 = scmp.ne.s32.totalorder %s217, %s218
    %p230 = scmp.eq.s32.totalorder %s27, 3
    %p231 = por %p229, %p230
    %p233 = scmp.ne.s32.totalorder %s218, %s232
    %p234 = scmp.eq.s32.totalorder %s27, 0
    %p235 = por %p233, %p234
    %s237 = sadd.s32 %s236, 1
    %p240 = scmp.eq.s32.totalorder %s21, 3
    %p241 = scmp.ne.s32.totalorder %s236, %s238
    %p242 = scmp.eq.s32.totalorder %s21, 0
    %p243 = por %p241, %p242
    %p244 = scmp.ne.s32.totalorder %s236, %s238
    %p245 = scmp.eq.s32.totalorder %s26, 3
    %p246 = por %p244, %p245
    %p247 = scmp.ne.s32.totalorder %s238, %s239
    %p248 = scmp.eq.s32.totalorder %s26, 0
    %p249 = por %p247, %p248
    %p250 = scmp.ne.s32.totalorder %s238, %s239
    %p251 = scmp.eq.s32.totalorder %s27, 3
    %p252 = por %p250, %p251
    %p254 = scmp.ne.s32.totalorder %s239, %s253
    %p255 = scmp.eq.s32.totalorder %s27, 0
    %p256 = por %p254, %p255
    %s258 = sadd.s32 %s257, 1
    %p261 = scmp.eq.s32.totalorder %s21, 3
    %p262 = scmp.ne.s32.totalorder %s257, %s259
    %p263 = scmp.eq.s32.totalorder %s21, 0
    %p264 = por %p262, %p263
    %p265 = scmp.ne.s32.totalorder %s257, %s259
    %p266 = scmp.eq.s32.totalorder %s26, 3
    %p267 = por %p265, %p266
    %p268 = scmp.ne.s32.totalorder %s259, %s260
    %p269 = scmp.eq.s32.totalorder %s26, 0
    %p270 = por %p268, %p269
    %p271 = scmp.ne.s32.totalorder %s259, %s260
    %p272 = scmp.eq.s32.totalorder %s27, 3
    %p273 = por %p271, %p272
    %p275 = scmp.ne.s32.totalorder %s260, %s274
    %p276 = scmp.eq.s32.totalorder %s27, 0
    %p277 = por %p275, %p276
    %s279 = sadd.s32 %s278, 1
    %p282 = scmp.eq.s32.totalorder %s21, 3
    %p283 = scmp.ne.s32.totalorder %s278, %s280
    %p284 = scmp.eq.s32.totalorder %s21, 0
    %p285 = por %p283, %p284
    %p286 = scmp.ne.s32.totalorder %s278, %s280
    %p287 = scmp.eq.s32.totalorder %s26, 3
    %p288 = por %p286, %p287
    %p289 = scmp.ne.s32.totalorder %s280, %s281
    %p290 = scmp.eq.s32.totalorder %s26, 0
    %p291 = por %p289, %p290
    %p292 = scmp.ne.s32.totalorder %s280, %s281
    %p293 = scmp.eq.s32.totalorder %s27, 3
    %p294 = por %p292, %p293
    %p296 = scmp.ne.s32.totalorder %s281, %s295
    %p297 = scmp.eq.s32.totalorder %s27, 0
    %p298 = por %p296, %p297
    %s300 = sadd.s32 %s299, 1
    %p303 = scmp.eq.s32.totalorder %s21, 3
    %p304 = scmp.ne.s32.totalorder %s299, %s301
    %p305 = scmp.eq.s32.totalorder %s21, 0
    %p306 = por %p304, %p305
    %p307 = scmp.ne.s32.totalorder %s299, %s301
    %p308 = scmp.eq.s32.totalorder %s26, 3
    %p309 = por %p307, %p308
    %p310 = scmp.ne.s32.totalorder %s301, %s302
    %p311 = scmp.eq.s32.totalorder %s26, 0
    %p312 = por %p310, %p311
    %p313 = scmp.ne.s32.totalorder %s301, %s302
    %p314 = scmp.eq.s32.totalorder %s27, 3
    %p315 = por %p313, %p314
    %p317 = scmp.ne.s32.totalorder %s302, %s316
    %p318 = scmp.eq.s32.totalorder %s27, 0
    %p319 = por %p317, %p318
    %s321 = sadd.s32 %s320, 1
    %p324 = scmp.eq.s32.totalorder %s21, 3
    %p325 = scmp.ne.s32.totalorder %s320, %s322
    %p326 = scmp.eq.s32.totalorder %s21, 0
    %p327 = por %p325, %p326
    %p328 = scmp.ne.s32.totalorder %s320, %s322
    %p329 = scmp.eq.s32.totalorder %s26, 3
    %p330 = por %p328, %p329
    %p331 = scmp.ne.s32.totalorder %s322, %s323
    %p332 = scmp.eq.s32.totalorder %s26, 0
    %p333 = por %p331, %p332
    %p334 = scmp.ne.s32.totalorder %s322, %s323
    %p335 = scmp.eq.s32.totalorder %s27, 3
    %p336 = por %p334, %p335
    %p338 = scmp.ne.s32.totalorder %s323, %s337
    %p339 = scmp.eq.s32.totalorder %s27, 0
    %p340 = por %p338, %p339
    %s341 = ssub.s32 %s28, %s40
    %s342 = ssub.s32 %s29, %s36
    %s343 = sor.u32 %s341, %s342
    %p344 = scmp.eq.s32.totalorder %s343, 0
    %s346 = sadd.s32 %s345, 1
    %s347 = scalar_select %p344, %s345, %s346
    %p350 = pneg %p344
    %p351 = scmp.eq.s32.totalorder %s21, 3
    %p352 = por %p350, %p351
    %p353 = scmp.ne.s32.totalorder %s345, %s348
    %p354 = scmp.eq.s32.totalorder %s21, 0
    %p355 = por %p353, %p354
    %p356 = scmp.ne.s32.totalorder %s345, %s348
    %p357 = scmp.eq.s32.totalorder %s26, 3
    %p358 = por %p356, %p357
    %p359 = scmp.ne.s32.totalorder %s348, %s349
    %p360 = scmp.eq.s32.totalorder %s26, 0
    %p361 = por %p359, %p360
    %p362 = scmp.ne.s32.totalorder %s348, %s349
    %p363 = scmp.eq.s32.totalorder %s27, 3
    %p364 = por %p362, %p363
    %p366 = scmp.ne.s32.totalorder %s349, %s365
    %p367 = scmp.eq.s32.totalorder %s27, 0
    %p368 = por %p366, %p367
    %p369 = scmp.le.s32.totalorder 1, %s21
    %p370 = scmp.lt.s32.totalorder %s21, 5
    %p371 = pnand %p369, %p370
    %p372 = pneg %p371
    // Predicated region
    $region9: #{som_dst_forward.3} parent=5 // pred_check
      _
    $region10: #{som_dst_forward.3} parent=5 // pred_check_branch
      %374 = sbr.rel (%p371) target = $region12
    $region11: #{som_dst_forward.3} parent=5 // pred_region
      %s375 = ssub.s32 %s21, 1
      // Predicated region
      $region13: #{som_dst_forward.3} parent=11 // pred_check
        %p376 = pneg %p186
      $region14: #{som_dst_forward.3} parent=11 // pred_check_branch
        %378 = sbr.rel (%p376) target = $region16
      $region15: #{som_dst_forward.3} parent=11 // pred_region
        _
      $region16: #{som_dst_forward.3} parent=11 // pred_fallthru
        _
      // Predicated region
      $region17: #{som_dst_forward.3} parent=11 // pred_check
        %p379 = pneg %p207
      $region18: #{som_dst_forward.3} parent=11 // pred_check_branch
        %381 = sbr.rel (%p379) target = $region20
      $region19: #{som_dst_forward.3} parent=11 // pred_region
        _
      $region20: #{som_dst_forward.3} parent=11 // pred_fallthru
        _
      // Predicated region
      $region21: #{som_dst_forward.3} parent=11 // pred_check
        %p382 = pneg %p228
      $region22: #{som_dst_forward.3} parent=11 // pred_check_branch
        %384 = sbr.rel (%p382) target = $region24
      $region23: #{som_dst_forward.3} parent=11 // pred_region
        _
      $region24: #{som_dst_forward.3} parent=11 // pred_fallthru
        _
      // Predicated region
      $region25: #{som_dst_forward.3} parent=11 // pred_check
        %p385 = pneg %p249
      $region26: #{som_dst_forward.3} parent=11 // pred_check_branch
        %387 = sbr.rel (%p385) target = $region28
      $region27: #{som_dst_forward.3} parent=11 // pred_region
        _
      $region28: #{som_dst_forward.3} parent=11 // pred_fallthru
        _
      // Predicated region
      $region29: #{som_dst_forward.3} parent=11 // pred_check
        %p388 = pneg %p270
      $region30: #{som_dst_forward.3} parent=11 // pred_check_branch
        %390 = sbr.rel (%p388) target = $region32
      $region31: #{som_dst_forward.3} parent=11 // pred_region
        _
      $region32: #{som_dst_forward.3} parent=11 // pred_fallthru
        _
      // Predicated region
      $region33: #{som_dst_forward.3} parent=11 // pred_check
        %p391 = pneg %p291
      $region34: #{som_dst_forward.3} parent=11 // pred_check_branch
        %393 = sbr.rel (%p391) target = $region36
      $region35: #{som_dst_forward.3} parent=11 // pred_region
        _
      $region36: #{som_dst_forward.3} parent=11 // pred_fallthru
        _
      // Predicated region
      $region37: #{som_dst_forward.3} parent=11 // pred_check
        %p394 = pneg %p312
      $region38: #{som_dst_forward.3} parent=11 // pred_check_branch
        %396 = sbr.rel (%p394) target = $region40
      $region39: #{som_dst_forward.3} parent=11 // pred_region
        _
      $region40: #{som_dst_forward.3} parent=11 // pred_fallthru
        _
      // Predicated region
      $region41: #{som_dst_forward.3} parent=11 // pred_check
        %p397 = pneg %p333
      $region42: #{som_dst_forward.3} parent=11 // pred_check_branch
        %399 = sbr.rel (%p397) target = $region44
      $region43: #{som_dst_forward.3} parent=11 // pred_region
        _
      $region44: #{som_dst_forward.3} parent=11 // pred_fallthru
        _
    $region12: #{som_dst_forward.3} parent=5 // pred_fallthru
      _
    %p400 = scmp.lt.s32.totalorder %s21, 4
    // Predicated region
    $region45: #{som_dst_forward.3} parent=5 // pred_check
      %p401 = pneg %p400
    $region46: #{som_dst_forward.3} parent=5 // pred_check_branch
      %403 = sbr.rel (%p401) target = $region48
    $region47: #{som_dst_forward.3} parent=5 // pred_region
      // Predicated region
      $region49: #{som_dst_forward.3} parent=47 // pred_check
        %p404 = pneg %p55
      $region50: #{som_dst_forward.3} parent=47 // pred_check_branch
        %406 = sbr.rel (%p404) target = $region52
      $region51: #{som_dst_forward.3} parent=47 // pred_region
        %p407 = scmp.lt.s32.totalorder %s28, 1
        %s408 = scalar_select %p407, %s28, 1
        %p409 = scmp.lt.s32.totalorder %s29, 1
        %s410 = scalar_select %p409, %s29, 1
        %s411 = smul.addr %s408, 2
        %s412 = sadd.s32 %s410, %s411
        %s413 = scalar_lea.vmem %s0, %s412
      $region52: #{som_dst_forward.3} parent=47 // pred_fallthru
        _
      // Predicated region
      $region53: #{som_dst_forward.3} parent=47 // pred_check
        %p414 = pneg %p81
      $region54: #{som_dst_forward.3} parent=47 // pred_check_branch
        %416 = sbr.rel (%p414) target = $region56
      $region55: #{som_dst_forward.3} parent=47 // pred_region
        %p417 = scmp.lt.s32.totalorder %s28, 1
        %s418 = scalar_select %p417, %s28, 1
        %s419 = smul.addr %s418, 2
        %s420 = smul.addr %s419, 8
        %s421 = scalar_lea.vmem %s1, %s420
      $region56: #{som_dst_forward.3} parent=47 // pred_fallthru
        _
      // Predicated region
      $region57: #{som_dst_forward.3} parent=47 // pred_check
        %p422 = pneg %p107
      $region58: #{som_dst_forward.3} parent=47 // pred_check_branch
        %424 = sbr.rel (%p422) target = $region60
      $region59: #{som_dst_forward.3} parent=47 // pred_region
        %p425 = scmp.lt.s32.totalorder %s28, 1
        %s426 = scalar_select %p425, %s28, 1
        %s427 = scalar_lea.vmem %s2, %s426
      $region60: #{som_dst_forward.3} parent=47 // pred_fallthru
        _
      // Predicated region
      $region61: #{som_dst_forward.3} parent=47 // pred_check
        %p428 = pneg %p133
      $region62: #{som_dst_forward.3} parent=47 // pred_check_branch
        %430 = sbr.rel (%p428) target = $region64
      $region63: #{som_dst_forward.3} parent=47 // pred_region
        %p431 = scmp.lt.s32.totalorder %s28, 1
        %s432 = scalar_select %p431, %s28, 1
        %s433 = scalar_lea.vmem %s3, %s432
      $region64: #{som_dst_forward.3} parent=47 // pred_fallthru
        _
      // Predicated region
      $region65: #{som_dst_forward.3} parent=47 // pred_check
        %p434 = pneg %p159
      $region66: #{som_dst_forward.3} parent=47 // pred_check_branch
        %436 = sbr.rel (%p434) target = $region68
      $region67: #{som_dst_forward.3} parent=47 // pred_region
        %p437 = scmp.lt.s32.totalorder %s28, 1
        %s438 = scalar_select %p437, %s28, 1
        %s439 = smul.addr %s438, 2
        %s440 = smul.addr %s439, 8
        %s441 = scalar_lea.vmem %s4, %s440
      $region68: #{som_dst_forward.3} parent=47 // pred_fallthru
        _
    $region48: #{som_dst_forward.3} parent=5 // pred_fallthru
      _
    %p442 = scmp.le.s32.totalorder 1, %s21
    %p443 = scmp.lt.s32.totalorder %s21, 5
    %p444 = pnand %p442, %p443
    %p445 = pneg %p444
    // Predicated region
    $region69: #{som_dst_forward.3} parent=5 // pred_check
      _
    $region70: #{som_dst_forward.3} parent=5 // pred_check_branch
      %447 = sbr.rel (%p444) target = $region72
    $region71: #{som_dst_forward.3} parent=5 // pred_region
      %s448 = ssub.s32 %s21, 1
      %p449 = scmp.lt.s32.totalorder %s30, 1
      %s450 = scalar_select %p449, %s30, 1
      %p451 = scmp.lt.s32.totalorder %s31, 1
      %s452 = scalar_select %p451, %s31, 1
      %s453 = smul.addr %s450, 2
      %s454 = sadd.s32 %s452, %s453
      %s455 = scalar_lea.vmem %s0, %s454
      %p456 = pneg %p61
      %p457 = pneg %p58
      %p458 = scmp.lt.s32.totalorder %s30, 1
      %s459 = scalar_select %p458, %s30, 1
      %s460 = smul.addr %s459, 2
      %s461 = smul.addr %s460, 8
      %s462 = scalar_lea.vmem %s1, %s461
      %p463 = pneg %p87
      %p464 = pneg %p84
      %p465 = scmp.lt.s32.totalorder %s30, 1
      %s466 = scalar_select %p465, %s30, 1
      %s467 = scalar_lea.vmem %s2, %s466
      %p468 = pneg %p113
      %p469 = pneg %p110
      %p470 = scmp.lt.s32.totalorder %s30, 1
      %s471 = scalar_select %p470, %s30, 1
      %s472 = scalar_lea.vmem %s3, %s471
      %p473 = pneg %p139
      %p474 = pneg %p136
      %p475 = scmp.lt.s32.totalorder %s30, 1
      %s476 = scalar_select %p475, %s30, 1
      %s477 = smul.addr %s476, 2
      %s478 = smul.addr %s477, 8
      %s479 = scalar_lea.vmem %s4, %s478
      %p480 = pneg %p165
      %p481 = pneg %p162
      %p482 = pneg %p186
      %p483 = pneg %p183
      %p484 = pneg %p207
      %p485 = pneg %p204
      %p486 = pneg %p228
      %p487 = pneg %p225
      %p488 = pneg %p249
      %p489 = pneg %p246
      %p490 = pneg %p270
      %p491 = pneg %p267
      %p492 = pneg %p291
      %p493 = pneg %p288
      %p494 = pneg %p312
      %p495 = pneg %p309
      %p496 = pneg %p333
      %p497 = pneg %p330
      %p498 = pneg %p361
      %p499 = pneg %p358
      %p500 = scmp.lt.s32.totalorder %s30, 1
      %s501 = scalar_select %p500, %s30, 1
      %p502 = scmp.lt.s32.totalorder %s31, 1
      %s503 = scalar_select %p502, %s31, 1
      %s504 = smul.addr %s501, 2
      %s505 = sadd.s32 %s503, %s504
      %s506 = smul.addr %s505, 4
      %s507 = scalar_lea.vmem %s13, %s506
      %p508 = scmp.lt.s32.totalorder %s30, 1
      %s509 = scalar_select %p508, %s30, 1
      %p510 = scmp.lt.s32.totalorder %s31, 1
      %s511 = scalar_select %p510, %s31, 1
      %s512 = smul.addr %s509, 2
      %s513 = sadd.s32 %s511, %s512
      %s514 = scalar_lea.vmem %s0, %s513
      %p515 = scmp.lt.s32.totalorder %s30, 1
      %s516 = scalar_select %p515, %s30, 1
      %s517 = smul.addr %s516, 2
      %s518 = smul.addr %s517, 8
      %s519 = scalar_lea.vmem %s1, %s518
      %p520 = scmp.lt.s32.totalorder %s30, 1
      %s521 = scalar_select %p520, %s30, 1
      %s522 = scalar_lea.vmem %s2, %s521
      %p523 = scmp.lt.s32.totalorder %s30, 1
      %s524 = scalar_select %p523, %s30, 1
      %s525 = scalar_lea.vmem %s3, %s524
      %p526 = scmp.lt.s32.totalorder %s30, 1
      %s527 = scalar_select %p526, %s30, 1
      %s528 = smul.addr %s527, 2
      %s529 = smul.addr %s528, 8
      %s530 = scalar_lea.vmem %s4, %s529
      %p531 = scmp.lt.s32.totalorder %s30, 1
      %s532 = scalar_select %p531, %s30, 1
      %p533 = scmp.lt.s32.totalorder %s31, 1
      %s534 = scalar_select %p533, %s31, 1
      %s535 = smul.addr %s532, 2
      %s536 = sadd.s32 %s534, %s535
      %s537 = smul.addr %s536, 4
      %s538 = scalar_lea.vmem %s13, %s537
      %p539 = scmp.eq.s32.totalorder %s31, 0
      // Predicated region
      $region73: #{som_dst_forward.3} parent=71 // pred_check
        %p540 = pneg %p539
      $region74: #{som_dst_forward.3} parent=71 // pred_check_branch
        %542 = sbr.rel (%p540) target = $region76
      $region75: #{som_dst_forward.3} parent=71 // pred_region
        %v543 = vld [vmem:[%s522] sm:$0x1]
        %vm544 = vcmask 253952
        %545 = vst.msk [vmem:[#allocation2] sm:$0x1] %vm544, %v543
      $region76: #{som_dst_forward.3} parent=71 // pred_fallthru
        _
      %v546 = vld [vmem:[%s519] sm:$0xff]
      %v547 = vld [vmem:[%s519 + $0x8] sm:$0xff]
      %v548 = vld [vmem:[%s525] sm:$0x1]
      %v549 = vld [vmem:[%s530] sm:$0xff]
      %v550 = vld [vmem:[%s530 + $0x8] sm:$0xff]
      %v551 = vld [vmem:[%s5] sm:$0xff]
      %v552 = vld [vmem:[%s5 + $0x8] sm:$0xff]
      %v553 = vld [vmem:[%s5 + $0x10] sm:$0xff]
      %v554 = vld [vmem:[%s5 + $0x18] sm:$0xff]
      %v555 = vld [vmem:[%s5 + $0x20] sm:$0xff]
      %v556 = vld [vmem:[%s5 + $0x28] sm:$0xff]
      %v557 = vld [vmem:[%s5 + $0x30] sm:$0xff]
      %v558 = vld [vmem:[%s5 + $0x38] sm:$0xff]
      %v559 = vld [vmem:[%s5 + $0x40] sm:$0xff]
      %v560 = vld [vmem:[%s5 + $0x48] sm:$0xff]
      %v561 = vld [vmem:[%s5 + $0x50] sm:$0xff]
      %v562 = vld [vmem:[%s5 + $0x58] sm:$0xff]
      %v563 = vld [vmem:[%s5 + $0x60] sm:$0xff]
      %v564 = vld [vmem:[%s5 + $0x68] sm:$0xff]
      %v565 = vld [vmem:[%s5 + $0x70] sm:$0xff]
      %v566 = vld [vmem:[%s5 + $0x78] sm:$0xff]
      %v567 = vld [vmem:[%s6] sm:$0xff]
      %v568 = vld [vmem:[%s6 + $0x8] sm:$0xff]
      %v569 = vld [vmem:[%s6 + $0x10] sm:$0xff]
      %v570 = vld [vmem:[%s6 + $0x18] sm:$0xff]
      %v571 = vld [vmem:[%s7] sm:$0xff]
      %v572 = vld [vmem:[%s7 + $0x8] sm:$0xff]
      %v573 = vld [vmem:[%s7 + $0x10] sm:$0xff]
      %v574 = vld [vmem:[%s7 + $0x18] sm:$0xff]
      %v575 = vld [vmem:[%s8] sm:$0xff]
      %v576 = vld [vmem:[%s8 + $0x8] sm:$0xff]
      %v577 = vld [vmem:[%s8 + $0x10] sm:$0xff]
      %v578 = vld [vmem:[%s8 + $0x18] sm:$0xff]
      %v579 = vld [vmem:[%s9] sm:$0x1]
      %v580 = vld [vmem:[%s10] sm:$0x1]
      %v581 = vld [vmem:[%s11] sm:$0xff]
      %v582 = vld [vmem:[%s11 + $0x8] sm:$0xff]
      %v583 = vld [vmem:[%s11 + $0x10] sm:$0xff]
      %v584 = vld [vmem:[%s11 + $0x18] sm:$0xff]
      %v585 = vld [vmem:[%s11 + $0x20] sm:$0xff]
      %v586 = vld [vmem:[%s11 + $0x28] sm:$0xff]
      %v587 = vld [vmem:[%s11 + $0x30] sm:$0xff]
      %v588 = vld [vmem:[%s11 + $0x38] sm:$0xff]
      %v589 = vld [vmem:[%s11 + $0x40] sm:$0xff]
      %v590 = vld [vmem:[%s11 + $0x48] sm:$0xff]
      %v591 = vld [vmem:[%s11 + $0x50] sm:$0xff]
      %v592 = vld [vmem:[%s11 + $0x58] sm:$0xff]
      %v593 = vld [vmem:[#allocation3] sm:$0x1]
      %v594 = vld [vmem:[%s514] sm:$0x1]
      %v595 = vld [vmem:[#allocation2] sm:$0x1]
      %v596 = vlaneseq
      %v597 = vand.u32 %v596, 127
      %vm598 = vcmask 261120
      %v600 = vsel %vm598, %v594, 0
      %602 = vmatprep.subr.mxu0 0.0
      %603 = vmatpush1.msra.mxu0 %v571
      %604 = vmatprep.subr.mxu0 0.0
      %605 = vmatpush1.msra.mxu0 %v572
      %606 = vmatprep.subr.mxu0 0.0
      %607 = vmatpush1.msra.mxu0 %v573
      %608 = vmatprep.subr.mxu0 0.0
      %609 = vmatpush1.msra.mxu0 %v574
      %610 = vmatprep.subr.mxu0 0.0
      %611 = vmatpush1.msra.mxu0 0.0
      %612 = vmatprep.subr.mxu0 0.0
      %613 = vmatpush1.msra.mxu0 0.0
      %614 = vmatprep.subr.mxu0 0.0
      %615 = vmatpush1.msra.mxu0 0.0
      %616 = vmatprep.subr.mxu0 0.0
      %617 = vmatpush1.msra.mxu0 0.0
      %618 = vmatprep.subr.mxu0 0.0
      %619 = vmatpush1.msra.mxu0 0.0
      %620 = vmatprep.subr.mxu0 0.0
      %621 = vmatpush1.msra.mxu0 0.0
      %622 = vmatprep.subr.mxu0 0.0
      %623 = vmatpush1.msra.mxu0 0.0
      %624 = vmatprep.subr.mxu0 0.0
      %625 = vmatpush1.msra.mxu0 0.0
      %626 = vmatprep.subr.mxu0 0.0
      %627 = vmatpush1.msra.mxu0 0.0
      %628 = vmatprep.subr.mxu0 0.0
      %629 = vmatpush1.msra.mxu0 0.0
      %630 = vmatprep.subr.mxu0 0.0
      %631 = vmatpush1.msra.mxu0 0.0
      %632 = vmatprep.subr.mxu0 0.0
      %633 = vmatpush1.msra.mxu0 0.0
      %634 = vmatprep.subr.mxu0 0.0
      %635 = vmatpush1.msra.mxu0 0.0
      %636 = vmatprep.subr.mxu0 0.0
      %637 = vmatpush1.msra.mxu0 0.0
      %638 = vmatprep.subr.mxu0 0.0
      %639 = vmatpush1.msra.mxu0 0.0
      %640 = vmatprep.subr.mxu0 0.0
      %641 = vmatpush1.msra.mxu0 0.0
      %642 = vmatprep.subr.mxu0 0.0
      %643 = vmatpush1.msra.mxu0 0.0
      %644 = vmatprep.subr.mxu0 0.0
      %645 = vmatpush1.msra.mxu0 0.0
      %646 = vmatprep.subr.mxu0 0.0
      %647 = vmatpush1.msra.mxu0 0.0
      %648 = vmatprep.subr.mxu0 0.0
      %649 = vmatpush1.msra.mxu0 0.0
      %650 = vmatprep.subr.mxu0 0.0
      %651 = vmatpush1.msra.mxu0 0.0
      %652 = vmatprep.subr.mxu0 0.0
      %653 = vmatpush1.msra.mxu0 0.0
      %654 = vmatprep.subr.mxu0 0.0
      %655 = vmatpush1.msra.mxu0 0.0
      %656 = vmatprep.subr.mxu0 0.0
      %657 = vmatpush1.msra.mxu0 0.0
      %658 = vmatprep.subr.mxu0 0.0
      %659 = vmatpush1.msra.mxu0 0.0
      %660 = vmatprep.subr.mxu0 0.0
      %661 = vmatpush1.msra.mxu0 0.0
      %662 = vmatprep.subr.mxu0 0.0
      %663 = vmatpush1.msra.mxu0 0.0
      %664 = vmatprep.subr.mxu0 0.0
      %665 = vmatpush1.msra.mxu0 0.0
      %666 = vmatprep.mubr.f32.mxu0 0.0
      %667 = vmatmul.mubr.f32.gmra.mrb[0].mxu0 %v600
      %v668 = vpop.f32.mrb[0].mxu0
      %v669 = vadd.f32 %v579, %v668
      %v670 = vpop.f32.mrb[0].mxu0
      %671 = vdwg.mxu0
      %v673 = vsel %vm598, %v595, 0
      %675 = vmatprep.subr.mxu0 0.0
      %676 = vmatpush1.msra.mxu0 %v575
      %677 = vmatprep.subr.mxu0 0.0
      %678 = vmatpush1.msra.mxu0 %v576
      %679 = vmatprep.subr.mxu0 0.0
      %680 = vmatpush1.msra.mxu0 %v577
      %681 = vmatprep.subr.mxu0 0.0
      %682 = vmatpush1.msra.mxu0 %v578
      %683 = vmatprep.subr.mxu0 0.0
      %684 = vmatpush1.msra.mxu0 0.0
      %685 = vmatprep.subr.mxu0 0.0
      %686 = vmatpush1.msra.mxu0 0.0
      %687 = vmatprep.subr.mxu0 0.0
      %688 = vmatpush1.msra.mxu0 0.0
      %689 = vmatprep.subr.mxu0 0.0
      %690 = vmatpush1.msra.mxu0 0.0
      %691 = vmatprep.subr.mxu0 0.0
      %692 = vmatpush1.msra.mxu0 0.0
      %693 = vmatprep.subr.mxu0 0.0
      %694 = vmatpush1.msra.mxu0 0.0
      %695 = vmatprep.subr.mxu0 0.0
      %696 = vmatpush1.msra.mxu0 0.0
      %697 = vmatprep.subr.mxu0 0.0
      %698 = vmatpush1.msra.mxu0 0.0
      %699 = vmatprep.subr.mxu0 0.0
      %700 = vmatpush1.msra.mxu0 0.0
      %701 = vmatprep.subr.mxu0 0.0
      %702 = vmatpush1.msra.mxu0 0.0
      %703 = vmatprep.subr.mxu0 0.0
      %704 = vmatpush1.msra.mxu0 0.0
      %705 = vmatprep.subr.mxu0 0.0
      %706 = vmatpush1.msra.mxu0 0.0
      %707 = vmatprep.subr.mxu0 0.0
      %708 = vmatpush1.msra.mxu0 0.0
      %709 = vmatprep.subr.mxu0 0.0
      %710 = vmatpush1.msra.mxu0 0.0
      %711 = vmatprep.subr.mxu0 0.0
      %712 = vmatpush1.msra.mxu0 0.0
      %713 = vmatprep.subr.mxu0 0.0
      %714 = vmatpush1.msra.mxu0 0.0
      %715 = vmatprep.subr.mxu0 0.0
      %716 = vmatpush1.msra.mxu0 0.0
      %717 = vmatprep.subr.mxu0 0.0
      %718 = vmatpush1.msra.mxu0 0.0
      %719 = vmatprep.subr.mxu0 0.0
      %720 = vmatpush1.msra.mxu0 0.0
      %721 = vmatprep.subr.mxu0 0.0
      %722 = vmatpush1.msra.mxu0 0.0
      %723 = vmatprep.subr.mxu0 0.0
      %724 = vmatpush1.msra.mxu0 0.0
      %725 = vmatprep.subr.mxu0 0.0
      %726 = vmatpush1.msra.mxu0 0.0
      %727 = vmatprep.subr.mxu0 0.0
      %728 = vmatpush1.msra.mxu0 0.0
      %729 = vmatprep.subr.mxu0 0.0
      %730 = vmatpush1.msra.mxu0 0.0
      %731 = vmatprep.subr.mxu0 0.0
      %732 = vmatpush1.msra.mxu0 0.0
      %733 = vmatprep.subr.mxu0 0.0
      %734 = vmatpush1.msra.mxu0 0.0
      %735 = vmatprep.subr.mxu0 0.0
      %736 = vmatpush1.msra.mxu0 0.0
      %737 = vmatprep.subr.mxu0 0.0
      %738 = vmatpush1.msra.mxu0 0.0
      %739 = vmatprep.mubr.f32.mxu0 0.0
      %740 = vmatmul.mubr.f32.gmra.mrb[0].mxu0 %v673
      %v741 = vpop.f32.mrb[0].mxu0
      %v742 = vadd.f32 %v580, %v741
      %v743 = vpop.f32.mrb[0].mxu0
      %744 = vdwg.mxu0
      %v745 = vadd.f32 %v669, %v742
      %v746 = vxor.u32 %v745, 2147483648
      %v747 = vmul.f32 %v746, 1.442695
      %v748 = vpow.pop %v747
      %v749 = vadd.f32 %v748, 1.0
      %v750 = vrcp.pop %v749
      %v751 = vmul.f32 1.0, %v750
      %753 = vrot.lane.b32.xlu0 %v742, 64
      %v754 = vpop.permute.xlu0 %753
      %v756 = vmul.f32 %v751, %v754
      %758 = vrot.lane.b32.xlu0 %v756, 64
      %v759 = vpop.permute.xlu0 %758
      %v761 = vadd.f32 %v669, %v759
      %v762 = vtanh.pop %v761
      %v763 = vsub.f32 1.0, %v751
      %765 = vrot.lane.b32.xlu0 %v762, 96
      %v766 = vpop.permute.xlu0 %765
      %v768 = vmul.f32 %v763, %v766
      %v769 = vlaneseq
      %v770 = vshrl.u32 %v769, 7
      %v771 = vsub.s32 0, %v770
      %v772 = vrot.slane %v595, %v771
      %773 = vrot.lane.b32.xlu0 %v772, 32
      %v774 = vpop.permute.xlu0 %773
      %v776 = vmul.f32 %v751, %v774
      %v777 = vadd.f32 %v768, %v776
      %779 = vrot.lane.b32.xlu0 %v777, 96
      %v780 = vpop.permute.xlu0 %779
      %v781 = vsel %vm598, %v780, 0
      %v784 = vsel %vm598, %v546, 0
      %v787 = vsel %vm598, %v547, 0
      %789 = vmatprep.subr.mxu0 0.0
      %790 = vmatpush1.xpose.msra.mxu0 %v784
      %791 = vmatprep.subr.mxu0 0.0
      %792 = vmatpush1.xpose.msra.mxu0 %v787
      %793 = vmatprep.subr.mxu0 0.0
      %794 = vmatpush1.xpose.msra.mxu0 0.0
      %795 = vmatprep.subr.mxu0 0.0
      %796 = vmatpush1.xpose.msra.mxu0 0.0
      %797 = vmatprep.subr.mxu0 0.0
      %798 = vmatpush1.xpose.msra.mxu0 0.0
      %799 = vmatprep.subr.mxu0 0.0
      %800 = vmatpush1.xpose.msra.mxu0 0.0
      %801 = vmatprep.subr.mxu0 0.0
      %802 = vmatpush1.xpose.msra.mxu0 0.0
      %803 = vmatprep.subr.mxu0 0.0
      %804 = vmatpush1.xpose.msra.mxu0 0.0
      %805 = vmatprep.subr.mxu0 0.0
      %806 = vmatpush1.xpose.msra.mxu0 0.0
      %807 = vmatprep.subr.mxu0 0.0
      %808 = vmatpush1.xpose.msra.mxu0 0.0
      %809 = vmatprep.subr.mxu0 0.0
      %810 = vmatpush1.xpose.msra.mxu0 0.0
      %811 = vmatprep.subr.mxu0 0.0
      %812 = vmatpush1.xpose.msra.mxu0 0.0
      %813 = vmatprep.subr.mxu0 0.0
      %814 = vmatpush1.xpose.msra.mxu0 0.0
      %815 = vmatprep.subr.mxu0 0.0
      %816 = vmatpush1.xpose.msra.mxu0 0.0
      %817 = vmatprep.subr.mxu0 0.0
      %818 = vmatpush1.xpose.msra.mxu0 0.0
      %819 = vmatprep.subr.mxu0 0.0
      %820 = vmatpush1.xpose.msra.mxu0 0.0
      %821 = vmatprep.subr.mxu0 0.0
      %822 = vmatpush1.xpose.msra.mxu0 0.0
      %823 = vmatprep.subr.mxu0 0.0
      %824 = vmatpush1.xpose.msra.mxu0 0.0
      %825 = vmatprep.subr.mxu0 0.0
      %826 = vmatpush1.xpose.msra.mxu0 0.0
      %827 = vmatprep.subr.mxu0 0.0
      %828 = vmatpush1.xpose.msra.mxu0 0.0
      %829 = vmatprep.subr.mxu0 0.0
      %830 = vmatpush1.xpose.msra.mxu0 0.0
      %831 = vmatprep.subr.mxu0 0.0
      %832 = vmatpush1.xpose.msra.mxu0 0.0
      %833 = vmatprep.subr.mxu0 0.0
      %834 = vmatpush1.xpose.msra.mxu0 0.0
      %835 = vmatprep.subr.mxu0 0.0
      %836 = vmatpush1.xpose.msra.mxu0 0.0
      %837 = vmatprep.subr.mxu0 0.0
      %838 = vmatpush1.xpose.msra.mxu0 0.0
      %839 = vmatprep.subr.mxu0 0.0
      %840 = vmatpush1.xpose.msra.mxu0 0.0
      %841 = vmatprep.subr.mxu0 0.0
      %842 = vmatpush1.xpose.msra.mxu0 0.0
      %843 = vmatprep.subr.mxu0 0.0
      %844 = vmatpush1.xpose.msra.mxu0 0.0
      %845 = vmatprep.subr.mxu0 0.0
      %846 = vmatpush1.xpose.msra.mxu0 0.0
      %847 = vmatprep.subr.mxu0 0.0
      %848 = vmatpush1.xpose.msra.mxu0 0.0
      %849 = vmatprep.subr.mxu0 0.0
      %850 = vmatpush1.xpose.msra.mxu0 0.0
      %851 = vmatprep.subr.mxu0 0.0
      %852 = vmatpush1.xpose.msra.mxu0 0.0
      %853 = vmatprep.mubr.f32.mxu0 0.0
      %854 = vmatmul.mubr.f32.gmra.mrb[0].mxu0 %v781
      %v855 = vpop.f32.mrb[0].mxu0
      %v856 = vadd.f32 0.0, %v855
      %v857 = vpop.f32.mrb[0].mxu0
      %858 = vdwg.mxu0
      %vm859 = vcmp.gt.f32.partialorder %v548, 0.5
      %v860 = vsel %vm859, -1e+09, %v856
      %vm861 = vcmask 122880
      %v862 = vsel %vm861, %v860, -inf
      %863 = vmax.xlane.f32.xlu0 %v862
      %v864 = vpop.xlane.xlu0 %863
      %v865 = vsub.f32 %v860, %v864
      %v866 = vmul.f32 %v865, 1.442695
      %v867 = vpow.pop %v866
      %v868 = vsel %vm861, %v867, 0.0
      %869 = vadd.xlane.f32.xlu0 %v868
      %v870 = vpop.xlane.xlu0 %869
      %v871 = vrcp.pop %v870
      %v872 = vmul.f32 %v867, %v871
      %873 = vmatprep.subr.mxu0 0.0
      %874 = vmatpush1.msra.mxu0 %v567
      %875 = vmatprep.subr.mxu0 0.0
      %876 = vmatpush1.msra.mxu0 %v568
      %877 = vmatprep.subr.mxu0 0.0
      %878 = vmatpush1.msra.mxu0 %v569
      %879 = vmatprep.subr.mxu0 0.0
      %880 = vmatpush1.msra.mxu0 %v570
      %881 = vmatprep.subr.mxu0 0.0
      %882 = vmatpush1.msra.mxu0 0.0
      %883 = vmatprep.subr.mxu0 0.0
      %884 = vmatpush1.msra.mxu0 0.0
      %885 = vmatprep.subr.mxu0 0.0
      %886 = vmatpush1.msra.mxu0 0.0
      %887 = vmatprep.subr.mxu0 0.0
      %888 = vmatpush1.msra.mxu0 0.0
      %889 = vmatprep.subr.mxu0 0.0
      %890 = vmatpush1.msra.mxu0 0.0
      %891 = vmatprep.subr.mxu0 0.0
      %892 = vmatpush1.msra.mxu0 0.0
      %893 = vmatprep.subr.mxu0 0.0
      %894 = vmatpush1.msra.mxu0 0.0
      %895 = vmatprep.subr.mxu0 0.0
      %896 = vmatpush1.msra.mxu0 0.0
      %897 = vmatprep.subr.mxu0 0.0
      %898 = vmatpush1.msra.mxu0 0.0
      %899 = vmatprep.subr.mxu0 0.0
      %900 = vmatpush1.msra.mxu0 0.0
      %901 = vmatprep.subr.mxu0 0.0
      %902 = vmatpush1.msra.mxu0 0.0
      %903 = vmatprep.subr.mxu0 0.0
      %904 = vmatpush1.msra.mxu0 0.0
      %905 = vmatprep.subr.mxu0 0.0
      %906 = vmatpush1.msra.mxu0 0.0
      %907 = vmatprep.subr.mxu0 0.0
      %908 = vmatpush1.msra.mxu0 0.0
      %909 = vmatprep.subr.mxu0 0.0
      %910 = vmatpush1.msra.mxu0 0.0
      %911 = vmatprep.subr.mxu0 0.0
      %912 = vmatpush1.msra.mxu0 0.0
      %913 = vmatprep.subr.mxu0 0.0
      %914 = vmatpush1.msra.mxu0 0.0
      %915 = vmatprep.subr.mxu0 0.0
      %916 = vmatpush1.msra.mxu0 0.0
      %917 = vmatprep.subr.mxu0 0.0
      %918 = vmatpush1.msra.mxu0 0.0
      %919 = vmatprep.subr.mxu0 0.0
      %920 = vmatpush1.msra.mxu0 0.0
      %921 = vmatprep.subr.mxu0 0.0
      %922 = vmatpush1.msra.mxu0 0.0
      %923 = vmatprep.subr.mxu0 0.0
      %924 = vmatpush1.msra.mxu0 0.0
      %925 = vmatprep.subr.mxu0 0.0
      %926 = vmatpush1.msra.mxu0 0.0
      %927 = vmatprep.subr.mxu0 0.0
      %928 = vmatpush1.msra.mxu0 0.0
      %929 = vmatprep.subr.mxu0 0.0
      %930 = vmatpush1.msra.mxu0 0.0
      %931 = vmatprep.subr.mxu0 0.0
      %932 = vmatpush1.msra.mxu0 0.0
      %933 = vmatprep.subr.mxu0 0.0
      %934 = vmatpush1.msra.mxu0 0.0
      %935 = vmatprep.subr.mxu0 0.0
      %936 = vmatpush1.msra.mxu0 0.0
      %937 = vmatprep.mubr.f32.mxu0 0.0
      %938 = vmatmul.mubr.f32.gmra.mrb[0].mxu0 %v781
      %v939 = vpop.f32.mrb[0].mxu0
      %v940 = vadd.f32 0.0, %v939
      %v941 = vpop.f32.mrb[0].mxu0
      %942 = vdwg.mxu0
      %vm943 = vcmask 1040384
      %v944 = vsel %vm943, %v940, -inf
      %945 = vmax.xlane.f32.xlu0 %v944
      %v946 = vpop.xlane.xlu0 %945
      %v947 = vsub.f32 %v940, %v946
      %v948 = vmul.f32 %v947, 1.442695
      %v949 = vpow.pop %v948
      %v950 = vsel %vm943, %v949, 0.0
      %951 = vadd.xlane.f32.xlu0 %v950
      %v952 = vpop.xlane.xlu0 %951
      %v953 = vrcp.pop %v952
      %v954 = vmul.f32 %v949, %v953
      %vm955 = vcmask 130048
      %v957 = vsel %vm955, %v872, 0
      %959 = vmatprep.subr.mxu0 0.0
      %960 = vmatpush1.msra.mxu0 %v546
      %961 = vmatprep.subr.mxu0 0.0
      %962 = vmatpush1.msra.mxu0 %v547
      %963 = vmatprep.subr.mxu0 0.0
      %964 = vmatpush1.msra.mxu0 0.0
      %965 = vmatprep.subr.mxu0 0.0
      %966 = vmatpush1.msra.mxu0 0.0
      %967 = vmatprep.subr.mxu0 0.0
      %968 = vmatpush1.msra.mxu0 0.0
      %969 = vmatprep.subr.mxu0 0.0
      %970 = vmatpush1.msra.mxu0 0.0
      %971 = vmatprep.subr.mxu0 0.0
      %972 = vmatpush1.msra.mxu0 0.0
      %973 = vmatprep.subr.mxu0 0.0
      %974 = vmatpush1.msra.mxu0 0.0
      %975 = vmatprep.subr.mxu0 0.0
      %976 = vmatpush1.msra.mxu0 0.0
      %977 = vmatprep.subr.mxu0 0.0
      %978 = vmatpush1.msra.mxu0 0.0
      %979 = vmatprep.subr.mxu0 0.0
      %980 = vmatpush1.msra.mxu0 0.0
      %981 = vmatprep.subr.mxu0 0.0
      %982 = vmatpush1.msra.mxu0 0.0
      %983 = vmatprep.subr.mxu0 0.0
      %984 = vmatpush1.msra.mxu0 0.0
      %985 = vmatprep.subr.mxu0 0.0
      %986 = vmatpush1.msra.mxu0 0.0
      %987 = vmatprep.subr.mxu0 0.0
      %988 = vmatpush1.msra.mxu0 0.0
      %989 = vmatprep.subr.mxu0 0.0
      %990 = vmatpush1.msra.mxu0 0.0
      %991 = vmatprep.subr.mxu0 0.0
      %992 = vmatpush1.msra.mxu0 0.0
      %993 = vmatprep.subr.mxu0 0.0
      %994 = vmatpush1.msra.mxu0 0.0
      %995 = vmatprep.subr.mxu0 0.0
      %996 = vmatpush1.msra.mxu0 0.0
      %997 = vmatprep.subr.mxu0 0.0
      %998 = vmatpush1.msra.mxu0 0.0
      %999 = vmatprep.subr.mxu0 0.0
      %1000 = vmatpush1.msra.mxu0 0.0
      %1001 = vmatprep.subr.mxu0 0.0
      %1002 = vmatpush1.msra.mxu0 0.0
      %1003 = vmatprep.subr.mxu0 0.0
      %1004 = vmatpush1.msra.mxu0 0.0
      %1005 = vmatprep.subr.mxu0 0.0
      %1006 = vmatpush1.msra.mxu0 0.0
      %1007 = vmatprep.subr.mxu0 0.0
      %1008 = vmatpush1.msra.mxu0 0.0
      %1009 = vmatprep.subr.mxu0 0.0
      %1010 = vmatpush1.msra.mxu0 0.0
      %1011 = vmatprep.subr.mxu0 0.0
      %1012 = vmatpush1.msra.mxu0 0.0
      %1013 = vmatprep.subr.mxu0 0.0
      %1014 = vmatpush1.msra.mxu0 0.0
      %1015 = vmatprep.subr.mxu0 0.0
      %1016 = vmatpush1.msra.mxu0 0.0
      %1017 = vmatprep.subr.mxu0 0.0
      %1018 = vmatpush1.msra.mxu0 0.0
      %1019 = vmatprep.subr.mxu0 0.0
      %1020 = vmatpush1.msra.mxu0 0.0
      %1021 = vmatprep.subr.mxu0 0.0
      %1022 = vmatpush1.msra.mxu0 0.0
      %1023 = vmatprep.mubr.f32.mxu0 0.0
      %1024 = vmatmul.mubr.f32.gmra.mrb[0].mxu0 %v957
      %v1025 = vpop.f32.mrb[0].mxu0
      %v1026 = vadd.f32 0.0, %v1025
      %v1027 = vpop.f32.mrb[0].mxu0
      %1028 = vdwg.mxu0
      %1030 = vrot.lane.b32.xlu0 %v1026, 64
      %v1031 = vpop.permute.xlu0 %1030
      %v1033 = vsel %vm598, %v594, %v777
      %vm1034 = vcmask 523264
      %v1035 = vsel %vm1034, %v1033, %v1031
      %vm1036 = vcmask 785408
      %v1038 = vsel %vm1036, %v1035, 0
      %1040 = vmatprep.subr.mxu0 0.0
      %1041 = vmatpush1.msra.mxu0 %v581
      %1042 = vmatprep.subr.mxu0 0.0
      %1043 = vmatpush1.msra.mxu0 %v582
      %1044 = vmatprep.subr.mxu0 0.0
      %1045 = vmatpush1.msra.mxu0 %v583
      %1046 = vmatprep.subr.mxu0 0.0
      %1047 = vmatpush1.msra.mxu0 %v584
      %1048 = vmatprep.subr.mxu0 0.0
      %1049 = vmatpush1.msra.mxu0 %v585
      %1050 = vmatprep.subr.mxu0 0.0
      %1051 = vmatpush1.msra.mxu0 %v586
      %1052 = vmatprep.subr.mxu0 0.0
      %1053 = vmatpush1.msra.mxu0 %v587
      %1054 = vmatprep.subr.mxu0 0.0
      %1055 = vmatpush1.msra.mxu0 %v588
      %1056 = vmatprep.subr.mxu0 0.0
      %1057 = vmatpush1.msra.mxu0 %v589
      %1058 = vmatprep.subr.mxu0 0.0
      %1059 = vmatpush1.msra.mxu0 %v590
      %1060 = vmatprep.subr.mxu0 0.0
      %1061 = vmatpush1.msra.mxu0 %v591
      %1062 = vmatprep.subr.mxu0 0.0
      %1063 = vmatpush1.msra.mxu0 %v592
      %1064 = vmatprep.subr.mxu0 0.0
      %1065 = vmatpush1.msra.mxu0 0.0
      %1066 = vmatprep.subr.mxu0 0.0
      %1067 = vmatpush1.msra.mxu0 0.0
      %1068 = vmatprep.subr.mxu0 0.0
      %1069 = vmatpush1.msra.mxu0 0.0
      %1070 = vmatprep.subr.mxu0 0.0
      %1071 = vmatpush1.msra.mxu0 0.0
      %1072 = vmatprep.subr.mxu0 0.0
      %1073 = vmatpush1.msra.mxu0 0.0
      %1074 = vmatprep.subr.mxu0 0.0
      %1075 = vmatpush1.msra.mxu0 0.0
      %1076 = vmatprep.subr.mxu0 0.0
      %1077 = vmatpush1.msra.mxu0 0.0
      %1078 = vmatprep.subr.mxu0 0.0
      %1079 = vmatpush1.msra.mxu0 0.0
      %1080 = vmatprep.subr.mxu0 0.0
      %1081 = vmatpush1.msra.mxu0 0.0
      %1082 = vmatprep.subr.mxu0 0.0
      %1083 = vmatpush1.msra.mxu0 0.0
      %1084 = vmatprep.subr.mxu0 0.0
      %1085 = vmatpush1.msra.mxu0 0.0
      %1086 = vmatprep.subr.mxu0 0.0
      %1087 = vmatpush1.msra.mxu0 0.0
      %1088 = vmatprep.subr.mxu0 0.0
      %1089 = vmatpush1.msra.mxu0 0.0
      %1090 = vmatprep.subr.mxu0 0.0
      %1091 = vmatpush1.msra.mxu0 0.0
      %1092 = vmatprep.subr.mxu0 0.0
      %1093 = vmatpush1.msra.mxu0 0.0
      %1094 = vmatprep.subr.mxu0 0.0
      %1095 = vmatpush1.msra.mxu0 0.0
      %1096 = vmatprep.subr.mxu0 0.0
      %1097 = vmatpush1.msra.mxu0 0.0
      %1098 = vmatprep.subr.mxu0 0.0
      %1099 = vmatpush1.msra.mxu0 0.0
      %1100 = vmatprep.subr.mxu0 0.0
      %1101 = vmatpush1.msra.mxu0 0.0
      %1102 = vmatprep.subr.mxu0 0.0
      %1103 = vmatpush1.msra.mxu0 0.0
      %1104 = vmatprep.mubr.f32.mxu0 0.0
      %1105 = vmatmul.mubr.f32.gmra.mrb[0].mxu0 %v1038
      %v1106 = vpop.f32.mrb[0].mxu0
      %v1107 = vadd.f32 %v593, %v1106
      %v1108 = vpop.f32.mrb[0].mxu0
      %1109 = vdwg.mxu0
      %v1110 = vxor.u32 %v1107, 2147483648
      %v1111 = vmul.f32 %v1110, 1.442695
      %v1112 = vpow.pop %v1111
      %v1113 = vadd.f32 %v1112, 1.0
      %v1114 = vrcp.pop %v1113
      %v1115 = vmul.f32 1.0, %v1114
      %1116 = vmatprep.subr.mxu0 0.0
      %1117 = vmatpush1.msra.mxu0 %v549
      %1118 = vmatprep.subr.mxu0 0.0
      %1119 = vmatpush1.msra.mxu0 %v550
      %1120 = vmatprep.subr.mxu0 0.0
      %1121 = vmatpush1.msra.mxu0 0.0
      %1122 = vmatprep.subr.mxu0 0.0
      %1123 = vmatpush1.msra.mxu0 0.0
      %1124 = vmatprep.subr.mxu0 0.0
      %1125 = vmatpush1.msra.mxu0 0.0
      %1126 = vmatprep.subr.mxu0 0.0
      %1127 = vmatpush1.msra.mxu0 0.0
      %1128 = vmatprep.subr.mxu0 0.0
      %1129 = vmatpush1.msra.mxu0 0.0
      %1130 = vmatprep.subr.mxu0 0.0
      %1131 = vmatpush1.msra.mxu0 0.0
      %1132 = vmatprep.subr.mxu0 0.0
      %1133 = vmatpush1.msra.mxu0 0.0
      %1134 = vmatprep.subr.mxu0 0.0
      %1135 = vmatpush1.msra.mxu0 0.0
      %1136 = vmatprep.subr.mxu0 0.0
      %1137 = vmatpush1.msra.mxu0 0.0
      %1138 = vmatprep.subr.mxu0 0.0
      %1139 = vmatpush1.msra.mxu0 0.0
      %1140 = vmatprep.subr.mxu0 0.0
      %1141 = vmatpush1.msra.mxu0 0.0
      %1142 = vmatprep.subr.mxu0 0.0
      %1143 = vmatpush1.msra.mxu0 0.0
      %1144 = vmatprep.subr.mxu0 0.0
      %1145 = vmatpush1.msra.mxu0 0.0
      %1146 = vmatprep.subr.mxu0 0.0
      %1147 = vmatpush1.msra.mxu0 0.0
      %1148 = vmatprep.subr.mxu0 0.0
      %1149 = vmatpush1.msra.mxu0 0.0
      %1150 = vmatprep.subr.mxu0 0.0
      %1151 = vmatpush1.msra.mxu0 0.0
      %1152 = vmatprep.subr.mxu0 0.0
      %1153 = vmatpush1.msra.mxu0 0.0
      %1154 = vmatprep.subr.mxu0 0.0
      %1155 = vmatpush1.msra.mxu0 0.0
      %1156 = vmatprep.subr.mxu0 0.0
      %1157 = vmatpush1.msra.mxu0 0.0
      %1158 = vmatprep.subr.mxu0 0.0
      %1159 = vmatpush1.msra.mxu0 0.0
      %1160 = vmatprep.subr.mxu0 0.0
      %1161 = vmatpush1.msra.mxu0 0.0
      %1162 = vmatprep.subr.mxu0 0.0
      %1163 = vmatpush1.msra.mxu0 0.0
      %1164 = vmatprep.subr.mxu0 0.0
      %1165 = vmatpush1.msra.mxu0 0.0
      %1166 = vmatprep.subr.mxu0 0.0
      %1167 = vmatpush1.msra.mxu0 0.0
      %1168 = vmatprep.subr.mxu0 0.0
      %1169 = vmatpush1.msra.mxu0 0.0
      %1170 = vmatprep.subr.mxu0 0.0
      %1171 = vmatpush1.msra.mxu0 0.0
      %1172 = vmatprep.subr.mxu0 0.0
      %1173 = vmatpush1.msra.mxu0 0.0
      %1174 = vmatprep.subr.mxu0 0.0
      %1175 = vmatpush1.msra.mxu0 0.0
      %1176 = vmatprep.subr.mxu0 0.0
      %1177 = vmatpush1.msra.mxu0 0.0
      %1178 = vmatprep.subr.mxu0 0.0
      %1179 = vmatpush1.msra.mxu0 0.0
      %1180 = vmatprep.mubr.f32.mxu0 0.0
      %1181 = vmatmul.mubr.f32.gmra.mrb[0].mxu0 %v957
      %v1182 = vpop.f32.mrb[0].mxu0
      %v1183 = vadd.f32 0.0, %v1182
      %v1184 = vpop.f32.mrb[0].mxu0
      %1185 = vdwg.mxu0
      %1187 = vset.pattern.permute.xlu0 0
      %1188 = vperm.xlu0 %1187, %v1115
      %v1189 = vpop.permute.xlu0 %1188
      %v1191 = vmul.f32 %v1189, %v954
      %v1192 = vsub.f32 1.0, %v1115
      %1194 = vset.pattern.permute.xlu0 0
      %1195 = vperm.xlu0 %1194, %v1192
      %v1196 = vpop.permute.xlu0 %1195
      %v1198 = vmul.f32 %v1196, %v1183
      %v1199 = vadd.f32 %v1191, %v1198
      %v1200 = vsel %vm943, %v1199, -inf
      %1201 = vmax.xlane.f32.xlu0 %v1200
      %v1202 = vpop.xlane.xlu0 %1201
      %vm1203 = vcmp.eq.f32.partialorder %v1199, %v1202
      %v1204 = vsel %vm1203, %v597, 128
      %v1205 = vsel %vm943, %v1204, 2147483647
      %v1206 = vand.u32 %v1205, 65535
      %v1207 = vshra.s32 %v1205, 16
      %v1208 = vcvt.s32.f32 %v1206
      %v1209 = vcvt.s32.f32 %v1207
      %1210 = vmin.xlane.f32.xlu0 %v1209
      %v1211 = vpop.xlane.xlu0 %1210
      %vm1212 = vcmp.eq.f32.partialorder %v1209, %v1211
      %v1213 = vsel %vm1212, %v1208, inf
      %1214 = vmin.xlane.f32.xlu0 %v1213
      %v1215 = vpop.xlane.xlu0 %1214
      %v1216 = vcvt.f32.s32 %v1215
      %v1217 = vcvt.f32.s32 %v1211
      %v1218 = vshll.u32 %v1217, 16
      %v1219 = vadd.s32 %v1218, %v1216
      %vm1220 = vcmp.eq.s32.totalorder %v597, %v1219
      %v1221 = vsel %vm1220, 1, 0
      %v1222 = vcvt.s32.f32 %v1221
      %1223 = vmatprep.subr.mxu0 0.0
      %1224 = vmatpush1.msra.mxu0 %v551
      %1225 = vmatprep.subr.mxu0 0.0
      %1226 = vmatpush1.msra.mxu0 %v552
      %1227 = vmatprep.subr.mxu0 0.0
      %1228 = vmatpush1.msra.mxu0 %v553
      %1229 = vmatprep.subr.mxu0 0.0
      %1230 = vmatpush1.msra.mxu0 %v554
      %1231 = vmatprep.subr.mxu0 0.0
      %1232 = vmatpush1.msra.mxu0 %v555
      %1233 = vmatprep.subr.mxu0 0.0
      %1234 = vmatpush1.msra.mxu0 %v556
      %1235 = vmatprep.subr.mxu0 0.0
      %1236 = vmatpush1.msra.mxu0 %v557
      %1237 = vmatprep.subr.mxu0 0.0
      %1238 = vmatpush1.msra.mxu0 %v558
      %1239 = vmatprep.subr.mxu0 0.0
      %1240 = vmatpush1.msra.mxu0 %v559
      %1241 = vmatprep.subr.mxu0 0.0
      %1242 = vmatpush1.msra.mxu0 %v560
      %1243 = vmatprep.subr.mxu0 0.0
      %1244 = vmatpush1.msra.mxu0 %v561
      %1245 = vmatprep.subr.mxu0 0.0
      %1246 = vmatpush1.msra.mxu0 %v562
      %1247 = vmatprep.subr.mxu0 0.0
      %1248 = vmatpush1.msra.mxu0 %v563
      %1249 = vmatprep.subr.mxu0 0.0
      %1250 = vmatpush1.msra.mxu0 %v564
      %1251 = vmatprep.subr.mxu0 0.0
      %1252 = vmatpush1.msra.mxu0 %v565
      %1253 = vmatprep.subr.mxu0 0.0
      %1254 = vmatpush1.msra.mxu0 %v566
      %1255 = vmatprep.subr.mxu0 0.0
      %1256 = vmatpush1.msra.mxu0 0.0
      %1257 = vmatprep.subr.mxu0 0.0
      %1258 = vmatpush1.msra.mxu0 0.0
      %1259 = vmatprep.subr.mxu0 0.0
      %1260 = vmatpush1.msra.mxu0 0.0
      %1261 = vmatprep.subr.mxu0 0.0
      %1262 = vmatpush1.msra.mxu0 0.0
      %1263 = vmatprep.subr.mxu0 0.0
      %1264 = vmatpush1.msra.mxu0 0.0
      %1265 = vmatprep.subr.mxu0 0.0
      %1266 = vmatpush1.msra.mxu0 0.0
      %1267 = vmatprep.subr.mxu0 0.0
      %1268 = vmatpush1.msra.mxu0 0.0
      %1269 = vmatprep.subr.mxu0 0.0
      %1270 = vmatpush1.msra.mxu0 0.0
      %1271 = vmatprep.subr.mxu0 0.0
      %1272 = vmatpush1.msra.mxu0 0.0
      %1273 = vmatprep.subr.mxu0 0.0
      %1274 = vmatpush1.msra.mxu0 0.0
      %1275 = vmatprep.subr.mxu0 0.0
      %1276 = vmatpush1.msra.mxu0 0.0
      %1277 = vmatprep.subr.mxu0 0.0
      %1278 = vmatpush1.msra.mxu0 0.0
      %1279 = vmatprep.subr.mxu0 0.0
      %1280 = vmatpush1.msra.mxu0 0.0
      %1281 = vmatprep.subr.mxu0 0.0
      %1282 = vmatpush1.msra.mxu0 0.0
      %1283 = vmatprep.subr.mxu0 0.0
      %1284 = vmatpush1.msra.mxu0 0.0
      %1285 = vmatprep.subr.mxu0 0.0
      %1286 = vmatpush1.msra.mxu0 0.0
      %1287 = vmatprep.mubr.f32.mxu0 0.0
      %1288 = vmatmul.mubr.f32.gmra.mrb[0].mxu0 %v1222
      %v1289 = vpop.f32.mrb[0].mxu0
      %v1290 = vadd.f32 0.0, %v1289
      %v1291 = vpop.f32.mrb[0].mxu0
      %1292 = vdwg.mxu0
      %v1294 = vsel %vm598, %v1290, 0
      %1296 = vmatprep.subr.mxu0 0.0
      %1297 = vmatpush1.msra.mxu0 %v571
      %1298 = vmatprep.subr.mxu0 0.0
      %1299 = vmatpush1.msra.mxu0 %v572
      %1300 = vmatprep.subr.mxu0 0.0
      %1301 = vmatpush1.msra.mxu0 %v573
      %1302 = vmatprep.subr.mxu0 0.0
      %1303 = vmatpush1.msra.mxu0 %v574
      %1304 = vmatprep.subr.mxu0 0.0
      %1305 = vmatpush1.msra.mxu0 0.0
      %1306 = vmatprep.subr.mxu0 0.0
      %1307 = vmatpush1.msra.mxu0 0.0
      %1308 = vmatprep.subr.mxu0 0.0
      %1309 = vmatpush1.msra.mxu0 0.0
      %1310 = vmatprep.subr.mxu0 0.0
      %1311 = vmatpush1.msra.mxu0 0.0
      %1312 = vmatprep.subr.mxu0 0.0
      %1313 = vmatpush1.msra.mxu0 0.0
      %1314 = vmatprep.subr.mxu0 0.0
      %1315 = vmatpush1.msra.mxu0 0.0
      %1316 = vmatprep.subr.mxu0 0.0
      %1317 = vmatpush1.msra.mxu0 0.0
      %1318 = vmatprep.subr.mxu0 0.0
      %1319 = vmatpush1.msra.mxu0 0.0
      %1320 = vmatprep.subr.mxu0 0.0
      %1321 = vmatpush1.msra.mxu0 0.0
      %1322 = vmatprep.subr.mxu0 0.0
      %1323 = vmatpush1.msra.mxu0 0.0
      %1324 = vmatprep.subr.mxu0 0.0
      %1325 = vmatpush1.msra.mxu0 0.0
      %1326 = vmatprep.subr.mxu0 0.0
      %1327 = vmatpush1.msra.mxu0 0.0
      %1328 = vmatprep.subr.mxu0 0.0
      %1329 = vmatpush1.msra.mxu0 0.0
      %1330 = vmatprep.subr.mxu0 0.0
      %1331 = vmatpush1.msra.mxu0 0.0
      %1332 = vmatprep.subr.mxu0 0.0
      %1333 = vmatpush1.msra.mxu0 0.0
      %1334 = vmatprep.subr.mxu0 0.0
      %1335 = vmatpush1.msra.mxu0 0.0
      %1336 = vmatprep.subr.mxu0 0.0
      %1337 = vmatpush1.msra.mxu0 0.0
      %1338 = vmatprep.subr.mxu0 0.0
      %1339 = vmatpush1.msra.mxu0 0.0
      %1340 = vmatprep.subr.mxu0 0.0
      %1341 = vmatpush1.msra.mxu0 0.0
      %1342 = vmatprep.subr.mxu0 0.0
      %1343 = vmatpush1.msra.mxu0 0.0
      %1344 = vmatprep.subr.mxu0 0.0
      %1345 = vmatpush1.msra.mxu0 0.0
      %1346 = vmatprep.subr.mxu0 0.0
      %1347 = vmatpush1.msra.mxu0 0.0
      %1348 = vmatprep.subr.mxu0 0.0
      %1349 = vmatpush1.msra.mxu0 0.0
      %1350 = vmatprep.subr.mxu0 0.0
      %1351 = vmatpush1.msra.mxu0 0.0
      %1352 = vmatprep.subr.mxu0 0.0
      %1353 = vmatpush1.msra.mxu0 0.0
      %1354 = vmatprep.subr.mxu0 0.0
      %1355 = vmatpush1.msra.mxu0 0.0
      %1356 = vmatprep.subr.mxu0 0.0
      %1357 = vmatpush1.msra.mxu0 0.0
      %1358 = vmatprep.subr.mxu0 0.0
      %1359 = vmatpush1.msra.mxu0 0.0
      %1360 = vmatprep.mubr.f32.mxu0 0.0
      %1361 = vmatmul.mubr.f32.gmra.mrb[0].mxu0 %v1294
      %v1362 = vpop.f32.mrb[0].mxu0
      %v1363 = vadd.f32 %v579, %v1362
      %v1364 = vpop.f32.mrb[0].mxu0
      %1365 = vdwg.mxu0
      %1366 = vmatprep.subr.mxu0 0.0
      %1367 = vmatpush1.msra.mxu0 %v575
      %1368 = vmatprep.subr.mxu0 0.0
      %1369 = vmatpush1.msra.mxu0 %v576
      %1370 = vmatprep.subr.mxu0 0.0
      %1371 = vmatpush1.msra.mxu0 %v577
      %1372 = vmatprep.subr.mxu0 0.0
      %1373 = vmatpush1.msra.mxu0 %v578
      %1374 = vmatprep.subr.mxu0 0.0
      %1375 = vmatpush1.msra.mxu0 0.0
      %1376 = vmatprep.subr.mxu0 0.0
      %1377 = vmatpush1.msra.mxu0 0.0
      %1378 = vmatprep.subr.mxu0 0.0
      %1379 = vmatpush1.msra.mxu0 0.0
      %1380 = vmatprep.subr.mxu0 0.0
      %1381 = vmatpush1.msra.mxu0 0.0
      %1382 = vmatprep.subr.mxu0 0.0
      %1383 = vmatpush1.msra.mxu0 0.0
      %1384 = vmatprep.subr.mxu0 0.0
      %1385 = vmatpush1.msra.mxu0 0.0
      %1386 = vmatprep.subr.mxu0 0.0
      %1387 = vmatpush1.msra.mxu0 0.0
      %1388 = vmatprep.subr.mxu0 0.0
      %1389 = vmatpush1.msra.mxu0 0.0
      %1390 = vmatprep.subr.mxu0 0.0
      %1391 = vmatpush1.msra.mxu0 0.0
      %1392 = vmatprep.subr.mxu0 0.0
      %1393 = vmatpush1.msra.mxu0 0.0
      %1394 = vmatprep.subr.mxu0 0.0
      %1395 = vmatpush1.msra.mxu0 0.0
      %1396 = vmatprep.subr.mxu0 0.0
      %1397 = vmatpush1.msra.mxu0 0.0
      %1398 = vmatprep.subr.mxu0 0.0
      %1399 = vmatpush1.msra.mxu0 0.0
      %1400 = vmatprep.subr.mxu0 0.0
      %1401 = vmatpush1.msra.mxu0 0.0
      %1402 = vmatprep.subr.mxu0 0.0
      %1403 = vmatpush1.msra.mxu0 0.0
      %1404 = vmatprep.subr.mxu0 0.0
      %1405 = vmatpush1.msra.mxu0 0.0
      %1406 = vmatprep.subr.mxu0 0.0
      %1407 = vmatpush1.msra.mxu0 0.0
      %1408 = vmatprep.subr.mxu0 0.0
      %1409 = vmatpush1.msra.mxu0 0.0
      %1410 = vmatprep.subr.mxu0 0.0
      %1411 = vmatpush1.msra.mxu0 0.0
      %1412 = vmatprep.subr.mxu0 0.0
      %1413 = vmatpush1.msra.mxu0 0.0
      %1414 = vmatprep.subr.mxu0 0.0
      %1415 = vmatpush1.msra.mxu0 0.0
      %1416 = vmatprep.subr.mxu0 0.0
      %1417 = vmatpush1.msra.mxu0 0.0
      %1418 = vmatprep.subr.mxu0 0.0
      %1419 = vmatpush1.msra.mxu0 0.0
      %1420 = vmatprep.subr.mxu0 0.0
      %1421 = vmatpush1.msra.mxu0 0.0
      %1422 = vmatprep.subr.mxu0 0.0
      %1423 = vmatpush1.msra.mxu0 0.0
      %1424 = vmatprep.subr.mxu0 0.0
      %1425 = vmatpush1.msra.mxu0 0.0
      %1426 = vmatprep.subr.mxu0 0.0
      %1427 = vmatpush1.msra.mxu0 0.0
      %1428 = vmatprep.subr.mxu0 0.0
      %1429 = vmatpush1.msra.mxu0 0.0
      %1430 = vmatprep.mubr.f32.mxu0 0.0
      %1431 = vmatmul.mubr.f32.gmra.mrb[0].mxu0 %v781
      %v1432 = vpop.f32.mrb[0].mxu0
      %v1433 = vadd.f32 %v580, %v1432
      %v1434 = vpop.f32.mrb[0].mxu0
      %1435 = vdwg.mxu0
      %v1436 = vadd.f32 %v1363, %v1433
      %v1437 = vxor.u32 %v1436, 2147483648
      %v1438 = vmul.f32 %v1437, 1.442695
      %v1439 = vpow.pop %v1438
      %v1440 = vadd.f32 %v1439, 1.0
      %v1441 = vrcp.pop %v1440
      %v1442 = vmul.f32 1.0, %v1441
      %1444 = vrot.lane.b32.xlu0 %v1433, 64
      %v1445 = vpop.permute.xlu0 %1444
      %v1447 = vmul.f32 %v1442, %v1445
      %1449 = vrot.lane.b32.xlu0 %v1447, 64
      %v1450 = vpop.permute.xlu0 %1449
      %v1452 = vadd.f32 %v1363, %v1450
      %v1453 = vtanh.pop %v1452
      %v1454 = vsub.f32 1.0, %v1442
      %1456 = vrot.lane.b32.xlu0 %v1453, 96
      %v1457 = vpop.permute.xlu0 %1456
      %v1459 = vmul.f32 %v1454, %v1457
      %v1460 = vmul.f32 %v1442, %v777
      %v1461 = vadd.f32 %v1459, %v1460
      %1463 = vrot.lane.b32.xlu0 %v1461, 96
      %v1464 = vpop.permute.xlu0 %1463
      %v1465 = vsel %vm598, %v1464, 0
      %1467 = vmatprep.subr.mxu0 0.0
      %1468 = vmatpush1.xpose.msra.mxu0 %v784
      %1469 = vmatprep.subr.mxu0 0.0
      %1470 = vmatpush1.xpose.msra.mxu0 %v787
      %1471 = vmatprep.subr.mxu0 0.0
      %1472 = vmatpush1.xpose.msra.mxu0 0.0
      %1473 = vmatprep.subr.mxu0 0.0
      %1474 = vmatpush1.xpose.msra.mxu0 0.0
      %1475 = vmatprep.subr.mxu0 0.0
      %1476 = vmatpush1.xpose.msra.mxu0 0.0
      %1477 = vmatprep.subr.mxu0 0.0
      %1478 = vmatpush1.xpose.msra.mxu0 0.0
      %1479 = vmatprep.subr.mxu0 0.0
      %1480 = vmatpush1.xpose.msra.mxu0 0.0
      %1481 = vmatprep.subr.mxu0 0.0
      %1482 = vmatpush1.xpose.msra.mxu0 0.0
      %1483 = vmatprep.subr.mxu0 0.0
      %1484 = vmatpush1.xpose.msra.mxu0 0.0
      %1485 = vmatprep.subr.mxu0 0.0
      %1486 = vmatpush1.xpose.msra.mxu0 0.0
      %1487 = vmatprep.subr.mxu0 0.0
      %1488 = vmatpush1.xpose.msra.mxu0 0.0
      %1489 = vmatprep.subr.mxu0 0.0
      %1490 = vmatpush1.xpose.msra.mxu0 0.0
      %1491 = vmatprep.subr.mxu0 0.0
      %1492 = vmatpush1.xpose.msra.mxu0 0.0
      %1493 = vmatprep.subr.mxu0 0.0
      %1494 = vmatpush1.xpose.msra.mxu0 0.0
      %1495 = vmatprep.subr.mxu0 0.0
      %1496 = vmatpush1.xpose.msra.mxu0 0.0
      %1497 = vmatprep.subr.mxu0 0.0
      %1498 = vmatpush1.xpose.msra.mxu0 0.0
      %1499 = vmatprep.subr.mxu0 0.0
      %1500 = vmatpush1.xpose.msra.mxu0 0.0
      %1501 = vmatprep.subr.mxu0 0.0
      %1502 = vmatpush1.xpose.msra.mxu0 0.0
      %1503 = vmatprep.subr.mxu0 0.0
      %1504 = vmatpush1.xpose.msra.mxu0 0.0
      %1505 = vmatprep.subr.mxu0 0.0
      %1506 = vmatpush1.xpose.msra.mxu0 0.0
      %1507 = vmatprep.subr.mxu0 0.0
      %1508 = vmatpush1.xpose.msra.mxu0 0.0
      %1509 = vmatprep.subr.mxu0 0.0
      %1510 = vmatpush1.xpose.msra.mxu0 0.0
      %1511 = vmatprep.subr.mxu0 0.0
      %1512 = vmatpush1.xpose.msra.mxu0 0.0
      %1513 = vmatprep.subr.mxu0 0.0
      %1514 = vmatpush1.xpose.msra.mxu0 0.0
      %1515 = vmatprep.subr.mxu0 0.0
      %1516 = vmatpush1.xpose.msra.mxu0 0.0
      %1517 = vmatprep.subr.mxu0 0.0
      %1518 = vmatpush1.xpose.msra.mxu0 0.0
      %1519 = vmatprep.subr.mxu0 0.0
      %1520 = vmatpush1.xpose.msra.mxu0 0.0
      %1521 = vmatprep.subr.mxu0 0.0
      %1522 = vmatpush1.xpose.msra.mxu0 0.0
      %1523 = vmatprep.subr.mxu0 0.0
      %1524 = vmatpush1.xpose.msra.mxu0 0.0
      %1525 = vmatprep.subr.mxu0 0.0
      %1526 = vmatpush1.xpose.msra.mxu0 0.0
      %1527 = vmatprep.subr.mxu0 0.0
      %1528 = vmatpush1.xpose.msra.mxu0 0.0
      %1529 = vmatprep.subr.mxu0 0.0
      %1530 = vmatpush1.xpose.msra.mxu0 0.0
      %1531 = vmatprep.mubr.f32.mxu0 0.0
      %1532 = vmatmul.mubr.f32.gmra.mrb[0].mxu0 %v1465
      %v1533 = vpop.f32.mrb[0].mxu0
      %v1534 = vadd.f32 0.0, %v1533
      %v1535 = vpop.f32.mrb[0].mxu0
      %1536 = vdwg.mxu0
      %v1537 = vsel %vm859, -1e+09, %v1534
      %v1538 = vsel %vm861, %v1537, -inf
      %1539 = vmax.xlane.f32.xlu0 %v1538
      %v1540 = vpop.xlane.xlu0 %1539
      %v1541 = vsub.f32 %v1537, %v1540
      %v1542 = vmul.f32 %v1541, 1.442695
      %v1543 = vpow.pop %v1542
      %v1544 = vsel %vm861, %v1543, 0.0
      %1545 = vadd.xlane.f32.xlu0 %v1544
      %v1546 = vpop.xlane.xlu0 %1545
      %v1547 = vrcp.pop %v1546
      %v1548 = vmul.f32 %v1543, %v1547
      %1549 = vmatprep.subr.mxu0 0.0
      %1550 = vmatpush1.msra.mxu0 %v567
      %1551 = vmatprep.subr.mxu0 0.0
      %1552 = vmatpush1.msra.mxu0 %v568
      %1553 = vmatprep.subr.mxu0 0.0
      %1554 = vmatpush1.msra.mxu0 %v569
      %1555 = vmatprep.subr.mxu0 0.0
      %1556 = vmatpush1.msra.mxu0 %v570
      %1557 = vmatprep.subr.mxu0 0.0
      %1558 = vmatpush1.msra.mxu0 0.0
      %1559 = vmatprep.subr.mxu0 0.0
      %1560 = vmatpush1.msra.mxu0 0.0
      %1561 = vmatprep.subr.mxu0 0.0
      %1562 = vmatpush1.msra.mxu0 0.0
      %1563 = vmatprep.subr.mxu0 0.0
      %1564 = vmatpush1.msra.mxu0 0.0
      %1565 = vmatprep.subr.mxu0 0.0
      %1566 = vmatpush1.msra.mxu0 0.0
      %1567 = vmatprep.subr.mxu0 0.0
      %1568 = vmatpush1.msra.mxu0 0.0
      %1569 = vmatprep.subr.mxu0 0.0
      %1570 = vmatpush1.msra.mxu0 0.0
      %1571 = vmatprep.subr.mxu0 0.0
      %1572 = vmatpush1.msra.mxu0 0.0
      %1573 = vmatprep.subr.mxu0 0.0
      %1574 = vmatpush1.msra.mxu0 0.0
      %1575 = vmatprep.subr.mxu0 0.0
      %1576 = vmatpush1.msra.mxu0 0.0
      %1577 = vmatprep.subr.mxu0 0.0
      %1578 = vmatpush1.msra.mxu0 0.0
      %1579 = vmatprep.subr.mxu0 0.0
      %1580 = vmatpush1.msra.mxu0 0.0
      %1581 = vmatprep.subr.mxu0 0.0
      %1582 = vmatpush1.msra.mxu0 0.0
      %1583 = vmatprep.subr.mxu0 0.0
      %1584 = vmatpush1.msra.mxu0 0.0
      %1585 = vmatprep.subr.mxu0 0.0
      %1586 = vmatpush1.msra.mxu0 0.0
      %1587 = vmatprep.subr.mxu0 0.0
      %1588 = vmatpush1.msra.mxu0 0.0
      %1589 = vmatprep.subr.mxu0 0.0
      %1590 = vmatpush1.msra.mxu0 0.0
      %1591 = vmatprep.subr.mxu0 0.0
      %1592 = vmatpush1.msra.mxu0 0.0
      %1593 = vmatprep.subr.mxu0 0.0
      %1594 = vmatpush1.msra.mxu0 0.0
      %1595 = vmatprep.subr.mxu0 0.0
      %1596 = vmatpush1.msra.mxu0 0.0
      %1597 = vmatprep.subr.mxu0 0.0
      %1598 = vmatpush1.msra.mxu0 0.0
      %1599 = vmatprep.subr.mxu0 0.0
      %1600 = vmatpush1.msra.mxu0 0.0
      %1601 = vmatprep.subr.mxu0 0.0
      %1602 = vmatpush1.msra.mxu0 0.0
      %1603 = vmatprep.subr.mxu0 0.0
      %1604 = vmatpush1.msra.mxu0 0.0
      %1605 = vmatprep.subr.mxu0 0.0
      %1606 = vmatpush1.msra.mxu0 0.0
      %1607 = vmatprep.subr.mxu0 0.0
      %1608 = vmatpush1.msra.mxu0 0.0
      %1609 = vmatprep.subr.mxu0 0.0
      %1610 = vmatpush1.msra.mxu0 0.0
      %1611 = vmatprep.subr.mxu0 0.0
      %1612 = vmatpush1.msra.mxu0 0.0
      %1613 = vmatprep.mubr.f32.mxu0 0.0
      %1614 = vmatmul.mubr.f32.gmra.mrb[0].mxu0 %v1465
      %v1615 = vpop.f32.mrb[0].mxu0
      %v1616 = vadd.f32 0.0, %v1615
      %v1617 = vpop.f32.mrb[0].mxu0
      %1618 = vdwg.mxu0
      %v1619 = vsel %vm943, %v1616, -inf
      %1620 = vmax.xlane.f32.xlu0 %v1619
      %v1621 = vpop.xlane.xlu0 %1620
      %v1622 = vsub.f32 %v1616, %v1621
      %v1623 = vmul.f32 %v1622, 1.442695
      %v1624 = vpow.pop %v1623
      %v1625 = vsel %vm943, %v1624, 0.0
      %1626 = vadd.xlane.f32.xlu0 %v1625
      %v1627 = vpop.xlane.xlu0 %1626
      %v1628 = vrcp.pop %v1627
      %v1629 = vmul.f32 %v1624, %v1628
      %v1631 = vsel %vm955, %v1548, 0
      %1633 = vmatprep.subr.mxu0 0.0
      %1634 = vmatpush1.msra.mxu0 %v546
      %1635 = vmatprep.subr.mxu0 0.0
      %1636 = vmatpush1.msra.mxu0 %v547
      %1637 = vmatprep.subr.mxu0 0.0
      %1638 = vmatpush1.msra.mxu0 0.0
      %1639 = vmatprep.subr.mxu0 0.0
      %1640 = vmatpush1.msra.mxu0 0.0
      %1641 = vmatprep.subr.mxu0 0.0
      %1642 = vmatpush1.msra.mxu0 0.0
      %1643 = vmatprep.subr.mxu0 0.0
      %1644 = vmatpush1.msra.mxu0 0.0
      %1645 = vmatprep.subr.mxu0 0.0
      %1646 = vmatpush1.msra.mxu0 0.0
      %1647 = vmatprep.subr.mxu0 0.0
      %1648 = vmatpush1.msra.mxu0 0.0
      %1649 = vmatprep.subr.mxu0 0.0
      %1650 = vmatpush1.msra.mxu0 0.0
      %1651 = vmatprep.subr.mxu0 0.0
      %1652 = vmatpush1.msra.mxu0 0.0
      %1653 = vmatprep.subr.mxu0 0.0
      %1654 = vmatpush1.msra.mxu0 0.0
      %1655 = vmatprep.subr.mxu0 0.0
      %1656 = vmatpush1.msra.mxu0 0.0
      %1657 = vmatprep.subr.mxu0 0.0
      %1658 = vmatpush1.msra.mxu0 0.0
      %1659 = vmatprep.subr.mxu0 0.0
      %1660 = vmatpush1.msra.mxu0 0.0
      %1661 = vmatprep.subr.mxu0 0.0
      %1662 = vmatpush1.msra.mxu0 0.0
      %1663 = vmatprep.subr.mxu0 0.0
      %1664 = vmatpush1.msra.mxu0 0.0
      %1665 = vmatprep.subr.mxu0 0.0
      %1666 = vmatpush1.msra.mxu0 0.0
      %1667 = vmatprep.subr.mxu0 0.0
      %1668 = vmatpush1.msra.mxu0 0.0
      %1669 = vmatprep.subr.mxu0 0.0
      %1670 = vmatpush1.msra.mxu0 0.0
      %1671 = vmatprep.subr.mxu0 0.0
      %1672 = vmatpush1.msra.mxu0 0.0
      %1673 = vmatprep.subr.mxu0 0.0
      %1674 = vmatpush1.msra.mxu0 0.0
      %1675 = vmatprep.subr.mxu0 0.0
      %1676 = vmatpush1.msra.mxu0 0.0
      %1677 = vmatprep.subr.mxu0 0.0
      %1678 = vmatpush1.msra.mxu0 0.0
      %1679 = vmatprep.subr.mxu0 0.0
      %1680 = vmatpush1.msra.mxu0 0.0
      %1681 = vmatprep.subr.mxu0 0.0
      %1682 = vmatpush1.msra.mxu0 0.0
      %1683 = vmatprep.subr.mxu0 0.0
      %1684 = vmatpush1.msra.mxu0 0.0
      %1685 = vmatprep.subr.mxu0 0.0
      %1686 = vmatpush1.msra.mxu0 0.0
      %1687 = vmatprep.subr.mxu0 0.0
      %1688 = vmatpush1.msra.mxu0 0.0
      %1689 = vmatprep.subr.mxu0 0.0
      %1690 = vmatpush1.msra.mxu0 0.0
      %1691 = vmatprep.subr.mxu0 0.0
      %1692 = vmatpush1.msra.mxu0 0.0
      %1693 = vmatprep.subr.mxu0 0.0
      %1694 = vmatpush1.msra.mxu0 0.0
      %1695 = vmatprep.subr.mxu0 0.0
      %1696 = vmatpush1.msra.mxu0 0.0
      %1697 = vmatprep.mubr.f32.mxu0 0.0
      %1698 = vmatmul.mubr.f32.gmra.mrb[0].mxu0 %v1631
      %v1699 = vpop.f32.mrb[0].mxu0
      %v1700 = vadd.f32 0.0, %v1699
      %v1701 = vpop.f32.mrb[0].mxu0
      %1702 = vdwg.mxu0
      %1704 = vrot.lane.b32.xlu0 %v1700, 64
      %v1705 = vpop.permute.xlu0 %1704
      %v1707 = vsel %vm598, %v1290, %v1461
      %v1708 = vsel %vm1034, %v1707, %v1705
      %v1710 = vsel %vm1036, %v1708, 0
      %1712 = vmatprep.subr.mxu0 0.0
      %1713 = vmatpush1.msra.mxu0 %v581
      %1714 = vmatprep.subr.mxu0 0.0
      %1715 = vmatpush1.msra.mxu0 %v582
      %1716 = vmatprep.subr.mxu0 0.0
      %1717 = vmatpush1.msra.mxu0 %v583
      %1718 = vmatprep.subr.mxu0 0.0
      %1719 = vmatpush1.msra.mxu0 %v584
      %1720 = vmatprep.subr.mxu0 0.0
      %1721 = vmatpush1.msra.mxu0 %v585
      %1722 = vmatprep.subr.mxu0 0.0
      %1723 = vmatpush1.msra.mxu0 %v586
      %1724 = vmatprep.subr.mxu0 0.0
      %1725 = vmatpush1.msra.mxu0 %v587
      %1726 = vmatprep.subr.mxu0 0.0
      %1727 = vmatpush1.msra.mxu0 %v588
      %1728 = vmatprep.subr.mxu0 0.0
      %1729 = vmatpush1.msra.mxu0 %v589
      %1730 = vmatprep.subr.mxu0 0.0
      %1731 = vmatpush1.msra.mxu0 %v590
      %1732 = vmatprep.subr.mxu0 0.0
      %1733 = vmatpush1.msra.mxu0 %v591
      %1734 = vmatprep.subr.mxu0 0.0
      %1735 = vmatpush1.msra.mxu0 %v592
      %1736 = vmatprep.subr.mxu0 0.0
      %1737 = vmatpush1.msra.mxu0 0.0
      %1738 = vmatprep.subr.mxu0 0.0
      %1739 = vmatpush1.msra.mxu0 0.0
      %1740 = vmatprep.subr.mxu0 0.0
      %1741 = vmatpush1.msra.mxu0 0.0
      %1742 = vmatprep.subr.mxu0 0.0
      %1743 = vmatpush1.msra.mxu0 0.0
      %1744 = vmatprep.subr.mxu0 0.0
      %1745 = vmatpush1.msra.mxu0 0.0
      %1746 = vmatprep.subr.mxu0 0.0
      %1747 = vmatpush1.msra.mxu0 0.0
      %1748 = vmatprep.subr.mxu0 0.0
      %1749 = vmatpush1.msra.mxu0 0.0
      %1750 = vmatprep.subr.mxu0 0.0
      %1751 = vmatpush1.msra.mxu0 0.0
      %1752 = vmatprep.subr.mxu0 0.0
      %1753 = vmatpush1.msra.mxu0 0.0
      %1754 = vmatprep.subr.mxu0 0.0
      %1755 = vmatpush1.msra.mxu0 0.0
      %1756 = vmatprep.subr.mxu0 0.0
      %1757 = vmatpush1.msra.mxu0 0.0
      %1758 = vmatprep.subr.mxu0 0.0
      %1759 = vmatpush1.msra.mxu0 0.0
      %1760 = vmatprep.subr.mxu0 0.0
      %1761 = vmatpush1.msra.mxu0 0.0
      %1762 = vmatprep.subr.mxu0 0.0
      %1763 = vmatpush1.msra.mxu0 0.0
      %1764 = vmatprep.subr.mxu0 0.0
      %1765 = vmatpush1.msra.mxu0 0.0
      %1766 = vmatprep.subr.mxu0 0.0
      %1767 = vmatpush1.msra.mxu0 0.0
      %1768 = vmatprep.subr.mxu0 0.0
      %1769 = vmatpush1.msra.mxu0 0.0
      %1770 = vmatprep.subr.mxu0 0.0
      %1771 = vmatpush1.msra.mxu0 0.0
      %1772 = vmatprep.subr.mxu0 0.0
      %1773 = vmatpush1.msra.mxu0 0.0
      %1774 = vmatprep.subr.mxu0 0.0
      %1775 = vmatpush1.msra.mxu0 0.0
      %1776 = vmatprep.mubr.f32.mxu0 0.0
      %1777 = vmatmul.mubr.f32.gmra.mrb[0].mxu0 %v1710
      %v1778 = vpop.f32.mrb[0].mxu0
      %v1779 = vadd.f32 %v593, %v1778
      %v1780 = vpop.f32.mrb[0].mxu0
      %1781 = vdwg.mxu0
      %v1782 = vxor.u32 %v1779, 2147483648
      %v1783 = vmul.f32 %v1782, 1.442695
      %v1784 = vpow.pop %v1783
      %v1785 = vadd.f32 %v1784, 1.0
      %v1786 = vrcp.pop %v1785
      %v1787 = vmul.f32 1.0, %v1786
      %1788 = vmatprep.subr.mxu0 0.0
      %1789 = vmatpush1.msra.mxu0 %v549
      %1790 = vmatprep.subr.mxu0 0.0
      %1791 = vmatpush1.msra.mxu0 %v550
      %1792 = vmatprep.subr.mxu0 0.0
      %1793 = vmatpush1.msra.mxu0 0.0
      %1794 = vmatprep.subr.mxu0 0.0
      %1795 = vmatpush1.msra.mxu0 0.0
      %1796 = vmatprep.subr.mxu0 0.0
      %1797 = vmatpush1.msra.mxu0 0.0
      %1798 = vmatprep.subr.mxu0 0.0
      %1799 = vmatpush1.msra.mxu0 0.0
      %1800 = vmatprep.subr.mxu0 0.0
      %1801 = vmatpush1.msra.mxu0 0.0
      %1802 = vmatprep.subr.mxu0 0.0
      %1803 = vmatpush1.msra.mxu0 0.0
      %1804 = vmatprep.subr.mxu0 0.0
      %1805 = vmatpush1.msra.mxu0 0.0
      %1806 = vmatprep.subr.mxu0 0.0
      %1807 = vmatpush1.msra.mxu0 0.0
      %1808 = vmatprep.subr.mxu0 0.0
      %1809 = vmatpush1.msra.mxu0 0.0
      %1810 = vmatprep.subr.mxu0 0.0
      %1811 = vmatpush1.msra.mxu0 0.0
      %1812 = vmatprep.subr.mxu0 0.0
      %1813 = vmatpush1.msra.mxu0 0.0
      %1814 = vmatprep.subr.mxu0 0.0
      %1815 = vmatpush1.msra.mxu0 0.0
      %1816 = vmatprep.subr.mxu0 0.0
      %1817 = vmatpush1.msra.mxu0 0.0
      %1818 = vmatprep.subr.mxu0 0.0
      %1819 = vmatpush1.msra.mxu0 0.0
      %1820 = vmatprep.subr.mxu0 0.0
      %1821 = vmatpush1.msra.mxu0 0.0
      %1822 = vmatprep.subr.mxu0 0.0
      %1823 = vmatpush1.msra.mxu0 0.0
      %1824 = vmatprep.subr.mxu0 0.0
      %1825 = vmatpush1.msra.mxu0 0.0
      %1826 = vmatprep.subr.mxu0 0.0
      %1827 = vmatpush1.msra.mxu0 0.0
      %1828 = vmatprep.subr.mxu0 0.0
      %1829 = vmatpush1.msra.mxu0 0.0
      %1830 = vmatprep.subr.mxu0 0.0
      %1831 = vmatpush1.msra.mxu0 0.0
      %1832 = vmatprep.subr.mxu0 0.0
      %1833 = vmatpush1.msra.mxu0 0.0
      %1834 = vmatprep.subr.mxu0 0.0
      %1835 = vmatpush1.msra.mxu0 0.0
      %1836 = vmatprep.subr.mxu0 0.0
      %1837 = vmatpush1.msra.mxu0 0.0
      %1838 = vmatprep.subr.mxu0 0.0
      %1839 = vmatpush1.msra.mxu0 0.0
      %1840 = vmatprep.subr.mxu0 0.0
      %1841 = vmatpush1.msra.mxu0 0.0
      %1842 = vmatprep.subr.mxu0 0.0
      %1843 = vmatpush1.msra.mxu0 0.0
      %1844 = vmatprep.subr.mxu0 0.0
      %1845 = vmatpush1.msra.mxu0 0.0
      %1846 = vmatprep.subr.mxu0 0.0
      %1847 = vmatpush1.msra.mxu0 0.0
      %1848 = vmatprep.subr.mxu0 0.0
      %1849 = vmatpush1.msra.mxu0 0.0
      %1850 = vmatprep.subr.mxu0 0.0
      %1851 = vmatpush1.msra.mxu0 0.0
      %1852 = vmatprep.mubr.f32.mxu0 0.0
      %1853 = vmatmul.mubr.f32.gmra.mrb[0].mxu0 %v1631
      %v1854 = vpop.f32.mrb[0].mxu0
      %v1855 = vadd.f32 0.0, %v1854
      %v1856 = vpop.f32.mrb[0].mxu0
      %1857 = vdwg.mxu0
      %1859 = vset.pattern.permute.xlu0 0
      %1860 = vperm.xlu0 %1859, %v1787
      %v1861 = vpop.permute.xlu0 %1860
      %v1863 = vmul.f32 %v1861, %v1629
      %v1864 = vsub.f32 1.0, %v1787
      %1866 = vset.pattern.permute.xlu0 0
      %1867 = vperm.xlu0 %1866, %v1864
      %v1868 = vpop.permute.xlu0 %1867
      %v1870 = vmul.f32 %v1868, %v1855
      %v1871 = vadd.f32 %v1863, %v1870
      %v1872 = vsel %vm943, %v1871, -inf
      %1873 = vmax.xlane.f32.xlu0 %v1872
      %v1874 = vpop.xlane.xlu0 %1873
      %vm1875 = vcmp.eq.f32.partialorder %v1871, %v1874
      %v1876 = vsel %vm1875, %v597, 128
      %v1877 = vsel %vm943, %v1876, 2147483647
      %v1878 = vand.u32 %v1877, 65535
      %v1879 = vshra.s32 %v1877, 16
      %v1880 = vcvt.s32.f32 %v1878
      %v1881 = vcvt.s32.f32 %v1879
      %1882 = vmin.xlane.f32.xlu0 %v1881
      %v1883 = vpop.xlane.xlu0 %1882
      %vm1884 = vcmp.eq.f32.partialorder %v1881, %v1883
      %v1885 = vsel %vm1884, %v1880, inf
      %1886 = vmin.xlane.f32.xlu0 %v1885
      %v1887 = vpop.xlane.xlu0 %1886
      %v1888 = vcvt.f32.s32 %v1887
      %v1889 = vcvt.f32.s32 %v1883
      %v1890 = vshll.u32 %v1889, 16
      %v1891 = vadd.s32 %v1890, %v1888
      %vm1892 = vcmp.eq.s32.totalorder %v597, %v1891
      %v1893 = vsel %vm1892, 1, 0
      %v1894 = vcvt.s32.f32 %v1893
      %1895 = vmatprep.subr.mxu0 0.0
      %1896 = vmatpush1.msra.mxu0 %v551
      %1897 = vmatprep.subr.mxu0 0.0
      %1898 = vmatpush1.msra.mxu0 %v552
      %1899 = vmatprep.subr.mxu0 0.0
      %1900 = vmatpush1.msra.mxu0 %v553
      %1901 = vmatprep.subr.mxu0 0.0
      %1902 = vmatpush1.msra.mxu0 %v554
      %1903 = vmatprep.subr.mxu0 0.0
      %1904 = vmatpush1.msra.mxu0 %v555
      %1905 = vmatprep.subr.mxu0 0.0
      %1906 = vmatpush1.msra.mxu0 %v556
      %1907 = vmatprep.subr.mxu0 0.0
      %1908 = vmatpush1.msra.mxu0 %v557
      %1909 = vmatprep.subr.mxu0 0.0
      %1910 = vmatpush1.msra.mxu0 %v558
      %1911 = vmatprep.subr.mxu0 0.0
      %1912 = vmatpush1.msra.mxu0 %v559
      %1913 = vmatprep.subr.mxu0 0.0
      %1914 = vmatpush1.msra.mxu0 %v560
      %1915 = vmatprep.subr.mxu0 0.0
      %1916 = vmatpush1.msra.mxu0 %v561
      %1917 = vmatprep.subr.mxu0 0.0
      %1918 = vmatpush1.msra.mxu0 %v562
      %1919 = vmatprep.subr.mxu0 0.0
      %1920 = vmatpush1.msra.mxu0 %v563
      %1921 = vmatprep.subr.mxu0 0.0
      %1922 = vmatpush1.msra.mxu0 %v564
      %1923 = vmatprep.subr.mxu0 0.0
      %1924 = vmatpush1.msra.mxu0 %v565
      %1925 = vmatprep.subr.mxu0 0.0
      %1926 = vmatpush1.msra.mxu0 %v566
      %1927 = vmatprep.subr.mxu0 0.0
      %1928 = vmatpush1.msra.mxu0 0.0
      %1929 = vmatprep.subr.mxu0 0.0
      %1930 = vmatpush1.msra.mxu0 0.0
      %1931 = vmatprep.subr.mxu0 0.0
      %1932 = vmatpush1.msra.mxu0 0.0
      %1933 = vmatprep.subr.mxu0 0.0
      %1934 = vmatpush1.msra.mxu0 0.0
      %1935 = vmatprep.subr.mxu0 0.0
      %1936 = vmatpush1.msra.mxu0 0.0
      %1937 = vmatprep.subr.mxu0 0.0
      %1938 = vmatpush1.msra.mxu0 0.0
      %1939 = vmatprep.subr.mxu0 0.0
      %1940 = vmatpush1.msra.mxu0 0.0
      %1941 = vmatprep.subr.mxu0 0.0
      %1942 = vmatpush1.msra.mxu0 0.0
      %1943 = vmatprep.subr.mxu0 0.0
      %1944 = vmatpush1.msra.mxu0 0.0
      %1945 = vmatprep.subr.mxu0 0.0
      %1946 = vmatpush1.msra.mxu0 0.0
      %1947 = vmatprep.subr.mxu0 0.0
      %1948 = vmatpush1.msra.mxu0 0.0
      %1949 = vmatprep.subr.mxu0 0.0
      %1950 = vmatpush1.msra.mxu0 0.0
      %1951 = vmatprep.subr.mxu0 0.0
      %1952 = vmatpush1.msra.mxu0 0.0
      %1953 = vmatprep.subr.mxu0 0.0
      %1954 = vmatpush1.msra.mxu0 0.0
      %1955 = vmatprep.subr.mxu0 0.0
      %1956 = vmatpush1.msra.mxu0 0.0
      %1957 = vmatprep.subr.mxu0 0.0
      %1958 = vmatpush1.msra.mxu0 0.0
      %1959 = vmatprep.mubr.f32.mxu0 0.0
      %1960 = vmatmul.mubr.f32.gmra.mrb[0].mxu0 %v1894
      %v1961 = vpop.f32.mrb[0].mxu0
      %v1962 = vadd.f32 0.0, %v1961
      %v1963 = vpop.f32.mrb[0].mxu0
      %1964 = vdwg.mxu0
      %v1966 = vsel %vm598, %v1962, 0
      %1968 = vmatprep.subr.mxu0 0.0
      %1969 = vmatpush1.msra.mxu0 %v571
      %1970 = vmatprep.subr.mxu0 0.0
      %1971 = vmatpush1.msra.mxu0 %v572
      %1972 = vmatprep.subr.mxu0 0.0
      %1973 = vmatpush1.msra.mxu0 %v573
      %1974 = vmatprep.subr.mxu0 0.0
      %1975 = vmatpush1.msra.mxu0 %v574
      %1976 = vmatprep.subr.mxu0 0.0
      %1977 = vmatpush1.msra.mxu0 0.0
      %1978 = vmatprep.subr.mxu0 0.0
      %1979 = vmatpush1.msra.mxu0 0.0
      %1980 = vmatprep.subr.mxu0 0.0
      %1981 = vmatpush1.msra.mxu0 0.0
      %1982 = vmatprep.subr.mxu0 0.0
      %1983 = vmatpush1.msra.mxu0 0.0
      %1984 = vmatprep.subr.mxu0 0.0
      %1985 = vmatpush1.msra.mxu0 0.0
      %1986 = vmatprep.subr.mxu0 0.0
      %1987 = vmatpush1.msra.mxu0 0.0
      %1988 = vmatprep.subr.mxu0 0.0
      %1989 = vmatpush1.msra.mxu0 0.0
      %1990 = vmatprep.subr.mxu0 0.0
      %1991 = vmatpush1.msra.mxu0 0.0
      %1992 = vmatprep.subr.mxu0 0.0
      %1993 = vmatpush1.msra.mxu0 0.0
      %1994 = vmatprep.subr.mxu0 0.0
      %1995 = vmatpush1.msra.mxu0 0.0
      %1996 = vmatprep.subr.mxu0 0.0
      %1997 = vmatpush1.msra.mxu0 0.0
      %1998 = vmatprep.subr.mxu0 0.0
      %1999 = vmatpush1.msra.mxu0 0.0
      %2000 = vmatprep.subr.mxu0 0.0
      %2001 = vmatpush1.msra.mxu0 0.0
      %2002 = vmatprep.subr.mxu0 0.0
      %2003 = vmatpush1.msra.mxu0 0.0
      %2004 = vmatprep.subr.mxu0 0.0
      %2005 = vmatpush1.msra.mxu0 0.0
      %2006 = vmatprep.subr.mxu0 0.0
      %2007 = vmatpush1.msra.mxu0 0.0
      %2008 = vmatprep.subr.mxu0 0.0
      %2009 = vmatpush1.msra.mxu0 0.0
      %2010 = vmatprep.subr.mxu0 0.0
      %2011 = vmatpush1.msra.mxu0 0.0
      %2012 = vmatprep.subr.mxu0 0.0
      %2013 = vmatpush1.msra.mxu0 0.0
      %2014 = vmatprep.subr.mxu0 0.0
      %2015 = vmatpush1.msra.mxu0 0.0
      %2016 = vmatprep.subr.mxu0 0.0
      %2017 = vmatpush1.msra.mxu0 0.0
      %2018 = vmatprep.subr.mxu0 0.0
      %2019 = vmatpush1.msra.mxu0 0.0
      %2020 = vmatprep.subr.mxu0 0.0
      %2021 = vmatpush1.msra.mxu0 0.0
      %2022 = vmatprep.subr.mxu0 0.0
      %2023 = vmatpush1.msra.mxu0 0.0
      %2024 = vmatprep.subr.mxu0 0.0
      %2025 = vmatpush1.msra.mxu0 0.0
      %2026 = vmatprep.subr.mxu0 0.0
      %2027 = vmatpush1.msra.mxu0 0.0
      %2028 = vmatprep.subr.mxu0 0.0
      %2029 = vmatpush1.msra.mxu0 0.0
      %2030 = vmatprep.subr.mxu0 0.0
      %2031 = vmatpush1.msra.mxu0 0.0
      %2032 = vmatprep.mubr.f32.mxu0 0.0
      %2033 = vmatmul.mubr.f32.gmra.mrb[0].mxu0 %v1966
      %v2034 = vpop.f32.mrb[0].mxu0
      %v2035 = vadd.f32 %v579, %v2034
      %v2036 = vpop.f32.mrb[0].mxu0
      %2037 = vdwg.mxu0
      %2038 = vmatprep.subr.mxu0 0.0
      %2039 = vmatpush1.msra.mxu0 %v575
      %2040 = vmatprep.subr.mxu0 0.0
      %2041 = vmatpush1.msra.mxu0 %v576
      %2042 = vmatprep.subr.mxu0 0.0
      %2043 = vmatpush1.msra.mxu0 %v577
      %2044 = vmatprep.subr.mxu0 0.0
      %2045 = vmatpush1.msra.mxu0 %v578
      %2046 = vmatprep.subr.mxu0 0.0
      %2047 = vmatpush1.msra.mxu0 0.0
      %2048 = vmatprep.subr.mxu0 0.0
      %2049 = vmatpush1.msra.mxu0 0.0
      %2050 = vmatprep.subr.mxu0 0.0
      %2051 = vmatpush1.msra.mxu0 0.0
      %2052 = vmatprep.subr.mxu0 0.0
      %2053 = vmatpush1.msra.mxu0 0.0
      %2054 = vmatprep.subr.mxu0 0.0
      %2055 = vmatpush1.msra.mxu0 0.0
      %2056 = vmatprep.subr.mxu0 0.0
      %2057 = vmatpush1.msra.mxu0 0.0
      %2058 = vmatprep.subr.mxu0 0.0
      %2059 = vmatpush1.msra.mxu0 0.0
      %2060 = vmatprep.subr.mxu0 0.0
      %2061 = vmatpush1.msra.mxu0 0.0
      %2062 = vmatprep.subr.mxu0 0.0
      %2063 = vmatpush1.msra.mxu0 0.0
      %2064 = vmatprep.subr.mxu0 0.0
      %2065 = vmatpush1.msra.mxu0 0.0
      %2066 = vmatprep.subr.mxu0 0.0
      %2067 = vmatpush1.msra.mxu0 0.0
      %2068 = vmatprep.subr.mxu0 0.0
      %2069 = vmatpush1.msra.mxu0 0.0
      %2070 = vmatprep.subr.mxu0 0.0
      %2071 = vmatpush1.msra.mxu0 0.0
      %2072 = vmatprep.subr.mxu0 0.0
      %2073 = vmatpush1.msra.mxu0 0.0
      %2074 = vmatprep.subr.mxu0 0.0
      %2075 = vmatpush1.msra.mxu0 0.0
      %2076 = vmatprep.subr.mxu0 0.0
      %2077 = vmatpush1.msra.mxu0 0.0
      %2078 = vmatprep.subr.mxu0 0.0
      %2079 = vmatpush1.msra.mxu0 0.0
      %2080 = vmatprep.subr.mxu0 0.0
      %2081 = vmatpush1.msra.mxu0 0.0
      %2082 = vmatprep.subr.mxu0 0.0
      %2083 = vmatpush1.msra.mxu0 0.0
      %2084 = vmatprep.subr.mxu0 0.0
      %2085 = vmatpush1.msra.mxu0 0.0
      %2086 = vmatprep.subr.mxu0 0.0
      %2087 = vmatpush1.msra.mxu0 0.0
      %2088 = vmatprep.subr.mxu0 0.0
      %2089 = vmatpush1.msra.mxu0 0.0
      %2090 = vmatprep.subr.mxu0 0.0
      %2091 = vmatpush1.msra.mxu0 0.0
      %2092 = vmatprep.subr.mxu0 0.0
      %2093 = vmatpush1.msra.mxu0 0.0
      %2094 = vmatprep.subr.mxu0 0.0
      %2095 = vmatpush1.msra.mxu0 0.0
      %2096 = vmatprep.subr.mxu0 0.0
      %2097 = vmatpush1.msra.mxu0 0.0
      %2098 = vmatprep.subr.mxu0 0.0
      %2099 = vmatpush1.msra.mxu0 0.0
      %2100 = vmatprep.subr.mxu0 0.0
      %2101 = vmatpush1.msra.mxu0 0.0
      %2102 = vmatprep.mubr.f32.mxu0 0.0
      %2103 = vmatmul.mubr.f32.gmra.mrb[0].mxu0 %v1465
      %v2104 = vpop.f32.mrb[0].mxu0
      %v2105 = vadd.f32 %v580, %v2104
      %v2106 = vpop.f32.mrb[0].mxu0
      %2107 = vdwg.mxu0
      %v2108 = vadd.f32 %v2035, %v2105
      %v2109 = vxor.u32 %v2108, 2147483648
      %v2110 = vmul.f32 %v2109, 1.442695
      %v2111 = vpow.pop %v2110
      %v2112 = vadd.f32 %v2111, 1.0
      %v2113 = vrcp.pop %v2112
      %v2114 = vmul.f32 1.0, %v2113
      %2116 = vrot.lane.b32.xlu0 %v2105, 64
      %v2117 = vpop.permute.xlu0 %2116
      %v2119 = vmul.f32 %v2114, %v2117
      %2121 = vrot.lane.b32.xlu0 %v2119, 64
      %v2122 = vpop.permute.xlu0 %2121
      %v2124 = vadd.f32 %v2035, %v2122
      %v2125 = vtanh.pop %v2124
      %v2126 = vsub.f32 1.0, %v2114
      %2128 = vrot.lane.b32.xlu0 %v2125, 96
      %v2129 = vpop.permute.xlu0 %2128
      %v2131 = vmul.f32 %v2126, %v2129
      %v2132 = vmul.f32 %v2114, %v1461
      %v2133 = vadd.f32 %v2131, %v2132
      %2135 = vrot.lane.b32.xlu0 %v2133, 96
      %v2136 = vpop.permute.xlu0 %2135
      %v2137 = vsel %vm598, %v2136, 0
      %2139 = vmatprep.subr.mxu0 0.0
      %2140 = vmatpush1.xpose.msra.mxu0 %v784
      %2141 = vmatprep.subr.mxu0 0.0
      %2142 = vmatpush1.xpose.msra.mxu0 %v787
      %2143 = vmatprep.subr.mxu0 0.0
      %2144 = vmatpush1.xpose.msra.mxu0 0.0
      %2145 = vmatprep.subr.mxu0 0.0
      %2146 = vmatpush1.xpose.msra.mxu0 0.0
      %2147 = vmatprep.subr.mxu0 0.0
      %2148 = vmatpush1.xpose.msra.mxu0 0.0
      %2149 = vmatprep.subr.mxu0 0.0
      %2150 = vmatpush1.xpose.msra.mxu0 0.0
      %2151 = vmatprep.subr.mxu0 0.0
      %2152 = vmatpush1.xpose.msra.mxu0 0.0
      %2153 = vmatprep.subr.mxu0 0.0
      %2154 = vmatpush1.xpose.msra.mxu0 0.0
      %2155 = vmatprep.subr.mxu0 0.0
      %2156 = vmatpush1.xpose.msra.mxu0 0.0
      %2157 = vmatprep.subr.mxu0 0.0
      %2158 = vmatpush1.xpose.msra.mxu0 0.0
      %2159 = vmatprep.subr.mxu0 0.0
      %2160 = vmatpush1.xpose.msra.mxu0 0.0
      %2161 = vmatprep.subr.mxu0 0.0
      %2162 = vmatpush1.xpose.msra.mxu0 0.0
      %2163 = vmatprep.subr.mxu0 0.0
      %2164 = vmatpush1.xpose.msra.mxu0 0.0
      %2165 = vmatprep.subr.mxu0 0.0
      %2166 = vmatpush1.xpose.msra.mxu0 0.0
      %2167 = vmatprep.subr.mxu0 0.0
      %2168 = vmatpush1.xpose.msra.mxu0 0.0
      %2169 = vmatprep.subr.mxu0 0.0
      %2170 = vmatpush1.xpose.msra.mxu0 0.0
      %2171 = vmatprep.subr.mxu0 0.0
      %2172 = vmatpush1.xpose.msra.mxu0 0.0
      %2173 = vmatprep.subr.mxu0 0.0
      %2174 = vmatpush1.xpose.msra.mxu0 0.0
      %2175 = vmatprep.subr.mxu0 0.0
      %2176 = vmatpush1.xpose.msra.mxu0 0.0
      %2177 = vmatprep.subr.mxu0 0.0
      %2178 = vmatpush1.xpose.msra.mxu0 0.0
      %2179 = vmatprep.subr.mxu0 0.0
      %2180 = vmatpush1.xpose.msra.mxu0 0.0
      %2181 = vmatprep.subr.mxu0 0.0
      %2182 = vmatpush1.xpose.msra.mxu0 0.0
      %2183 = vmatprep.subr.mxu0 0.0
      %2184 = vmatpush1.xpose.msra.mxu0 0.0
      %2185 = vmatprep.subr.mxu0 0.0
      %2186 = vmatpush1.xpose.msra.mxu0 0.0
      %2187 = vmatprep.subr.mxu0 0.0
      %2188 = vmatpush1.xpose.msra.mxu0 0.0
      %2189 = vmatprep.subr.mxu0 0.0
      %2190 = vmatpush1.xpose.msra.mxu0 0.0
      %2191 = vmatprep.subr.mxu0 0.0
      %2192 = vmatpush1.xpose.msra.mxu0 0.0
      %2193 = vmatprep.subr.mxu0 0.0
      %2194 = vmatpush1.xpose.msra.mxu0 0.0
      %2195 = vmatprep.subr.mxu0 0.0
      %2196 = vmatpush1.xpose.msra.mxu0 0.0
      %2197 = vmatprep.subr.mxu0 0.0
      %2198 = vmatpush1.xpose.msra.mxu0 0.0
      %2199 = vmatprep.subr.mxu0 0.0
      %2200 = vmatpush1.xpose.msra.mxu0 0.0
      %2201 = vmatprep.subr.mxu0 0.0
      %2202 = vmatpush1.xpose.msra.mxu0 0.0
      %2203 = vmatprep.mubr.f32.mxu0 0.0
      %2204 = vmatmul.mubr.f32.gmra.mrb[0].mxu0 %v2137
      %v2205 = vpop.f32.mrb[0].mxu0
      %v2206 = vadd.f32 0.0, %v2205
      %v2207 = vpop.f32.mrb[0].mxu0
      %2208 = vdwg.mxu0
      %v2209 = vsel %vm859, -1e+09, %v2206
      %v2210 = vsel %vm861, %v2209, -inf
      %2211 = vmax.xlane.f32.xlu0 %v2210
      %v2212 = vpop.xlane.xlu0 %2211
      %v2213 = vsub.f32 %v2209, %v2212
      %v2214 = vmul.f32 %v2213, 1.442695
      %v2215 = vpow.pop %v2214
      %v2216 = vsel %vm861, %v2215, 0.0
      %2217 = vadd.xlane.f32.xlu0 %v2216
      %v2218 = vpop.xlane.xlu0 %2217
      %v2219 = vrcp.pop %v2218
      %v2220 = vmul.f32 %v2215, %v2219
      %2221 = vmatprep.subr.mxu0 0.0
      %2222 = vmatpush1.msra.mxu0 %v567
      %2223 = vmatprep.subr.mxu0 0.0
      %2224 = vmatpush1.msra.mxu0 %v568
      %2225 = vmatprep.subr.mxu0 0.0
      %2226 = vmatpush1.msra.mxu0 %v569
      %2227 = vmatprep.subr.mxu0 0.0
      %2228 = vmatpush1.msra.mxu0 %v570
      %2229 = vmatprep.subr.mxu0 0.0
      %2230 = vmatpush1.msra.mxu0 0.0
      %2231 = vmatprep.subr.mxu0 0.0
      %2232 = vmatpush1.msra.mxu0 0.0
      %2233 = vmatprep.subr.mxu0 0.0
      %2234 = vmatpush1.msra.mxu0 0.0
      %2235 = vmatprep.subr.mxu0 0.0
      %2236 = vmatpush1.msra.mxu0 0.0
      %2237 = vmatprep.subr.mxu0 0.0
      %2238 = vmatpush1.msra.mxu0 0.0
      %2239 = vmatprep.subr.mxu0 0.0
      %2240 = vmatpush1.msra.mxu0 0.0
      %2241 = vmatprep.subr.mxu0 0.0
      %2242 = vmatpush1.msra.mxu0 0.0
      %2243 = vmatprep.subr.mxu0 0.0
      %2244 = vmatpush1.msra.mxu0 0.0
      %2245 = vmatprep.subr.mxu0 0.0
      %2246 = vmatpush1.msra.mxu0 0.0
      %2247 = vmatprep.subr.mxu0 0.0
      %2248 = vmatpush1.msra.mxu0 0.0
      %2249 = vmatprep.subr.mxu0 0.0
      %2250 = vmatpush1.msra.mxu0 0.0
      %2251 = vmatprep.subr.mxu0 0.0
      %2252 = vmatpush1.msra.mxu0 0.0
      %2253 = vmatprep.subr.mxu0 0.0
      %2254 = vmatpush1.msra.mxu0 0.0
      %2255 = vmatprep.subr.mxu0 0.0
      %2256 = vmatpush1.msra.mxu0 0.0
      %2257 = vmatprep.subr.mxu0 0.0
      %2258 = vmatpush1.msra.mxu0 0.0
      %2259 = vmatprep.subr.mxu0 0.0
      %2260 = vmatpush1.msra.mxu0 0.0
      %2261 = vmatprep.subr.mxu0 0.0
      %2262 = vmatpush1.msra.mxu0 0.0
      %2263 = vmatprep.subr.mxu0 0.0
      %2264 = vmatpush1.msra.mxu0 0.0
      %2265 = vmatprep.subr.mxu0 0.0
      %2266 = vmatpush1.msra.mxu0 0.0
      %2267 = vmatprep.subr.mxu0 0.0
      %2268 = vmatpush1.msra.mxu0 0.0
      %2269 = vmatprep.subr.mxu0 0.0
      %2270 = vmatpush1.msra.mxu0 0.0
      %2271 = vmatprep.subr.mxu0 0.0
      %2272 = vmatpush1.msra.mxu0 0.0
      %2273 = vmatprep.subr.mxu0 0.0
      %2274 = vmatpush1.msra.mxu0 0.0
      %2275 = vmatprep.subr.mxu0 0.0
      %2276 = vmatpush1.msra.mxu0 0.0
      %2277 = vmatprep.subr.mxu0 0.0
      %2278 = vmatpush1.msra.mxu0 0.0
      %2279 = vmatprep.subr.mxu0 0.0
      %2280 = vmatpush1.msra.mxu0 0.0
      %2281 = vmatprep.subr.mxu0 0.0
      %2282 = vmatpush1.msra.mxu0 0.0
      %2283 = vmatprep.subr.mxu0 0.0
      %2284 = vmatpush1.msra.mxu0 0.0
      %2285 = vmatprep.mubr.f32.mxu0 0.0
      %2286 = vmatmul.mubr.f32.gmra.mrb[0].mxu0 %v2137
      %v2287 = vpop.f32.mrb[0].mxu0
      %v2288 = vadd.f32 0.0, %v2287
      %v2289 = vpop.f32.mrb[0].mxu0
      %2290 = vdwg.mxu0
      %v2291 = vsel %vm943, %v2288, -inf
      %2292 = vmax.xlane.f32.xlu0 %v2291
      %v2293 = vpop.xlane.xlu0 %2292
      %v2294 = vsub.f32 %v2288, %v2293
      %v2295 = vmul.f32 %v2294, 1.442695
      %v2296 = vpow.pop %v2295
      %v2297 = vsel %vm943, %v2296, 0.0
      %2298 = vadd.xlane.f32.xlu0 %v2297
      %v2299 = vpop.xlane.xlu0 %2298
      %v2300 = vrcp.pop %v2299
      %v2301 = vmul.f32 %v2296, %v2300
      %v2303 = vsel %vm955, %v2220, 0
      %2305 = vmatprep.subr.mxu0 0.0
      %2306 = vmatpush1.msra.mxu0 %v546
      %2307 = vmatprep.subr.mxu0 0.0
      %2308 = vmatpush1.msra.mxu0 %v547
      %2309 = vmatprep.subr.mxu0 0.0
      %2310 = vmatpush1.msra.mxu0 0.0
      %2311 = vmatprep.subr.mxu0 0.0
      %2312 = vmatpush1.msra.mxu0 0.0
      %2313 = vmatprep.subr.mxu0 0.0
      %2314 = vmatpush1.msra.mxu0 0.0
      %2315 = vmatprep.subr.mxu0 0.0
      %2316 = vmatpush1.msra.mxu0 0.0
      %2317 = vmatprep.subr.mxu0 0.0
      %2318 = vmatpush1.msra.mxu0 0.0
      %2319 = vmatprep.subr.mxu0 0.0
      %2320 = vmatpush1.msra.mxu0 0.0
      %2321 = vmatprep.subr.mxu0 0.0
      %2322 = vmatpush1.msra.mxu0 0.0
      %2323 = vmatprep.subr.mxu0 0.0
      %2324 = vmatpush1.msra.mxu0 0.0
      %2325 = vmatprep.subr.mxu0 0.0
      %2326 = vmatpush1.msra.mxu0 0.0
      %2327 = vmatprep.subr.mxu0 0.0
      %2328 = vmatpush1.msra.mxu0 0.0
      %2329 = vmatprep.subr.mxu0 0.0
      %2330 = vmatpush1.msra.mxu0 0.0
      %2331 = vmatprep.subr.mxu0 0.0
      %2332 = vmatpush1.msra.mxu0 0.0
      %2333 = vmatprep.subr.mxu0 0.0
      %2334 = vmatpush1.msra.mxu0 0.0
      %2335 = vmatprep.subr.mxu0 0.0
      %2336 = vmatpush1.msra.mxu0 0.0
      %2337 = vmatprep.subr.mxu0 0.0
      %2338 = vmatpush1.msra.mxu0 0.0
      %2339 = vmatprep.subr.mxu0 0.0
      %2340 = vmatpush1.msra.mxu0 0.0
      %2341 = vmatprep.subr.mxu0 0.0
      %2342 = vmatpush1.msra.mxu0 0.0
      %2343 = vmatprep.subr.mxu0 0.0
      %2344 = vmatpush1.msra.mxu0 0.0
      %2345 = vmatprep.subr.mxu0 0.0
      %2346 = vmatpush1.msra.mxu0 0.0
      %2347 = vmatprep.subr.mxu0 0.0
      %2348 = vmatpush1.msra.mxu0 0.0
      %2349 = vmatprep.subr.mxu0 0.0
      %2350 = vmatpush1.msra.mxu0 0.0
      %2351 = vmatprep.subr.mxu0 0.0
      %2352 = vmatpush1.msra.mxu0 0.0
      %2353 = vmatprep.subr.mxu0 0.0
      %2354 = vmatpush1.msra.mxu0 0.0
      %2355 = vmatprep.subr.mxu0 0.0
      %2356 = vmatpush1.msra.mxu0 0.0
      %2357 = vmatprep.subr.mxu0 0.0
      %2358 = vmatpush1.msra.mxu0 0.0
      %2359 = vmatprep.subr.mxu0 0.0
      %2360 = vmatpush1.msra.mxu0 0.0
      %2361 = vmatprep.subr.mxu0 0.0
      %2362 = vmatpush1.msra.mxu0 0.0
      %2363 = vmatprep.subr.mxu0 0.0
      %2364 = vmatpush1.msra.mxu0 0.0
      %2365 = vmatprep.subr.mxu0 0.0
      %2366 = vmatpush1.msra.mxu0 0.0
      %2367 = vmatprep.subr.mxu0 0.0
      %2368 = vmatpush1.msra.mxu0 0.0
      %2369 = vmatprep.mubr.f32.mxu0 0.0
      %2370 = vmatmul.mubr.f32.gmra.mrb[0].mxu0 %v2303
      %v2371 = vpop.f32.mrb[0].mxu0
      %v2372 = vadd.f32 0.0, %v2371
      %v2373 = vpop.f32.mrb[0].mxu0
      %2374 = vdwg.mxu0
      %2376 = vrot.lane.b32.xlu0 %v2372, 64
      %v2377 = vpop.permute.xlu0 %2376
      %v2379 = vsel %vm598, %v1962, %v2133
      %v2380 = vsel %vm1034, %v2379, %v2377
      %v2382 = vsel %vm1036, %v2380, 0
      %2384 = vmatprep.subr.mxu0 0.0
      %2385 = vmatpush1.msra.mxu0 %v581
      %2386 = vmatprep.subr.mxu0 0.0
      %2387 = vmatpush1.msra.mxu0 %v582
      %2388 = vmatprep.subr.mxu0 0.0
      %2389 = vmatpush1.msra.mxu0 %v583
      %2390 = vmatprep.subr.mxu0 0.0
      %2391 = vmatpush1.msra.mxu0 %v584
      %2392 = vmatprep.subr.mxu0 0.0
      %2393 = vmatpush1.msra.mxu0 %v585
      %2394 = vmatprep.subr.mxu0 0.0
      %2395 = vmatpush1.msra.mxu0 %v586
      %2396 = vmatprep.subr.mxu0 0.0
      %2397 = vmatpush1.msra.mxu0 %v587
      %2398 = vmatprep.subr.mxu0 0.0
      %2399 = vmatpush1.msra.mxu0 %v588
      %2400 = vmatprep.subr.mxu0 0.0
      %2401 = vmatpush1.msra.mxu0 %v589
      %2402 = vmatprep.subr.mxu0 0.0
      %2403 = vmatpush1.msra.mxu0 %v590
      %2404 = vmatprep.subr.mxu0 0.0
      %2405 = vmatpush1.msra.mxu0 %v591
      %2406 = vmatprep.subr.mxu0 0.0
      %2407 = vmatpush1.msra.mxu0 %v592
      %2408 = vmatprep.subr.mxu0 0.0
      %2409 = vmatpush1.msra.mxu0 0.0
      %2410 = vmatprep.subr.mxu0 0.0
      %2411 = vmatpush1.msra.mxu0 0.0
      %2412 = vmatprep.subr.mxu0 0.0
      %2413 = vmatpush1.msra.mxu0 0.0
      %2414 = vmatprep.subr.mxu0 0.0
      %2415 = vmatpush1.msra.mxu0 0.0
      %2416 = vmatprep.subr.mxu0 0.0
      %2417 = vmatpush1.msra.mxu0 0.0
      %2418 = vmatprep.subr.mxu0 0.0
      %2419 = vmatpush1.msra.mxu0 0.0
      %2420 = vmatprep.subr.mxu0 0.0
      %2421 = vmatpush1.msra.mxu0 0.0
      %2422 = vmatprep.subr.mxu0 0.0
      %2423 = vmatpush1.msra.mxu0 0.0
      %2424 = vmatprep.subr.mxu0 0.0
      %2425 = vmatpush1.msra.mxu0 0.0
      %2426 = vmatprep.subr.mxu0 0.0
      %2427 = vmatpush1.msra.mxu0 0.0
      %2428 = vmatprep.subr.mxu0 0.0
      %2429 = vmatpush1.msra.mxu0 0.0
      %2430 = vmatprep.subr.mxu0 0.0
      %2431 = vmatpush1.msra.mxu0 0.0
      %2432 = vmatprep.subr.mxu0 0.0
      %2433 = vmatpush1.msra.mxu0 0.0
      %2434 = vmatprep.subr.mxu0 0.0
      %2435 = vmatpush1.msra.mxu0 0.0
      %2436 = vmatprep.subr.mxu0 0.0
      %2437 = vmatpush1.msra.mxu0 0.0
      %2438 = vmatprep.subr.mxu0 0.0
      %2439 = vmatpush1.msra.mxu0 0.0
      %2440 = vmatprep.subr.mxu0 0.0
      %2441 = vmatpush1.msra.mxu0 0.0
      %2442 = vmatprep.subr.mxu0 0.0
      %2443 = vmatpush1.msra.mxu0 0.0
      %2444 = vmatprep.subr.mxu0 0.0
      %2445 = vmatpush1.msra.mxu0 0.0
      %2446 = vmatprep.subr.mxu0 0.0
      %2447 = vmatpush1.msra.mxu0 0.0
      %2448 = vmatprep.mubr.f32.mxu0 0.0
      %2449 = vmatmul.mubr.f32.gmra.mrb[0].mxu0 %v2382
      %v2450 = vpop.f32.mrb[0].mxu0
      %v2451 = vadd.f32 %v593, %v2450
      %v2452 = vpop.f32.mrb[0].mxu0
      %2453 = vdwg.mxu0
      %v2454 = vxor.u32 %v2451, 2147483648
      %v2455 = vmul.f32 %v2454, 1.442695
      %v2456 = vpow.pop %v2455
      %v2457 = vadd.f32 %v2456, 1.0
      %v2458 = vrcp.pop %v2457
      %v2459 = vmul.f32 1.0, %v2458
      %2460 = vmatprep.subr.mxu0 0.0
      %2461 = vmatpush1.msra.mxu0 %v549
      %2462 = vmatprep.subr.mxu0 0.0
      %2463 = vmatpush1.msra.mxu0 %v550
      %2464 = vmatprep.subr.mxu0 0.0
      %2465 = vmatpush1.msra.mxu0 0.0
      %2466 = vmatprep.subr.mxu0 0.0
      %2467 = vmatpush1.msra.mxu0 0.0
      %2468 = vmatprep.subr.mxu0 0.0
      %2469 = vmatpush1.msra.mxu0 0.0
      %2470 = vmatprep.subr.mxu0 0.0
      %2471 = vmatpush1.msra.mxu0 0.0
      %2472 = vmatprep.subr.mxu0 0.0
      %2473 = vmatpush1.msra.mxu0 0.0
      %2474 = vmatprep.subr.mxu0 0.0
      %2475 = vmatpush1.msra.mxu0 0.0
      %2476 = vmatprep.subr.mxu0 0.0
      %2477 = vmatpush1.msra.mxu0 0.0
      %2478 = vmatprep.subr.mxu0 0.0
      %2479 = vmatpush1.msra.mxu0 0.0
      %2480 = vmatprep.subr.mxu0 0.0
      %2481 = vmatpush1.msra.mxu0 0.0
      %2482 = vmatprep.subr.mxu0 0.0
      %2483 = vmatpush1.msra.mxu0 0.0
      %2484 = vmatprep.subr.mxu0 0.0
      %2485 = vmatpush1.msra.mxu0 0.0
      %2486 = vmatprep.subr.mxu0 0.0
      %2487 = vmatpush1.msra.mxu0 0.0
      %2488 = vmatprep.subr.mxu0 0.0
      %2489 = vmatpush1.msra.mxu0 0.0
      %2490 = vmatprep.subr.mxu0 0.0
      %2491 = vmatpush1.msra.mxu0 0.0
      %2492 = vmatprep.subr.mxu0 0.0
      %2493 = vmatpush1.msra.mxu0 0.0
      %2494 = vmatprep.subr.mxu0 0.0
      %2495 = vmatpush1.msra.mxu0 0.0
      %2496 = vmatprep.subr.mxu0 0.0
      %2497 = vmatpush1.msra.mxu0 0.0
      %2498 = vmatprep.subr.mxu0 0.0
      %2499 = vmatpush1.msra.mxu0 0.0
      %2500 = vmatprep.subr.mxu0 0.0
      %2501 = vmatpush1.msra.mxu0 0.0
      %2502 = vmatprep.subr.mxu0 0.0
      %2503 = vmatpush1.msra.mxu0 0.0
      %2504 = vmatprep.subr.mxu0 0.0
      %2505 = vmatpush1.msra.mxu0 0.0
      %2506 = vmatprep.subr.mxu0 0.0
      %2507 = vmatpush1.msra.mxu0 0.0
      %2508 = vmatprep.subr.mxu0 0.0
      %2509 = vmatpush1.msra.mxu0 0.0
      %2510 = vmatprep.subr.mxu0 0.0
      %2511 = vmatpush1.msra.mxu0 0.0
      %2512 = vmatprep.subr.mxu0 0.0
      %2513 = vmatpush1.msra.mxu0 0.0
      %2514 = vmatprep.subr.mxu0 0.0
      %2515 = vmatpush1.msra.mxu0 0.0
      %2516 = vmatprep.subr.mxu0 0.0
      %2517 = vmatpush1.msra.mxu0 0.0
      %2518 = vmatprep.subr.mxu0 0.0
      %2519 = vmatpush1.msra.mxu0 0.0
      %2520 = vmatprep.subr.mxu0 0.0
      %2521 = vmatpush1.msra.mxu0 0.0
      %2522 = vmatprep.subr.mxu0 0.0
      %2523 = vmatpush1.msra.mxu0 0.0
      %2524 = vmatprep.mubr.f32.mxu0 0.0
      %2525 = vmatmul.mubr.f32.gmra.mrb[0].mxu0 %v2303
      %v2526 = vpop.f32.mrb[0].mxu0
      %v2527 = vadd.f32 0.0, %v2526
      %v2528 = vpop.f32.mrb[0].mxu0
      %2529 = vdwg.mxu0
      %2531 = vset.pattern.permute.xlu0 0
      %2532 = vperm.xlu0 %2531, %v2459
      %v2533 = vpop.permute.xlu0 %2532
      %v2535 = vmul.f32 %v2533, %v2301
      %v2536 = vsub.f32 1.0, %v2459
      %2538 = vset.pattern.permute.xlu0 0
      %2539 = vperm.xlu0 %2538, %v2536
      %v2540 = vpop.permute.xlu0 %2539
      %v2542 = vmul.f32 %v2540, %v2527
      %v2543 = vadd.f32 %v2535, %v2542
      %vm2545 = vcmask 253952
      %2546 = vst.msk [vmem:[#allocation2] sm:$0x1] %vm2545, %v2136
      %v2548 = vrot.slane %v1871, 7
      %v2551 = vrot.slane %v2543, 6
      %v2553 = vsel %vm943, %v1199, %v2548
      %vm2554 = vcmask 1041408
      %v2555 = vsel %vm2554, %v2553, %v2551
      %2556 = vst [vmem:[%s538] sm:$0x7] %v2555
      %p2557 = scmp.lt.s32.totalorder %s30, 1
      %s2558 = scalar_select %p2557, %s30, 1
      %p2559 = scmp.lt.s32.totalorder %s31, 1
      %s2560 = scalar_select %p2559, %s31, 1
      %s2561 = smul.addr %s2558, 2
      %s2562 = sadd.s32 %s2560, %s2561
      %s2563 = smul.addr %s2562, 4
      %s2564 = scalar_lea.vmem %s13, %s2563
      // Predicated region
      $region77: #{som_dst_forward.3} parent=71 // pred_check
        %p2565 = pneg %p358
      $region78: #{som_dst_forward.3} parent=71 // pred_check_branch
        %2567 = sbr.rel (%p2565) target = $region80
      $region79: #{som_dst_forward.3} parent=71 // pred_region
        _
      $region80: #{som_dst_forward.3} parent=71 // pred_fallthru
        _
    $region72: #{som_dst_forward.3} parent=5 // pred_fallthru
      _
    %p2568 = scmp.le.s32.totalorder 2, %s21
    // Predicated region
    $region81: #{som_dst_forward.3} parent=5 // pred_check
      %p2569 = pneg %p2568
    $region82: #{som_dst_forward.3} parent=5 // pred_check_branch
      %2571 = sbr.rel (%p2569) target = $region84
    $region83: #{som_dst_forward.3} parent=5 // pred_region
      %s2572 = ssub.s32 %s21, 2
      // Predicated region
      $region85: #{som_dst_forward.3} parent=83 // pred_check
        %p2573 = pneg %p364
      $region86: #{som_dst_forward.3} parent=83 // pred_check_branch
        %2575 = sbr.rel (%p2573) target = $region88
      $region87: #{som_dst_forward.3} parent=83 // pred_region
        %p2576 = scmp.lt.s32.totalorder %s32, 1
        %s2577 = scalar_select %p2576, %s32, 1
        %p2578 = scmp.lt.s32.totalorder %s33, 1
        %s2579 = scalar_select %p2578, %s33, 1
        %s2580 = smul.addr %s2577, 2
        %s2581 = sadd.s32 %s2579, %s2580
        %s2582 = smul.addr %s2581, 4
        %s2583 = scalar_lea.vmem %s13, %s2582
      $region88: #{som_dst_forward.3} parent=83 // pred_fallthru
        _
    $region84: #{som_dst_forward.3} parent=5 // pred_fallthru
      _
  $region6: #{som_dst_forward.3} parent=0 // loop_footer
    %s25 = sadd.s32 1, %s21
  $region7: #{som_dst_forward.3} parent=0 // loop_footer_branch
    %20 = sbr.rel target = $region3
  $region8: #{som_dst_forward.3} parent=0 // loop_exit
    _

</llo_original>
